<compile_context>
chip_gen: v6e
topology: v6e:2x2x1
jax: 0.10.0
libtpu: 0.0.40
codegen_flags: <defaults>
</compile_context>

<pallas_src>
import numpy as np
import jax
import jax.numpy as jnp
from jax.experimental import pallas as pl
from jax.experimental.pallas import tpu as pltpu

# ----------------------------- model sizes ---------------------------------
TEXT_DIM = 32            # text embedding size fed to the MLP
TEXT_PAD = 128           # zero-padded text width (lane multiple)
MLP_HIDDEN = 64          # MLP hidden width (logical)
MLP_HIDDEN_PAD = 128     # zero-padded hidden width (lane multiple)
Z_DIM = 100              # mlp_output.view(-1, 100, 1, 1) / noise channels
Z_PAD = 128              # zero-padded z width (lane multiple)
IN_FEAT = TEXT_PAD + Z_PAD   # 256: concatenated [text | noise] activation input
C1, H1 = 32, 4           # decoder stage 1: ConvTranspose2d(100, 32, 4, 1, 0) -> (B,32,4,4)
C2, H2 = 16, 8           # decoder stage 2: ConvTranspose2d(32, 16, 4, 2, 1)  -> (B,16,8,8)
C3, H3 = 3, 16           # decoder stage 3: ConvTranspose2d(16,  3, 4, 2, 1)  -> (B,3,16,16)
OUT_FEAT = C3 * H3 * H3  # 768 (multiple of 128)
BN_EPS = 1e-5
MAX_TILE_B = 128         # cap so grid >= 2 at B >= 256 (v7x 2-TC sharding); M=128 fills MXU fine


def _round_up(x, m):
    return ((x + m - 1) // m) * m


# -------------------- ConvTranspose2d -> dense operator --------------------
def _deconv_as_dense(w, cin, cout, hin, hout, stride, pad, k=4):
    """Exact dense linear operator of a PyTorch ConvTranspose2d (weight layout
    (cin, cout, kh, kw)) acting on NCHW-flattened (C*H*W) vectors."""
    w = np.asarray(w, np.float32)
    op = np.zeros((cin * hin * hin, cout * hout * hout), np.float32)
    for iy in range(hin):
        for ix in range(hin):
            for ky in range(k):
                for kx in range(k):
                    oy = iy * stride - pad + ky
                    ox = ix * stride - pad + kx
                    if 0 <= oy < hout and 0 <= ox < hout:
                        r = iy * hin + ix
                        c = oy * hout + ox
                        op[r::hin * hin, c::hout * hout] += w[:, :, ky, kx]
    return op


# ------------------------------ Pallas kernel -------------------------------
def t2i_kernel(x_ref, w1_ref, b1_ref, w2_ref,
               op1_ref, t1_ref, op2_ref, t2_ref, op3_ref, b3_ref,
               out_ref):
    f32 = jnp.float32
    bf16 = jnp.bfloat16
    x = x_ref[...]                                   # (tb, 256) f32: [text_pad | noise_pad]
    # --- self.mlp(text_emb): Linear -> ReLU -> Linear (b2 folded into t1) ---
    h = jnp.dot(x.astype(bf16), w1_ref[...], preferred_element_type=f32) + b1_ref[...]
    h = jnp.maximum(h, 0.0)
    z = jnp.dot(h.astype(bf16), w2_ref[...], preferred_element_type=f32)
    # --- view(-1,100,1,1); sum(stack([mlp_out, noise], 0), 0) == elementwise add ---
    d = z + x[:, TEXT_PAD:]
    # --- stage 1: ConvT(100,32,4,1,0) + BN(eval) + ReLU (BN scale folded into op1) ---
    a1 = jnp.maximum(
        jnp.dot(d.astype(bf16), op1_ref[...], preferred_element_type=f32) + t1_ref[...], 0.0)
    # --- stage 2: ConvT(32,16,4,2,1) + BN(eval) + ReLU (BN scale folded into op2) ---
    a2 = jnp.maximum(
        jnp.dot(a1.astype(bf16), op2_ref[...], preferred_element_type=f32) + t2_ref[...], 0.0)
    # --- stage 3: ConvT(16,3,4,2,1) + Tanh ---
    a3 = jnp.dot(a2.astype(bf16), op3_ref[...], preferred_element_type=f32) + b3_ref[...]
    out_ref[...] = jnp.tanh(a3).astype(out_ref.dtype)     # bf16 writeback (lane-dense, 768)


# ------------------------------ wrapper -------------------------------------
def _act_spec(tile_b, feat):
    # Activation tile: advances along the batch grid axis.
    return pl.BlockSpec((tile_b, feat), lambda i: (i, 0))


def _resident_spec(shape):
    # Weights / shifts: same block every grid step -> stays resident in VMEM.
    return pl.BlockSpec(shape, lambda i: (0, 0))


def text_to_image_forward(text_emb, noise, params):
    """text_emb: (B, TEXT_DIM); noise: (B, 100, 1, 1) NCHW. Returns (B, 3, 16, 16) f32."""
    B = text_emb.shape[0]
    # Tiling: tile_b <= 128, multiple of 16, derived from cdiv so batch padding
    # is bounded by one tile and B >= 256 gives >= 2 grid steps (v7x megacore).
    n_tiles = pl.cdiv(max(B, 1), MAX_TILE_B)
    tile_b = _round_up(pl.cdiv(max(B, 1), n_tiles), 16)
    B_pad = tile_b * n_tiles

    text = jnp.pad(text_emb.astype(jnp.float32),
                   ((0, B_pad - B), (0, TEXT_PAD - TEXT_DIM)))
    noise_flat = jnp.pad(noise.reshape(B, Z_DIM).astype(jnp.float32),
                         ((0, B_pad - B), (0, Z_PAD - Z_DIM)))
    x = jnp.concatenate([text, noise_flat], axis=1)        # (B_pad, 256), one DMA stream

    in_specs = [_act_spec(tile_b, IN_FEAT)] + [_resident_spec(p.shape) for p in params]

    # TODO(synk): for repeated small-B sampling loops, keep weights VMEM-resident
    # across calls (cross-call prefetch / persistent outer pallas_call) instead of
    # re-DMAing ~2.7 MiB per call.
    out_flat = pl.pallas_call(
        t2i_kernel,
        out_shape=jax.ShapeDtypeStruct((B_pad, OUT_FEAT), jnp.bfloat16),
        grid=(n_tiles,),
        in_specs=in_specs,
        out_specs=_act_spec(tile_b, OUT_FEAT),
        compiler_params=pltpu.CompilerParams(
            dimension_semantics=("parallel",),
            vmem_limit_bytes=32 * 1024 * 1024),
    )(x, *params)
    return out_flat[:B].astype(jnp.float32).reshape(B, C3, H3, H3)


# --------------------------- parameter setup --------------------------------
def init_params(key):
    ks = jax.random.split(key, 10)

    def u(k, shape, fan_in):
        s = 1.0 / np.sqrt(fan_in)
        return np.asarray(jax.random.uniform(k, shape, jnp.float32, -s, s))

    # MLP: Linear(TEXT_DIM, MLP_HIDDEN) -> ReLU -> Linear(MLP_HIDDEN, Z_DIM)
    w1 = u(ks[0], (TEXT_DIM, MLP_HIDDEN), TEXT_DIM)
    b1 = u(ks[1], (1, MLP_HIDDEN), TEXT_DIM)
    w2 = u(ks[2], (MLP_HIDDEN, Z_DIM), MLP_HIDDEN)
    b2 = u(ks[3], (1, Z_DIM), MLP_HIDDEN)

    # Zero-pad to lane multiples.  w1 rows span the concatenated [text|noise]
    # 256-lane input (noise rows zero, so the first matmul takes the whole tile).
    w1p = np.zeros((IN_FEAT, MLP_HIDDEN_PAD), np.float32); w1p[:TEXT_DIM, :MLP_HIDDEN] = w1
    b1p = np.zeros((1, MLP_HIDDEN_PAD), np.float32);       b1p[:, :MLP_HIDDEN] = b1
    w2p = np.zeros((MLP_HIDDEN_PAD, Z_PAD), np.float32);   w2p[:MLP_HIDDEN, :Z_DIM] = w2
    b2p = np.zeros((1, Z_PAD), np.float32);                b2p[:, :Z_DIM] = b2

    # Decoder ConvTranspose2d weights, PyTorch layout (cin, cout, kh, kw)
    wd1 = u(ks[4], (Z_DIM, C1, 4, 4), Z_DIM * 16)
    bd1 = u(ks[5], (C1,), Z_DIM * 16)
    wd2 = u(ks[6], (C1, C2, 4, 4), C1 * 16)
    bd2 = u(ks[7], (C2,), C1 * 16)
    wd3 = u(ks[8], (C2, C3, 4, 4), C2 * 16)
    bd3 = u(ks[9], (C3,), C2 * 16)

    # BatchNorm2d (eval mode) affine params + running stats, deterministic
    def bn(c):
        i = np.arange(c, dtype=np.float32)
        return 1.0 + 0.1 * np.sin(i), 0.05 * np.cos(i), 0.02 * i, 1.0 + 0.01 * i

    g1, be1, rm1, rv1 = bn(C1)
    g2, be2, rm2, rv2 = bn(C2)

    # Dense operators for the three transposed convolutions
    op1 = _deconv_as_dense(wd1, Z_DIM, C1, 1, H1, stride=1, pad=0)   # (100, 512)
    op2 = _deconv_as_dense(wd2, C1, C2, H1, H2, stride=2, pad=1)     # (512, 1024)
    op3 = _deconv_as_dense(wd3, C2, C3, H2, H3, stride=2, pad=1)     # (1024, 768)
    op1p = np.zeros((Z_PAD, C1 * H1 * H1), np.float32); op1p[:Z_DIM] = op1

    # Fold conv bias + eval-mode BatchNorm into per-flat-feature scale/shift,
    # then fold the scale into the operator columns and the MLP second bias
    # through op1 into t1.  All folds done in f32 BEFORE the bf16 cast.
    def fold(gamma, beta, rmean, rvar, conv_bias, hw):
        scale = gamma / np.sqrt(rvar + BN_EPS)
        shift = scale * (np.asarray(conv_bias) - rmean) + beta
        return (np.repeat(scale, hw)[None, :].astype(np.float32),
                np.repeat(shift, hw)[None, :].astype(np.float32))

    s1, t1 = fold(g1, be1, rm1, rv1, bd1, H1 * H1)
    s2, t2 = fold(g2, be2, rm2, rv2, bd2, H2 * H2)
    op1s = op1p * s1                     # (128, 512): BN scale folded into columns
    op2s = op2 * s2                      # (512, 1024)
    t1 = t1 + b2p @ op1s                 # MLP bias b2 folded through stage-1 operator
    b3 = np.repeat(np.asarray(bd3), H3 * H3)[None, :].astype(np.float32)

    bf = lambda a: jnp.asarray(a, jnp.bfloat16)   # matmul weights -> bf16
    f3 = lambda a: jnp.asarray(a, jnp.float32)    # bias / shift -> f32
    return (bf(w1p), f3(b1p), bf(w2p),
            bf(op1s), f3(t1),
            bf(op2s), f3(t2),
            bf(op3),  f3(b3))


# TODO(synk): encode()/train()/eval() (frozen HF text encoder, optimizer loop,
# SSIM metric) are host-side utilities, not part of the forward hot path.

if __name__ == "__main__":
    key = jax.random.PRNGKey(0)
    kp, kt, kn = jax.random.split(key, 3)
    params = init_params(kp)

    B = 2
    text_emb = jax.random.normal(kt, (B, TEXT_DIM), jnp.float32)
    noise = jax.random.normal(kn, (B, Z_DIM, 1, 1), jnp.float32)   # NCHW, like PyTorch

    img = text_to_image_forward(text_emb, noise, params)
    img = jax.block_until_ready(img)

    assert img.shape == (B, C3, H3, H3), img.shape
    assert bool(jnp.all(jnp.isfinite(img)))
    assert bool(jnp.all(jnp.abs(img) <= 1.0))   # tanh output range
    print("KERNEL_OK")
</pallas_src>

<mosaic_0001>
module attributes {stable_mosaic.version = 11 : i64} {
  func.func @t2i_kernel(%arg0: i32, %arg1: memref<16x256xf32, #tpu.memory_space<vmem>>, %arg2: memref<256x128xbf16, #tpu.memory_space<vmem>>, %arg3: memref<1x128xf32, #tpu.memory_space<vmem>>, %arg4: memref<128x128xbf16, #tpu.memory_space<vmem>>, %arg5: memref<128x512xbf16, #tpu.memory_space<vmem>>, %arg6: memref<1x512xf32, #tpu.memory_space<vmem>>, %arg7: memref<512x1024xbf16, #tpu.memory_space<vmem>>, %arg8: memref<1x1024xf32, #tpu.memory_space<vmem>>, %arg9: memref<1024x768xbf16, #tpu.memory_space<vmem>>, %arg10: memref<1x768xf32, #tpu.memory_space<vmem>>, %arg11: memref<16x768xbf16, #tpu.memory_space<vmem>>) attributes {dimension_semantics = [#tpu.dimension_semantics<parallel>], iteration_bounds = array<i64: 1>, scalar_prefetch = 0 : i64, scratch_operands = 0 : i64, tpu.core_type = #tpu.core_type<tc>, window_params = [{transform_indices = @transform_0, window_bounds = array<i64: 16, 256>}, {pipeline_mode = #tpu.pipeline_mode<synchronous>, transform_indices = @transform_1, window_bounds = array<i64: 256, 128>}, {pipeline_mode = #tpu.pipeline_mode<synchronous>, transform_indices = @transform_2, window_bounds = array<i64: 1, 128>}, {pipeline_mode = #tpu.pipeline_mode<synchronous>, transform_indices = @transform_3, window_bounds = array<i64: 128, 128>}, {pipeline_mode = #tpu.pipeline_mode<synchronous>, transform_indices = @transform_4, window_bounds = array<i64: 128, 512>}, {pipeline_mode = #tpu.pipeline_mode<synchronous>, transform_indices = @transform_5, window_bounds = array<i64: 1, 512>}, {pipeline_mode = #tpu.pipeline_mode<synchronous>, transform_indices = @transform_6, window_bounds = array<i64: 512, 1024>}, {pipeline_mode = #tpu.pipeline_mode<synchronous>, transform_indices = @transform_7, window_bounds = array<i64: 1, 1024>}, {pipeline_mode = #tpu.pipeline_mode<synchronous>, transform_indices = @transform_8, window_bounds = array<i64: 1024, 768>}, {pipeline_mode = #tpu.pipeline_mode<synchronous>, transform_indices = @transform_9, window_bounds = array<i64: 1, 768>}, {transform_indices = @transform_10, window_bounds = array<i64: 16, 768>}]} {
    %c0 = arith.constant 0 : index
    %c0_0 = arith.constant 0 : index
    %0 = vector.load %arg1[%c0, %c0_0] : memref<16x256xf32, #tpu.memory_space<vmem>>, vector<16x256xf32>
    %1 = arith.truncf %0 : vector<16x256xf32> to vector<16x256xbf16>
    %c0_1 = arith.constant 0 : index
    %c0_2 = arith.constant 0 : index
    %2 = vector.load %arg2[%c0_1, %c0_2] : memref<256x128xbf16, #tpu.memory_space<vmem>>, vector<256x128xbf16>
    %cst = arith.constant dense<0.000000e+00> : vector<16x128xf32>
    %3 = tpu.matmul %1, %2, %cst {dimension_numbers = #tpu.dot_dimension_numbers<[1], [0], [0], [1], [0, 0, 1, 1], [], []>} : vector<16x256xbf16>, vector<256x128xbf16>, vector<16x128xf32> -> vector<16x128xf32>
    %c0_3 = arith.constant 0 : index
    %c0_4 = arith.constant 0 : index
    %4 = vector.load %arg3[%c0_3, %c0_4] : memref<1x128xf32, #tpu.memory_space<vmem>>, vector<1x128xf32>
    %5 = vector.broadcast %4 : vector<1x128xf32> to vector<16x128xf32>
    %6 = arith.addf %3, %5 : vector<16x128xf32>
    %cst_5 = arith.constant 0.000000e+00 : f32
    %7 = vector.broadcast %cst_5 : f32 to vector<16x128xf32>
    %8 = arith.maximumf %6, %7 : vector<16x128xf32>
    %9 = arith.truncf %8 : vector<16x128xf32> to vector<16x128xbf16>
    %c0_6 = arith.constant 0 : index
    %c0_7 = arith.constant 0 : index
    %10 = vector.load %arg4[%c0_6, %c0_7] : memref<128x128xbf16, #tpu.memory_space<vmem>>, vector<128x128xbf16>
    %cst_8 = arith.constant dense<0.000000e+00> : vector<16x128xf32>
    %11 = tpu.matmul %9, %10, %cst_8 {dimension_numbers = #tpu.dot_dimension_numbers<[1], [0], [0], [1], [0, 0, 1, 1], [], []>} : vector<16x128xbf16>, vector<128x128xbf16>, vector<16x128xf32> -> vector<16x128xf32>
    %12 = vector.extract_strided_slice %0 {offsets = [0, 128], sizes = [16, 128], strides = [1, 1]} : vector<16x256xf32> to vector<16x128xf32>
    %13 = arith.addf %11, %12 : vector<16x128xf32>
    %14 = arith.truncf %13 : vector<16x128xf32> to vector<16x128xbf16>
    %c0_9 = arith.constant 0 : index
    %c0_10 = arith.constant 0 : index
    %15 = vector.load %arg5[%c0_9, %c0_10] : memref<128x512xbf16, #tpu.memory_space<vmem>>, vector<128x512xbf16>
    %cst_11 = arith.constant dense<0.000000e+00> : vector<16x512xf32>
    %16 = tpu.matmul %14, %15, %cst_11 {dimension_numbers = #tpu.dot_dimension_numbers<[1], [0], [0], [1], [0, 0, 1, 1], [], []>} : vector<16x128xbf16>, vector<128x512xbf16>, vector<16x512xf32> -> vector<16x512xf32>
    %c0_12 = arith.constant 0 : index
    %c0_13 = arith.constant 0 : index
    %17 = vector.load %arg6[%c0_12, %c0_13] : memref<1x512xf32, #tpu.memory_space<vmem>>, vector<1x512xf32>
    %18 = vector.broadcast %17 : vector<1x512xf32> to vector<16x512xf32>
    %19 = arith.addf %16, %18 : vector<16x512xf32>
    %cst_14 = arith.constant 0.000000e+00 : f32
    %20 = vector.broadcast %cst_14 : f32 to vector<16x512xf32>
    %21 = arith.maximumf %19, %20 : vector<16x512xf32>
    %22 = arith.truncf %21 : vector<16x512xf32> to vector<16x512xbf16>
    %c0_15 = arith.constant 0 : index
    %c0_16 = arith.constant 0 : index
    %23 = vector.load %arg7[%c0_15, %c0_16] : memref<512x1024xbf16, #tpu.memory_space<vmem>>, vector<512x1024xbf16>
    %cst_17 = arith.constant dense<0.000000e+00> : vector<16x1024xf32>
    %24 = tpu.matmul %22, %23, %cst_17 {dimension_numbers = #tpu.dot_dimension_numbers<[1], [0], [0], [1], [0, 0, 1, 1], [], []>} : vector<16x512xbf16>, vector<512x1024xbf16>, vector<16x1024xf32> -> vector<16x1024xf32>
    %c0_18 = arith.constant 0 : index
    %c0_19 = arith.constant 0 : index
    %25 = vector.load %arg8[%c0_18, %c0_19] : memref<1x1024xf32, #tpu.memory_space<vmem>>, vector<1x1024xf32>
    %26 = vector.broadcast %25 : vector<1x1024xf32> to vector<16x1024xf32>
    %27 = arith.addf %24, %26 : vector<16x1024xf32>
    %cst_20 = arith.constant 0.000000e+00 : f32
    %28 = vector.broadcast %cst_20 : f32 to vector<16x1024xf32>
    %29 = arith.maximumf %27, %28 : vector<16x1024xf32>
    %30 = arith.truncf %29 : vector<16x1024xf32> to vector<16x1024xbf16>
    %c0_21 = arith.constant 0 : index
    %c0_22 = arith.constant 0 : index
    %31 = vector.load %arg9[%c0_21, %c0_22] : memref<1024x768xbf16, #tpu.memory_space<vmem>>, vector<1024x768xbf16>
    %cst_23 = arith.constant dense<0.000000e+00> : vector<16x768xf32>
    %32 = tpu.matmul %30, %31, %cst_23 {dimension_numbers = #tpu.dot_dimension_numbers<[1], [0], [0], [1], [0, 0, 1, 1], [], []>} : vector<16x1024xbf16>, vector<1024x768xbf16>, vector<16x768xf32> -> vector<16x768xf32>
    %c0_24 = arith.constant 0 : index
    %c0_25 = arith.constant 0 : index
    %33 = vector.load %arg10[%c0_24, %c0_25] : memref<1x768xf32, #tpu.memory_space<vmem>>, vector<1x768xf32>
    %34 = vector.broadcast %33 : vector<1x768xf32> to vector<16x768xf32>
    %35 = arith.addf %32, %34 : vector<16x768xf32>
    %36 = math.tanh %35 : vector<16x768xf32>
    %37 = arith.truncf %36 : vector<16x768xf32> to vector<16x768xbf16>
    %c0_26 = arith.constant 0 : index
    %c0_27 = arith.constant 0 : index
    %38 = vector.load %arg11[%c0_26, %c0_27] : memref<16x768xbf16, #tpu.memory_space<vmem>>, vector<16x768xbf16>
    tpu.vector_store %arg11[%c0_26, %c0_27], %37 {strides = array<i32>} : memref<16x768xbf16, #tpu.memory_space<vmem>>, vector<16x768xbf16>,
    return
  }
  func.func @transform_0(%arg0: i32) -> (i32, i32) {
    %c0_i32 = arith.constant 0 : i32
    %c0_i32_0 = arith.constant 0 : i32
    return %arg0, %c0_i32 : i32, i32
  }
  func.func @transform_1(%arg0: i32) -> (i32, i32) {
    %c0_i32 = arith.constant 0 : i32
    %c0_i32_0 = arith.constant 0 : i32
    %c0_i32_1 = arith.constant 0 : i32
    return %c0_i32, %c0_i32_0 : i32, i32
  }
  func.func @transform_2(%arg0: i32) -> (i32, i32) {
    %c0_i32 = arith.constant 0 : i32
    %c0_i32_0 = arith.constant 0 : i32
    %c0_i32_1 = arith.constant 0 : i32
    return %c0_i32, %c0_i32_0 : i32, i32
  }
  func.func @transform_3(%arg0: i32) -> (i32, i32) {
    %c0_i32 = arith.constant 0 : i32
    %c0_i32_0 = arith.constant 0 : i32
    %c0_i32_1 = arith.constant 0 : i32
    return %c0_i32, %c0_i32_0 : i32, i32
  }
  func.func @transform_4(%arg0: i32) -> (i32, i32) {
    %c0_i32 = arith.constant 0 : i32
    %c0_i32_0 = arith.constant 0 : i32
    %c0_i32_1 = arith.constant 0 : i32
    return %c0_i32, %c0_i32_0 : i32, i32
  }
  func.func @transform_5(%arg0: i32) -> (i32, i32) {
    %c0_i32 = arith.constant 0 : i32
    %c0_i32_0 = arith.constant 0 : i32
    %c0_i32_1 = arith.constant 0 : i32
    return %c0_i32, %c0_i32_0 : i32, i32
  }
  func.func @transform_6(%arg0: i32) -> (i32, i32) {
    %c0_i32 = arith.constant 0 : i32
    %c0_i32_0 = arith.constant 0 : i32
    %c0_i32_1 = arith.constant 0 : i32
    return %c0_i32, %c0_i32_0 : i32, i32
  }
  func.func @transform_7(%arg0: i32) -> (i32, i32) {
    %c0_i32 = arith.constant 0 : i32
    %c0_i32_0 = arith.constant 0 : i32
    %c0_i32_1 = arith.constant 0 : i32
    return %c0_i32, %c0_i32_0 : i32, i32
  }
  func.func @transform_8(%arg0: i32) -> (i32, i32) {
    %c0_i32 = arith.constant 0 : i32
    %c0_i32_0 = arith.constant 0 : i32
    %c0_i32_1 = arith.constant 0 : i32
    return %c0_i32, %c0_i32_0 : i32, i32
  }
  func.func @transform_9(%arg0: i32) -> (i32, i32) {
    %c0_i32 = arith.constant 0 : i32
    %c0_i32_0 = arith.constant 0 : i32
    %c0_i32_1 = arith.constant 0 : i32
    return %c0_i32, %c0_i32_0 : i32, i32
  }
  func.func @transform_10(%arg0: i32) -> (i32, i32) {
    %c0_i32 = arith.constant 0 : i32
    %c0_i32_0 = arith.constant 0 : i32
    return %arg0, %c0_i32 : i32, i32
  }
}

</mosaic_0001>

<llo_original>
// kernel: tpu_custom_call.1
$region0: #{tpu_custom_call.1}
  #allocation0 [shape = 'u32[]', space=smem, size = 0x4, offset = 0x4, fixed_abs, tag = 'smem constant byte address 0x4 - core index']
  #allocation1 [shape = 'u32[144,128]{1,0:T(1,128)}', space=vmem, size = 0x12000, scoped, tag = 'internal scratch']
  %s0 = inlined_call_operand.hbm [shape: f32[16,256], index: 0, kind: input, shape index: {}]
  %s1 = inlined_call_operand.hbm [shape: bf16[256,128], index: 1, kind: input, shape index: {}]
  %s2 = inlined_call_operand.hbm [shape: f32[1,128], index: 2, kind: input, shape index: {}]
  %s3 = inlined_call_operand.hbm [shape: bf16[128,128], index: 3, kind: input, shape index: {}]
  %s4 = inlined_call_operand.hbm [shape: bf16[128,512], index: 4, kind: input, shape index: {}]
  %s5 = inlined_call_operand.hbm [shape: f32[1,512], index: 5, kind: input, shape index: {}]
  %s6 = inlined_call_operand.hbm [shape: bf16[512,1024], index: 6, kind: input, shape index: {}]
  %s7 = inlined_call_operand.hbm [shape: f32[1,1024], index: 7, kind: input, shape index: {}]
  %s8 = inlined_call_operand.hbm [shape: bf16[1024,768], index: 8, kind: input, shape index: {}]
  %s9 = inlined_call_operand.hbm [shape: f32[1,768], index: 9, kind: input, shape index: {}]
  %s10 = inlined_call_operand.hbm [shape: bf16[16,768], index: 10, kind: output, shape index: {}]
  %s11 = sld [smem:[#allocation0]]
  $region90: #{tpu_custom_call.1} parent=0
    _
  %s13 = ssub.s32 1, %s11
  %s14 = scalar_select 0, %s13, %s11
  $region1: #{tpu_custom_call.1} parent=0
    #allocation2 [shape = 'u8[16384]{0}', space=vmem, size = 0x4000, scoped, tag = 'input window, operand 0, single buffered']
    #allocation3 [shape = 's32[1]{0}', space=sflag, size = 0x4, scoped, tag = 'scoped memory for tpu_custom_call.1']
    #allocation4 [shape = 's32[1]{0}', space=sflag, size = 0x4, scoped, tag = 'scoped memory for tpu_custom_call.1']
    #allocation5 [shape = 'u8[65536]{0}', space=vmem, size = 0x10000, scoped, tag = 'input window, operand 1, single buffered']
    #allocation6 [shape = 's32[1]{0}', space=sflag, size = 0x4, scoped, tag = 'scoped memory for tpu_custom_call.1']
    #allocation7 [shape = 'u8[512]{0}', space=vmem, size = 0x400, scoped, tag = 'input window, operand 2, single buffered']
    #allocation8 [shape = 'u8[32768]{0}', space=vmem, size = 0x8000, scoped, tag = 'input window, operand 3, single buffered']
    #allocation9 [shape = 's32[1]{0}', space=sflag, size = 0x4, scoped, tag = 'scoped memory for tpu_custom_call.1']
    #allocation10 [shape = 'u8[131072]{0}', space=vmem, size = 0x20000, scoped, tag = 'input window, operand 4, single buffered']
    #allocation11 [shape = 'u8[2048]{0}', space=vmem, size = 0x800, scoped, tag = 'input window, operand 5, single buffered']
    #allocation12 [shape = 's32[1]{0}', space=sflag, size = 0x4, scoped, tag = 'scoped memory for tpu_custom_call.1']
    #allocation13 [shape = 'u8[1048576]{0}', space=vmem, size = 0x100000, scoped, tag = 'input window, operand 6, single buffered']
    #allocation14 [shape = 'u8[4096]{0}', space=vmem, size = 0x1000, scoped, tag = 'input window, operand 7, single buffered']
    #allocation15 [shape = 's32[1]{0}', space=sflag, size = 0x4, scoped, tag = 'scoped memory for tpu_custom_call.1']
    #allocation16 [shape = 'u8[1572864]{0}', space=vmem, size = 0x180000, scoped, tag = 'input window, operand 8, single buffered']
    #allocation17 [shape = 'u8[3072]{0}', space=vmem, size = 0xc00, scoped, tag = 'input window, operand 9, single buffered']
    #allocation18 [shape = 's32[1]{0}', space=sflag, size = 0x4, scoped, tag = 'scoped memory for tpu_custom_call.1']
    #allocation19 [shape = 'u8[24576]{0}', space=vmem, size = 0x6000, scoped, tag = 'output window, operand 0, single buffered']
    %15 = vsyncpa [#allocation3], 0
    %16 = vsyncpa [#allocation6], 0
    %17 = vsyncpa [#allocation9], 0
    %18 = vsyncpa [#allocation12], 0
    %19 = vsyncpa [#allocation15], 0
    %20 = vsyncpa [#allocation18], 0
    %21 = vsyncpa [#allocation4], 0
    // Predicated region
    $region2: #{tpu_custom_call.1} parent=1 // pred_check
      _
    $region3: #{tpu_custom_call.1} parent=1 // pred_check_branch
      %23 = sbr.rel (0) target = $region5
    $region4: #{tpu_custom_call.1} parent=1 // pred_region
      %s25 = ssub.s32 512, 512
      %26 = vsyncadd [#allocation3], %s25
      %s27 = sshll.u32 [#allocation2], 4
      %s28 = int_to_ptr.vmem [resolvable:$true] %s27
      %33 = dma.hbm_to_vmem [thread:$0]  %s0, 512, %s28, [#allocation3], 256, 256, 16
    $region5: #{tpu_custom_call.1} parent=1 // pred_fallthru
      _
    // Predicated region
    $region6: #{tpu_custom_call.1} parent=1 // pred_check
      _
    $region7: #{tpu_custom_call.1} parent=1 // pred_check_branch
      %35 = sbr.rel (0) target = $region9
    $region8: #{tpu_custom_call.1} parent=1 // pred_region
      %s37 = ssub.s32 2048, 2048
      %38 = vsyncadd [#allocation6], %s37
      %s39 = sshll.u32 [#allocation5], 4
      %s40 = int_to_ptr.vmem [resolvable:$true] %s39
      %45 = dma.hbm_to_vmem [thread:$0]  %s1, 2048, %s40, [#allocation6], 64, 64, 4
    $region9: #{tpu_custom_call.1} parent=1 // pred_fallthru
      _
    // Predicated region
    $region10: #{tpu_custom_call.1} parent=1 // pred_check
      _
    $region11: #{tpu_custom_call.1} parent=1 // pred_check_branch
      %47 = sbr.rel (0) target = $region13
    $region12: #{tpu_custom_call.1} parent=1 // pred_region
      %s49 = ssub.s32 16, 16
      %50 = vsyncadd [#allocation6], %s49
      %s52 = sshll.u32 [#allocation7], 4
      %s53 = int_to_ptr.vmem [resolvable:$true] %s52
      %55 = dma.hbm_to_vmem [thread:$0]  %s2, 16, %s53, [#allocation6]
    $region13: #{tpu_custom_call.1} parent=1 // pred_fallthru
      _
    // Predicated region
    $region14: #{tpu_custom_call.1} parent=1 // pred_check
      _
    $region15: #{tpu_custom_call.1} parent=1 // pred_check_branch
      %57 = sbr.rel (0) target = $region17
    $region16: #{tpu_custom_call.1} parent=1 // pred_region
      %s59 = ssub.s32 1024, 1024
      %60 = vsyncadd [#allocation9], %s59
      %s61 = sshll.u32 [#allocation8], 4
      %s62 = int_to_ptr.vmem [resolvable:$true] %s61
      %67 = dma.hbm_to_vmem [thread:$0]  %s3, 1024, %s62, [#allocation9], 64, 64, 4
    $region17: #{tpu_custom_call.1} parent=1 // pred_fallthru
      _
    // Predicated region
    $region18: #{tpu_custom_call.1} parent=1 // pred_check
      _
    $region19: #{tpu_custom_call.1} parent=1 // pred_check_branch
      %69 = sbr.rel (0) target = $region21
    $region20: #{tpu_custom_call.1} parent=1 // pred_region
      %s71 = ssub.s32 4096, 4096
      %72 = vsyncadd [#allocation9], %s71
      %s73 = sshll.u32 [#allocation10], 4
      %s74 = int_to_ptr.vmem [resolvable:$true] %s73
      %79 = dma.hbm_to_vmem [thread:$0]  %s4, 4096, %s74, [#allocation9], 256, 256, 16
    $region21: #{tpu_custom_call.1} parent=1 // pred_fallthru
      _
    // Predicated region
    $region22: #{tpu_custom_call.1} parent=1 // pred_check
      _
    $region23: #{tpu_custom_call.1} parent=1 // pred_check_branch
      %81 = sbr.rel (0) target = $region25
    $region24: #{tpu_custom_call.1} parent=1 // pred_region
      %s83 = ssub.s32 64, 64
      %84 = vsyncadd [#allocation12], %s83
      %s86 = sshll.u32 [#allocation11], 4
      %s87 = int_to_ptr.vmem [resolvable:$true] %s86
      %89 = dma.hbm_to_vmem [thread:$0]  %s5, 64, %s87, [#allocation12]
    $region25: #{tpu_custom_call.1} parent=1 // pred_fallthru
      _
    // Predicated region
    $region26: #{tpu_custom_call.1} parent=1 // pred_check
      _
    $region27: #{tpu_custom_call.1} parent=1 // pred_check_branch
      %91 = sbr.rel (0) target = $region29
    $region28: #{tpu_custom_call.1} parent=1 // pred_region
      %s93 = ssub.s32 32768, 32768
      %94 = vsyncadd [#allocation12], %s93
      %s95 = sshll.u32 [#allocation13], 4
      %s96 = int_to_ptr.vmem [resolvable:$true] %s95
      %101 = dma.hbm_to_vmem [thread:$0]  %s6, 32768, %s96, [#allocation12], 512, 512, 32
    $region29: #{tpu_custom_call.1} parent=1 // pred_fallthru
      _
    // Predicated region
    $region30: #{tpu_custom_call.1} parent=1 // pred_check
      _
    $region31: #{tpu_custom_call.1} parent=1 // pred_check_branch
      %103 = sbr.rel (0) target = $region33
    $region32: #{tpu_custom_call.1} parent=1 // pred_region
      %s105 = ssub.s32 128, 128
      %106 = vsyncadd [#allocation15], %s105
      %s108 = sshll.u32 [#allocation14], 4
      %s109 = int_to_ptr.vmem [resolvable:$true] %s108
      %111 = dma.hbm_to_vmem [thread:$0]  %s7, 128, %s109, [#allocation15]
    $region33: #{tpu_custom_call.1} parent=1 // pred_fallthru
      _
    // Predicated region
    $region34: #{tpu_custom_call.1} parent=1 // pred_check
      _
    $region35: #{tpu_custom_call.1} parent=1 // pred_check_branch
      %113 = sbr.rel (0) target = $region37
    $region36: #{tpu_custom_call.1} parent=1 // pred_region
      %s115 = ssub.s32 49152, 49152
      %116 = vsyncadd [#allocation15], %s115
      %s117 = sshll.u32 [#allocation16], 4
      %s118 = int_to_ptr.vmem [resolvable:$true] %s117
      %123 = dma.hbm_to_vmem [thread:$0]  %s8, 49152, %s118, [#allocation15], 384, 384, 24
    $region37: #{tpu_custom_call.1} parent=1 // pred_fallthru
      _
    // Predicated region
    $region38: #{tpu_custom_call.1} parent=1 // pred_check
      _
    $region39: #{tpu_custom_call.1} parent=1 // pred_check_branch
      %125 = sbr.rel (0) target = $region41
    $region40: #{tpu_custom_call.1} parent=1 // pred_region
      %s127 = ssub.s32 96, 96
      %128 = vsyncadd [#allocation18], %s127
      %s130 = sshll.u32 [#allocation17], 4
      %s131 = int_to_ptr.vmem [resolvable:$true] %s130
      %133 = dma.hbm_to_vmem [thread:$0]  %s9, 96, %s131, [#allocation18]
    $region41: #{tpu_custom_call.1} parent=1 // pred_fallthru
      _
    // Predicated region
    $region42: #{tpu_custom_call.1} parent=1 // pred_check
      _
    $region43: #{tpu_custom_call.1} parent=1 // pred_check_branch
      %135 = sbr.rel (0) target = $region45
    $region44: #{tpu_custom_call.1} parent=1 // pred_region
      %136 = dma.done [#allocation3], 512
    $region45: #{tpu_custom_call.1} parent=1 // pred_fallthru
      _
    // Predicated region
    $region46: #{tpu_custom_call.1} parent=1 // pred_check
      _
    $region47: #{tpu_custom_call.1} parent=1 // pred_check_branch
      %138 = sbr.rel (0) target = $region49
    $region48: #{tpu_custom_call.1} parent=1 // pred_region
      %139 = dma.done [#allocation6], 2048
    $region49: #{tpu_custom_call.1} parent=1 // pred_fallthru
      _
    // Predicated region
    $region50: #{tpu_custom_call.1} parent=1 // pred_check
      _
    $region51: #{tpu_custom_call.1} parent=1 // pred_check_branch
      %141 = sbr.rel (0) target = $region53
    $region52: #{tpu_custom_call.1} parent=1 // pred_region
      %142 = dma.done [#allocation6], 16
    $region53: #{tpu_custom_call.1} parent=1 // pred_fallthru
      _
    // Predicated region
    $region54: #{tpu_custom_call.1} parent=1 // pred_check
      _
    $region55: #{tpu_custom_call.1} parent=1 // pred_check_branch
      %144 = sbr.rel (0) target = $region57
    $region56: #{tpu_custom_call.1} parent=1 // pred_region
      %145 = dma.done [#allocation9], 1024
    $region57: #{tpu_custom_call.1} parent=1 // pred_fallthru
      _
    // Predicated region
    $region58: #{tpu_custom_call.1} parent=1 // pred_check
      _
    $region59: #{tpu_custom_call.1} parent=1 // pred_check_branch
      %147 = sbr.rel (0) target = $region61
    $region60: #{tpu_custom_call.1} parent=1 // pred_region
      %148 = dma.done [#allocation9], 4096
    $region61: #{tpu_custom_call.1} parent=1 // pred_fallthru
      _
    // Predicated region
    $region62: #{tpu_custom_call.1} parent=1 // pred_check
      _
    $region63: #{tpu_custom_call.1} parent=1 // pred_check_branch
      %150 = sbr.rel (0) target = $region65
    $region64: #{tpu_custom_call.1} parent=1 // pred_region
      %151 = dma.done [#allocation12], 64
    $region65: #{tpu_custom_call.1} parent=1 // pred_fallthru
      _
    // Predicated region
    $region66: #{tpu_custom_call.1} parent=1 // pred_check
      _
    $region67: #{tpu_custom_call.1} parent=1 // pred_check_branch
      %153 = sbr.rel (0) target = $region69
    $region68: #{tpu_custom_call.1} parent=1 // pred_region
      %154 = dma.done [#allocation12], 32768
    $region69: #{tpu_custom_call.1} parent=1 // pred_fallthru
      _
    // Predicated region
    $region70: #{tpu_custom_call.1} parent=1 // pred_check
      _
    $region71: #{tpu_custom_call.1} parent=1 // pred_check_branch
      %156 = sbr.rel (0) target = $region73
    $region72: #{tpu_custom_call.1} parent=1 // pred_region
      %157 = dma.done [#allocation15], 128
    $region73: #{tpu_custom_call.1} parent=1 // pred_fallthru
      _
    // Predicated region
    $region74: #{tpu_custom_call.1} parent=1 // pred_check
      _
    $region75: #{tpu_custom_call.1} parent=1 // pred_check_branch
      %159 = sbr.rel (0) target = $region77
    $region76: #{tpu_custom_call.1} parent=1 // pred_region
      %160 = dma.done [#allocation15], 49152
    $region77: #{tpu_custom_call.1} parent=1 // pred_fallthru
      _
    // Predicated region
    $region78: #{tpu_custom_call.1} parent=1 // pred_check
      _
    $region79: #{tpu_custom_call.1} parent=1 // pred_check_branch
      %162 = sbr.rel (0) target = $region81
    $region80: #{tpu_custom_call.1} parent=1 // pred_region
      %163 = dma.done [#allocation18], 96
    $region81: #{tpu_custom_call.1} parent=1 // pred_fallthru
      _
    %v165 = vld [vmem:[#allocation2] sm:$0xff]
    %v166 = vld [vmem:[#allocation2 + $0x8] sm:$0xff]
    %v167 = vld [vmem:[#allocation2 + $0x10] sm:$0xff]
    %v168 = vld [vmem:[#allocation2 + $0x18] sm:$0xff]
    %v169 = vpack.c.bf16 %v167, %v165
    %v170 = vpack.c.bf16 %v168, %v166
    %v171 = vld [vmem:[#allocation5] sm:$0xf]
    %v172 = vld [vmem:[#allocation5 + $0x4] sm:$0xf]
    %v173 = vld [vmem:[#allocation5 + $0x8] sm:$0xf]
    %v174 = vld [vmem:[#allocation5 + $0xc] sm:$0xf]
    %v175 = vld [vmem:[#allocation5 + $0x10] sm:$0xf]
    %v176 = vld [vmem:[#allocation5 + $0x14] sm:$0xf]
    %v177 = vld [vmem:[#allocation5 + $0x18] sm:$0xf]
    %v178 = vld [vmem:[#allocation5 + $0x1c] sm:$0xf]
    %v179 = vld [vmem:[#allocation5 + $0x20] sm:$0xf]
    %v180 = vld [vmem:[#allocation5 + $0x24] sm:$0xf]
    %v181 = vld [vmem:[#allocation5 + $0x28] sm:$0xf]
    %v182 = vld [vmem:[#allocation5 + $0x2c] sm:$0xf]
    %v183 = vld [vmem:[#allocation5 + $0x30] sm:$0xf]
    %v184 = vld [vmem:[#allocation5 + $0x34] sm:$0xf]
    %v185 = vld [vmem:[#allocation5 + $0x38] sm:$0xf]
    %v186 = vld [vmem:[#allocation5 + $0x3c] sm:$0xf]
    %v187 = vld [vmem:[#allocation5 + $0x40] sm:$0xf]
    %v188 = vld [vmem:[#allocation5 + $0x44] sm:$0xf]
    %v189 = vld [vmem:[#allocation5 + $0x48] sm:$0xf]
    %v190 = vld [vmem:[#allocation5 + $0x4c] sm:$0xf]
    %v191 = vld [vmem:[#allocation5 + $0x50] sm:$0xf]
    %v192 = vld [vmem:[#allocation5 + $0x54] sm:$0xf]
    %v193 = vld [vmem:[#allocation5 + $0x58] sm:$0xf]
    %v194 = vld [vmem:[#allocation5 + $0x5c] sm:$0xf]
    %v195 = vld [vmem:[#allocation5 + $0x60] sm:$0xf]
    %v196 = vld [vmem:[#allocation5 + $0x64] sm:$0xf]
    %v197 = vld [vmem:[#allocation5 + $0x68] sm:$0xf]
    %v198 = vld [vmem:[#allocation5 + $0x6c] sm:$0xf]
    %v199 = vld [vmem:[#allocation5 + $0x70] sm:$0xf]
    %v200 = vld [vmem:[#allocation5 + $0x74] sm:$0xf]
    %v201 = vld [vmem:[#allocation5 + $0x78] sm:$0xf]
    %v202 = vld [vmem:[#allocation5 + $0x7c] sm:$0xf]
    %v203 = vld [vmem:[#allocation7] sm:$0x1]
    %v205 = vlaneseq
    %v206 = vshrl.u32 %v205, 7
    %v207 = vsub.s32 0, %v206
    %v208 = vrot.slane %v203, %v207
    %v242 = vunpack.c.l.b16 %v171
    %v243 = vunpack.c.l.b16 %v172
    %v244 = vunpack.c.l.b16 %v173
    %v245 = vunpack.c.l.b16 %v174
    %v246 = vunpack.c.l.b16 %v175
    %v247 = vunpack.c.l.b16 %v176
    %v248 = vunpack.c.l.b16 %v177
    %v249 = vunpack.c.l.b16 %v178
    %v250 = vunpack.c.l.b16 %v179
    %v251 = vunpack.c.l.b16 %v180
    %v252 = vunpack.c.l.b16 %v181
    %v253 = vunpack.c.l.b16 %v182
    %v254 = vunpack.c.l.b16 %v183
    %v255 = vunpack.c.l.b16 %v184
    %v256 = vunpack.c.l.b16 %v185
    %v257 = vunpack.c.l.b16 %v186
    %v258 = vunpack.c.l.b16 %v187
    %v259 = vunpack.c.l.b16 %v188
    %v260 = vunpack.c.l.b16 %v189
    %v261 = vunpack.c.l.b16 %v190
    %v262 = vunpack.c.l.b16 %v191
    %v263 = vunpack.c.l.b16 %v192
    %v264 = vunpack.c.l.b16 %v193
    %v265 = vunpack.c.l.b16 %v194
    %v266 = vunpack.c.l.b16 %v195
    %v267 = vunpack.c.l.b16 %v196
    %v268 = vunpack.c.l.b16 %v197
    %v269 = vunpack.c.l.b16 %v198
    %v270 = vunpack.c.l.b16 %v199
    %v271 = vunpack.c.l.b16 %v200
    %v272 = vunpack.c.l.b16 %v201
    %v273 = vunpack.c.l.b16 %v202
    %v274 = vpack.c.b16 %v243, %v242
    %v275 = vpack.c.b16 %v245, %v244
    %v276 = vpack.c.b16 %v247, %v246
    %v277 = vpack.c.b16 %v249, %v248
    %v278 = vpack.c.b16 %v251, %v250
    %v279 = vpack.c.b16 %v253, %v252
    %v280 = vpack.c.b16 %v255, %v254
    %v281 = vpack.c.b16 %v257, %v256
    %v282 = vpack.c.b16 %v259, %v258
    %v283 = vpack.c.b16 %v261, %v260
    %v284 = vpack.c.b16 %v263, %v262
    %v285 = vpack.c.b16 %v265, %v264
    %v286 = vpack.c.b16 %v267, %v266
    %v287 = vpack.c.b16 %v269, %v268
    %v288 = vpack.c.b16 %v271, %v270
    %v289 = vpack.c.b16 %v273, %v272
    %306 = vmatprep.subr.bf16.mxu0 0
    %307 = vmatpush1.bf16.msra.mxu0 %v281
    %308 = vmatprep.subr.bf16.mxu0 0
    %309 = vmatpush1.bf16.msra.mxu0 %v280
    %310 = vmatprep.subr.bf16.mxu0 0
    %311 = vmatpush1.bf16.msra.mxu0 %v279
    %312 = vmatprep.subr.bf16.mxu0 0
    %313 = vmatpush1.bf16.msra.mxu0 %v278
    %314 = vmatprep.subr.bf16.mxu0 0
    %315 = vmatpush1.bf16.msra.mxu0 %v277
    %316 = vmatprep.subr.bf16.mxu0 0
    %317 = vmatpush1.bf16.msra.mxu0 %v276
    %318 = vmatprep.subr.bf16.mxu0 0
    %319 = vmatpush1.bf16.msra.mxu0 %v275
    %320 = vmatprep.subr.bf16.mxu0 0
    %321 = vmatpush1.bf16.msra.mxu0 %v274
    %322 = vmatprep.subr.bf16.mxu0 0
    %323 = vmatpush2.bf16.msra.mxu0 %v289
    %324 = vmatprep.subr.bf16.mxu0 0
    %325 = vmatpush2.bf16.msra.mxu0 %v288
    %326 = vmatprep.subr.bf16.mxu0 0
    %327 = vmatpush2.bf16.msra.mxu0 %v287
    %328 = vmatprep.subr.bf16.mxu0 0
    %329 = vmatpush2.bf16.msra.mxu0 %v286
    %330 = vmatprep.subr.bf16.mxu0 0
    %331 = vmatpush2.bf16.msra.mxu0 %v285
    %332 = vmatprep.subr.bf16.mxu0 0
    %333 = vmatpush2.bf16.msra.mxu0 %v284
    %334 = vmatprep.subr.bf16.mxu0 0
    %335 = vmatpush2.bf16.msra.mxu0 %v283
    %336 = vmatprep.subr.bf16.mxu0 0
    %337 = vmatpush2.bf16.msra.mxu0 %v282
    %338 = vmatprep.mubr.bf16.mxu0 %v170
    %339 = vmatmul.mubr.bf16.gmra.mxu0 %v169
    %v340 = vpop.f32.mrf.mxu0
    %v341 = vadd.f32 %v208, %v340
    %v342 = vpop.f32.mrf.mxu0
    %v343 = vpop.f32.mrf.mxu0
    %v344 = vadd.f32 %v208, %v343
    %v345 = vpop.f32.mrf.mxu0
    %346 = vdwg.mxu0
    %v347 = vmax.f32 %v341, 0.0
    %v348 = vmax.f32 %v344, 0.0
    %v349 = vpack.c.bf16 %v348, %v347
    %v350 = vld [vmem:[#allocation8] sm:$0xf]
    %v351 = vld [vmem:[#allocation8 + $0x4] sm:$0xf]
    %v352 = vld [vmem:[#allocation8 + $0x8] sm:$0xf]
    %v353 = vld [vmem:[#allocation8 + $0xc] sm:$0xf]
    %v354 = vld [vmem:[#allocation8 + $0x10] sm:$0xf]
    %v355 = vld [vmem:[#allocation8 + $0x14] sm:$0xf]
    %v356 = vld [vmem:[#allocation8 + $0x18] sm:$0xf]
    %v357 = vld [vmem:[#allocation8 + $0x1c] sm:$0xf]
    %v358 = vld [vmem:[#allocation8 + $0x20] sm:$0xf]
    %v359 = vld [vmem:[#allocation8 + $0x24] sm:$0xf]
    %v360 = vld [vmem:[#allocation8 + $0x28] sm:$0xf]
    %v361 = vld [vmem:[#allocation8 + $0x2c] sm:$0xf]
    %v362 = vld [vmem:[#allocation8 + $0x30] sm:$0xf]
    %v363 = vld [vmem:[#allocation8 + $0x34] sm:$0xf]
    %v364 = vld [vmem:[#allocation8 + $0x38] sm:$0xf]
    %v365 = vld [vmem:[#allocation8 + $0x3c] sm:$0xf]
    %v382 = vunpack.c.l.b16 %v350
    %v383 = vunpack.c.l.b16 %v351
    %v384 = vunpack.c.l.b16 %v352
    %v385 = vunpack.c.l.b16 %v353
    %v386 = vunpack.c.l.b16 %v354
    %v387 = vunpack.c.l.b16 %v355
    %v388 = vunpack.c.l.b16 %v356
    %v389 = vunpack.c.l.b16 %v357
    %v390 = vunpack.c.l.b16 %v358
    %v391 = vunpack.c.l.b16 %v359
    %v392 = vunpack.c.l.b16 %v360
    %v393 = vunpack.c.l.b16 %v361
    %v394 = vunpack.c.l.b16 %v362
    %v395 = vunpack.c.l.b16 %v363
    %v396 = vunpack.c.l.b16 %v364
    %v397 = vunpack.c.l.b16 %v365
    %v398 = vpack.c.b16 %v383, %v382
    %v399 = vpack.c.b16 %v385, %v384
    %v400 = vpack.c.b16 %v387, %v386
    %v401 = vpack.c.b16 %v389, %v388
    %v402 = vpack.c.b16 %v391, %v390
    %v403 = vpack.c.b16 %v393, %v392
    %v404 = vpack.c.b16 %v395, %v394
    %v405 = vpack.c.b16 %v397, %v396
    %414 = vmatprep.subr.bf16.mxu0 0
    %415 = vmatpush1.bf16.msra.mxu0 %v405
    %416 = vmatprep.subr.bf16.mxu0 0
    %417 = vmatpush1.bf16.msra.mxu0 %v404
    %418 = vmatprep.subr.bf16.mxu0 0
    %419 = vmatpush1.bf16.msra.mxu0 %v403
    %420 = vmatprep.subr.bf16.mxu0 0
    %421 = vmatpush1.bf16.msra.mxu0 %v402
    %422 = vmatprep.subr.bf16.mxu0 0
    %423 = vmatpush1.bf16.msra.mxu0 %v401
    %424 = vmatprep.subr.bf16.mxu0 0
    %425 = vmatpush1.bf16.msra.mxu0 %v400
    %426 = vmatprep.subr.bf16.mxu0 0
    %427 = vmatpush1.bf16.msra.mxu0 %v399
    %428 = vmatprep.subr.bf16.mxu0 0
    %429 = vmatpush1.bf16.msra.mxu0 %v398
    %430 = vmatprep.subr.bf16.mxu0 0
    %431 = vmatpush2.bf16.msra.mxu0 0
    %432 = vmatprep.subr.bf16.mxu0 0
    %433 = vmatpush2.bf16.msra.mxu0 0
    %434 = vmatprep.subr.bf16.mxu0 0
    %435 = vmatpush2.bf16.msra.mxu0 0
    %436 = vmatprep.subr.bf16.mxu0 0
    %437 = vmatpush2.bf16.msra.mxu0 0
    %438 = vmatprep.subr.bf16.mxu0 0
    %439 = vmatpush2.bf16.msra.mxu0 0
    %440 = vmatprep.subr.bf16.mxu0 0
    %441 = vmatpush2.bf16.msra.mxu0 0
    %442 = vmatprep.subr.bf16.mxu0 0
    %443 = vmatpush2.bf16.msra.mxu0 0
    %444 = vmatprep.subr.bf16.mxu0 0
    %445 = vmatpush2.bf16.msra.mxu0 0
    %446 = vmatprep.mubr.bf16.mxu0 0
    %447 = vmatmul.mubr.bf16.gmra.mxu0 %v349
    %v448 = vpop.f32.mrf.mxu0
    %v449 = vadd.f32 %v166, %v448
    %v450 = vpop.f32.mrf.mxu0
    %v451 = vpop.f32.mrf.mxu0
    %v452 = vadd.f32 %v168, %v451
    %v453 = vpop.f32.mrf.mxu0
    %454 = vdwg.mxu0
    %v455 = vpack.c.bf16 %v452, %v449
    %v456 = vld [vmem:[#allocation10] sm:$0xff]
    %v457 = vld [vmem:[#allocation10 + $0x8] sm:$0xff]
    %v458 = vld [vmem:[#allocation10 + $0x10] sm:$0xff]
    %v459 = vld [vmem:[#allocation10 + $0x18] sm:$0xff]
    %v460 = vld [vmem:[#allocation10 + $0x20] sm:$0xff]
    %v461 = vld [vmem:[#allocation10 + $0x28] sm:$0xff]
    %v462 = vld [vmem:[#allocation10 + $0x30] sm:$0xff]
    %v463 = vld [vmem:[#allocation10 + $0x38] sm:$0xff]
    %v464 = vld [vmem:[#allocation10 + $0x40] sm:$0xff]
    %v465 = vld [vmem:[#allocation10 + $0x48] sm:$0xff]
    %v466 = vld [vmem:[#allocation10 + $0x50] sm:$0xff]
    %v467 = vld [vmem:[#allocation10 + $0x58] sm:$0xff]
    %v468 = vld [vmem:[#allocation10 + $0x60] sm:$0xff]
    %v469 = vld [vmem:[#allocation10 + $0x68] sm:$0xff]
    %v470 = vld [vmem:[#allocation10 + $0x70] sm:$0xff]
    %v471 = vld [vmem:[#allocation10 + $0x78] sm:$0xff]
    %v472 = vld [vmem:[#allocation10 + $0x80] sm:$0xff]
    %v473 = vld [vmem:[#allocation10 + $0x88] sm:$0xff]
    %v474 = vld [vmem:[#allocation10 + $0x90] sm:$0xff]
    %v475 = vld [vmem:[#allocation10 + $0x98] sm:$0xff]
    %v476 = vld [vmem:[#allocation10 + $0xa0] sm:$0xff]
    %v477 = vld [vmem:[#allocation10 + $0xa8] sm:$0xff]
    %v478 = vld [vmem:[#allocation10 + $0xb0] sm:$0xff]
    %v479 = vld [vmem:[#allocation10 + $0xb8] sm:$0xff]
    %v480 = vld [vmem:[#allocation10 + $0xc0] sm:$0xff]
    %v481 = vld [vmem:[#allocation10 + $0xc8] sm:$0xff]
    %v482 = vld [vmem:[#allocation10 + $0xd0] sm:$0xff]
    %v483 = vld [vmem:[#allocation10 + $0xd8] sm:$0xff]
    %v484 = vld [vmem:[#allocation10 + $0xe0] sm:$0xff]
    %v485 = vld [vmem:[#allocation10 + $0xe8] sm:$0xff]
    %v486 = vld [vmem:[#allocation10 + $0xf0] sm:$0xff]
    %v487 = vld [vmem:[#allocation10 + $0xf8] sm:$0xff]
    %v488 = vld [vmem:[#allocation11] sm:$0xf]
    %v490 = vlaneseq
    %v491 = vshrl.u32 %v490, 7
    %v492 = vsub.s32 0, %v491
    %v493 = vrot.slane %v488, %v492
    %v494 = vlaneseq
    %v495 = vshrl.u32 %v494, 7
    %v496 = vsub.s32 1, %v495
    %v497 = vrot.slane %v488, %v496
    %v498 = vlaneseq
    %v499 = vshrl.u32 %v498, 7
    %v500 = vsub.s32 2, %v499
    %v501 = vrot.slane %v488, %v500
    %v502 = vlaneseq
    %v503 = vshrl.u32 %v502, 7
    %v504 = vsub.s32 3, %v503
    %v505 = vrot.slane %v488, %v504
    %v542 = vunpack.c.l.b16 %v456
    %v543 = vunpack.c.h.b16 %v456
    %v544 = vunpack.c.l.b16 %v457
    %v545 = vunpack.c.h.b16 %v457
    %v546 = vunpack.c.l.b16 %v458
    %v547 = vunpack.c.h.b16 %v458
    %v548 = vunpack.c.l.b16 %v459
    %v549 = vunpack.c.h.b16 %v459
    %v550 = vunpack.c.l.b16 %v460
    %v551 = vunpack.c.h.b16 %v460
    %v552 = vunpack.c.l.b16 %v461
    %v553 = vunpack.c.h.b16 %v461
    %v554 = vunpack.c.l.b16 %v462
    %v555 = vunpack.c.h.b16 %v462
    %v556 = vunpack.c.l.b16 %v463
    %v557 = vunpack.c.h.b16 %v463
    %v558 = vunpack.c.l.b16 %v464
    %v559 = vunpack.c.h.b16 %v464
    %v560 = vunpack.c.l.b16 %v465
    %v561 = vunpack.c.h.b16 %v465
    %v562 = vunpack.c.l.b16 %v466
    %v563 = vunpack.c.h.b16 %v466
    %v564 = vunpack.c.l.b16 %v467
    %v565 = vunpack.c.h.b16 %v467
    %v566 = vunpack.c.l.b16 %v468
    %v567 = vunpack.c.h.b16 %v468
    %v568 = vunpack.c.l.b16 %v469
    %v569 = vunpack.c.h.b16 %v469
    %v570 = vunpack.c.l.b16 %v470
    %v571 = vunpack.c.h.b16 %v470
    %v572 = vunpack.c.l.b16 %v471
    %v573 = vunpack.c.h.b16 %v471
    %v574 = vunpack.c.l.b16 %v472
    %v575 = vunpack.c.h.b16 %v472
    %v576 = vunpack.c.l.b16 %v473
    %v577 = vunpack.c.h.b16 %v473
    %v578 = vunpack.c.l.b16 %v474
    %v579 = vunpack.c.h.b16 %v474
    %v580 = vunpack.c.l.b16 %v475
    %v581 = vunpack.c.h.b16 %v475
    %v582 = vunpack.c.l.b16 %v476
    %v583 = vunpack.c.h.b16 %v476
    %v584 = vunpack.c.l.b16 %v477
    %v585 = vunpack.c.h.b16 %v477
    %v586 = vunpack.c.l.b16 %v478
    %v587 = vunpack.c.h.b16 %v478
    %v588 = vunpack.c.l.b16 %v479
    %v589 = vunpack.c.h.b16 %v479
    %v590 = vunpack.c.l.b16 %v480
    %v591 = vunpack.c.h.b16 %v480
    %v592 = vunpack.c.l.b16 %v481
    %v593 = vunpack.c.h.b16 %v481
    %v594 = vunpack.c.l.b16 %v482
    %v595 = vunpack.c.h.b16 %v482
    %v596 = vunpack.c.l.b16 %v483
    %v597 = vunpack.c.h.b16 %v483
    %v598 = vunpack.c.l.b16 %v484
    %v599 = vunpack.c.h.b16 %v484
    %v600 = vunpack.c.l.b16 %v485
    %v601 = vunpack.c.h.b16 %v485
    %v602 = vunpack.c.l.b16 %v486
    %v603 = vunpack.c.h.b16 %v486
    %v604 = vunpack.c.l.b16 %v487
    %v605 = vunpack.c.h.b16 %v487
    %v606 = vpack.c.b16 %v546, %v542
    %v607 = vpack.c.b16 %v547, %v543
    %v608 = vpack.c.b16 %v548, %v544
    %v609 = vpack.c.b16 %v549, %v545
    %v610 = vpack.c.b16 %v554, %v550
    %v611 = vpack.c.b16 %v555, %v551
    %v612 = vpack.c.b16 %v556, %v552
    %v613 = vpack.c.b16 %v557, %v553
    %v614 = vpack.c.b16 %v562, %v558
    %v615 = vpack.c.b16 %v563, %v559
    %v616 = vpack.c.b16 %v564, %v560
    %v617 = vpack.c.b16 %v565, %v561
    %v618 = vpack.c.b16 %v570, %v566
    %v619 = vpack.c.b16 %v571, %v567
    %v620 = vpack.c.b16 %v572, %v568
    %v621 = vpack.c.b16 %v573, %v569
    %v622 = vpack.c.b16 %v578, %v574
    %v623 = vpack.c.b16 %v579, %v575
    %v624 = vpack.c.b16 %v580, %v576
    %v625 = vpack.c.b16 %v581, %v577
    %v626 = vpack.c.b16 %v586, %v582
    %v627 = vpack.c.b16 %v587, %v583
    %v628 = vpack.c.b16 %v588, %v584
    %v629 = vpack.c.b16 %v589, %v585
    %v630 = vpack.c.b16 %v594, %v590
    %v631 = vpack.c.b16 %v595, %v591
    %v632 = vpack.c.b16 %v596, %v592
    %v633 = vpack.c.b16 %v597, %v593
    %v634 = vpack.c.b16 %v602, %v598
    %v635 = vpack.c.b16 %v603, %v599
    %v636 = vpack.c.b16 %v604, %v600
    %v637 = vpack.c.b16 %v605, %v601
    %670 = vmatprep.subr.bf16.mxu0 %v635
    %671 = vmatpush1.bf16.msra.mxu0 %v634
    %672 = vmatprep.subr.bf16.mxu0 %v631
    %673 = vmatpush1.bf16.msra.mxu0 %v630
    %674 = vmatprep.subr.bf16.mxu0 %v627
    %675 = vmatpush1.bf16.msra.mxu0 %v626
    %676 = vmatprep.subr.bf16.mxu0 %v623
    %677 = vmatpush1.bf16.msra.mxu0 %v622
    %678 = vmatprep.subr.bf16.mxu0 %v619
    %679 = vmatpush1.bf16.msra.mxu0 %v618
    %680 = vmatprep.subr.bf16.mxu0 %v615
    %681 = vmatpush1.bf16.msra.mxu0 %v614
    %682 = vmatprep.subr.bf16.mxu0 %v611
    %683 = vmatpush1.bf16.msra.mxu0 %v610
    %684 = vmatprep.subr.bf16.mxu0 %v607
    %685 = vmatpush1.bf16.msra.mxu0 %v606
    %686 = vmatprep.subr.bf16.mxu0 0
    %687 = vmatpush2.bf16.msra.mxu0 0
    %688 = vmatprep.subr.bf16.mxu0 0
    %689 = vmatpush2.bf16.msra.mxu0 0
    %690 = vmatprep.subr.bf16.mxu0 0
    %691 = vmatpush2.bf16.msra.mxu0 0
    %692 = vmatprep.subr.bf16.mxu0 0
    %693 = vmatpush2.bf16.msra.mxu0 0
    %694 = vmatprep.subr.bf16.mxu0 0
    %695 = vmatpush2.bf16.msra.mxu0 0
    %696 = vmatprep.subr.bf16.mxu0 0
    %697 = vmatpush2.bf16.msra.mxu0 0
    %698 = vmatprep.subr.bf16.mxu0 0
    %699 = vmatpush2.bf16.msra.mxu0 0
    %700 = vmatprep.subr.bf16.mxu0 0
    %701 = vmatpush2.bf16.msra.mxu0 0
    %702 = vmatprep.mubr.bf16.mxu0 0
    %703 = vmatmul.mubr.bf16.gmra.mxu0 %v455
    %v704 = vpop.f32.mrf.mxu0
    %v705 = vadd.f32 %v493, %v704
    %v706 = vpop.f32.mrf.mxu0
    %v707 = vadd.f32 %v497, %v706
    %v708 = vpop.f32.mrf.mxu0
    %v709 = vadd.f32 %v493, %v708
    %v710 = vpop.f32.mrf.mxu0
    %v711 = vadd.f32 %v497, %v710
    %712 = vdwg.mxu0
    %713 = vmatprep.subr.bf16.mxu0 %v637
    %714 = vmatpush1.bf16.msra.mxu0 %v636
    %715 = vmatprep.subr.bf16.mxu0 %v633
    %716 = vmatpush1.bf16.msra.mxu0 %v632
    %717 = vmatprep.subr.bf16.mxu0 %v629
    %718 = vmatpush1.bf16.msra.mxu0 %v628
    %719 = vmatprep.subr.bf16.mxu0 %v625
    %720 = vmatpush1.bf16.msra.mxu0 %v624
    %721 = vmatprep.subr.bf16.mxu0 %v621
    %722 = vmatpush1.bf16.msra.mxu0 %v620
    %723 = vmatprep.subr.bf16.mxu0 %v617
    %724 = vmatpush1.bf16.msra.mxu0 %v616
    %725 = vmatprep.subr.bf16.mxu0 %v613
    %726 = vmatpush1.bf16.msra.mxu0 %v612
    %727 = vmatprep.subr.bf16.mxu0 %v609
    %728 = vmatpush1.bf16.msra.mxu0 %v608
    %729 = vmatprep.subr.bf16.mxu0 0
    %730 = vmatpush2.bf16.msra.mxu0 0
    %731 = vmatprep.subr.bf16.mxu0 0
    %732 = vmatpush2.bf16.msra.mxu0 0
    %733 = vmatprep.subr.bf16.mxu0 0
    %734 = vmatpush2.bf16.msra.mxu0 0
    %735 = vmatprep.subr.bf16.mxu0 0
    %736 = vmatpush2.bf16.msra.mxu0 0
    %737 = vmatprep.subr.bf16.mxu0 0
    %738 = vmatpush2.bf16.msra.mxu0 0
    %739 = vmatprep.subr.bf16.mxu0 0
    %740 = vmatpush2.bf16.msra.mxu0 0
    %741 = vmatprep.subr.bf16.mxu0 0
    %742 = vmatpush2.bf16.msra.mxu0 0
    %743 = vmatprep.subr.bf16.mxu0 0
    %744 = vmatpush2.bf16.msra.mxu0 0
    %745 = vmatprep.mubr.bf16.mxu0 0
    %746 = vmatmul.mubr.bf16.gmra.mxu0 %v455
    %v747 = vpop.f32.mrf.mxu0
    %v748 = vadd.f32 %v501, %v747
    %v749 = vpop.f32.mrf.mxu0
    %v750 = vadd.f32 %v505, %v749
    %v751 = vpop.f32.mrf.mxu0
    %v752 = vadd.f32 %v501, %v751
    %v753 = vpop.f32.mrf.mxu0
    %v754 = vadd.f32 %v505, %v753
    %755 = vdwg.mxu0
    %v756 = vmax.f32 %v705, 0.0
    %v757 = vmax.f32 %v707, 0.0
    %v758 = vmax.f32 %v748, 0.0
    %v759 = vmax.f32 %v750, 0.0
    %v760 = vmax.f32 %v709, 0.0
    %v761 = vmax.f32 %v711, 0.0
    %v762 = vmax.f32 %v752, 0.0
    %v763 = vmax.f32 %v754, 0.0
    %v764 = vpack.c.bf16 %v760, %v756
    %v765 = vpack.c.bf16 %v761, %v757
    %v766 = vpack.c.bf16 %v762, %v758
    %v767 = vpack.c.bf16 %v763, %v759
    %v768 = vld [vmem:[#allocation13] sm:$0xff]
    %v769 = vld [vmem:[#allocation13 + $0x8] sm:$0xff]
    %v770 = vld [vmem:[#allocation13 + $0x10] sm:$0xff]
    %v771 = vld [vmem:[#allocation13 + $0x18] sm:$0xff]
    %v772 = vld [vmem:[#allocation13 + $0x20] sm:$0xff]
    %v773 = vld [vmem:[#allocation13 + $0x28] sm:$0xff]
    %v774 = vld [vmem:[#allocation13 + $0x30] sm:$0xff]
    %v775 = vld [vmem:[#allocation13 + $0x38] sm:$0xff]
    %v776 = vld [vmem:[#allocation13 + $0x40] sm:$0xff]
    %v777 = vld [vmem:[#allocation13 + $0x48] sm:$0xff]
    %v778 = vld [vmem:[#allocation13 + $0x50] sm:$0xff]
    %v779 = vld [vmem:[#allocation13 + $0x58] sm:$0xff]
    %v780 = vld [vmem:[#allocation13 + $0x60] sm:$0xff]
    %v781 = vld [vmem:[#allocation13 + $0x68] sm:$0xff]
    %v782 = vld [vmem:[#allocation13 + $0x70] sm:$0xff]
    %v783 = vld [vmem:[#allocation13 + $0x78] sm:$0xff]
    %v784 = vld [vmem:[#allocation13 + $0x80] sm:$0xff]
    %v785 = vld [vmem:[#allocation13 + $0x88] sm:$0xff]
    %v786 = vld [vmem:[#allocation13 + $0x90] sm:$0xff]
    %v787 = vld [vmem:[#allocation13 + $0x98] sm:$0xff]
    %v788 = vld [vmem:[#allocation13 + $0xa0] sm:$0xff]
    %v789 = vld [vmem:[#allocation13 + $0xa8] sm:$0xff]
    %v790 = vld [vmem:[#allocation13 + $0xb0] sm:$0xff]
    %v791 = vld [vmem:[#allocation13 + $0xb8] sm:$0xff]
    %v792 = vld [vmem:[#allocation13 + $0xc0] sm:$0xff]
    %v793 = vld [vmem:[#allocation13 + $0xc8] sm:$0xff]
    %v794 = vld [vmem:[#allocation13 + $0xd0] sm:$0xff]
    %v795 = vld [vmem:[#allocation13 + $0xd8] sm:$0xff]
    %v796 = vld [vmem:[#allocation13 + $0xe0] sm:$0xff]
    %v797 = vld [vmem:[#allocation13 + $0xe8] sm:$0xff]
    %v798 = vld [vmem:[#allocation13 + $0xf0] sm:$0xff]
    %v799 = vld [vmem:[#allocation13 + $0xf8] sm:$0xff]
    %v800 = vld [vmem:[#allocation13 + $0x100] sm:$0xff]
    %v801 = vld [vmem:[#allocation13 + $0x108] sm:$0xff]
    %v802 = vld [vmem:[#allocation13 + $0x110] sm:$0xff]
    %v803 = vld [vmem:[#allocation13 + $0x118] sm:$0xff]
    %v804 = vld [vmem:[#allocation13 + $0x120] sm:$0xff]
    %v805 = vld [vmem:[#allocation13 + $0x128] sm:$0xff]
    %v806 = vld [vmem:[#allocation13 + $0x130] sm:$0xff]
    %v807 = vld [vmem:[#allocation13 + $0x138] sm:$0xff]
    %v808 = vld [vmem:[#allocation13 + $0x140] sm:$0xff]
    %v809 = vld [vmem:[#allocation13 + $0x148] sm:$0xff]
    %v810 = vld [vmem:[#allocation13 + $0x150] sm:$0xff]
    %v811 = vld [vmem:[#allocation13 + $0x158] sm:$0xff]
    %v812 = vld [vmem:[#allocation13 + $0x160] sm:$0xff]
    %v813 = vld [vmem:[#allocation13 + $0x168] sm:$0xff]
    %v814 = vld [vmem:[#allocation13 + $0x170] sm:$0xff]
    %v815 = vld [vmem:[#allocation13 + $0x178] sm:$0xff]
    %v816 = vld [vmem:[#allocation13 + $0x180] sm:$0xff]
    %v817 = vld [vmem:[#allocation13 + $0x188] sm:$0xff]
    %v818 = vld [vmem:[#allocation13 + $0x190] sm:$0xff]
    %v819 = vld [vmem:[#allocation13 + $0x198] sm:$0xff]
    %v820 = vld [vmem:[#allocation13 + $0x1a0] sm:$0xff]
    %v821 = vld [vmem:[#allocation13 + $0x1a8] sm:$0xff]
    %v822 = vld [vmem:[#allocation13 + $0x1b0] sm:$0xff]
    %v823 = vld [vmem:[#allocation13 + $0x1b8] sm:$0xff]
    %v824 = vld [vmem:[#allocation13 + $0x1c0] sm:$0xff]
    %v825 = vld [vmem:[#allocation13 + $0x1c8] sm:$0xff]
    %v826 = vld [vmem:[#allocation13 + $0x1d0] sm:$0xff]
    %v827 = vld [vmem:[#allocation13 + $0x1d8] sm:$0xff]
    %v828 = vld [vmem:[#allocation13 + $0x1e0] sm:$0xff]
    %v829 = vld [vmem:[#allocation13 + $0x1e8] sm:$0xff]
    %v830 = vld [vmem:[#allocation13 + $0x1f0] sm:$0xff]
    %v831 = vld [vmem:[#allocation13 + $0x1f8] sm:$0xff]
    %v832 = vld [vmem:[#allocation13 + $0x200] sm:$0xff]
    %v833 = vld [vmem:[#allocation13 + $0x208] sm:$0xff]
    %v834 = vld [vmem:[#allocation13 + $0x210] sm:$0xff]
    %v835 = vld [vmem:[#allocation13 + $0x218] sm:$0xff]
    %v836 = vld [vmem:[#allocation13 + $0x220] sm:$0xff]
    %v837 = vld [vmem:[#allocation13 + $0x228] sm:$0xff]
    %v838 = vld [vmem:[#allocation13 + $0x230] sm:$0xff]
    %v839 = vld [vmem:[#allocation13 + $0x238] sm:$0xff]
    %v840 = vld [vmem:[#allocation13 + $0x240] sm:$0xff]
    %v841 = vld [vmem:[#allocation13 + $0x248] sm:$0xff]
    %v842 = vld [vmem:[#allocation13 + $0x250] sm:$0xff]
    %v843 = vld [vmem:[#allocation13 + $0x258] sm:$0xff]
    %v844 = vld [vmem:[#allocation13 + $0x260] sm:$0xff]
    %v845 = vld [vmem:[#allocation13 + $0x268] sm:$0xff]
    %v846 = vld [vmem:[#allocation13 + $0x270] sm:$0xff]
    %v847 = vld [vmem:[#allocation13 + $0x278] sm:$0xff]
    %v848 = vld [vmem:[#allocation13 + $0x280] sm:$0xff]
    %v849 = vld [vmem:[#allocation13 + $0x288] sm:$0xff]
    %v850 = vld [vmem:[#allocation13 + $0x290] sm:$0xff]
    %v851 = vld [vmem:[#allocation13 + $0x298] sm:$0xff]
    %v852 = vld [vmem:[#allocation13 + $0x2a0] sm:$0xff]
    %v853 = vld [vmem:[#allocation13 + $0x2a8] sm:$0xff]
    %v854 = vld [vmem:[#allocation13 + $0x2b0] sm:$0xff]
    %v855 = vld [vmem:[#allocation13 + $0x2b8] sm:$0xff]
    %v856 = vld [vmem:[#allocation13 + $0x2c0] sm:$0xff]
    %v857 = vld [vmem:[#allocation13 + $0x2c8] sm:$0xff]
    %v858 = vld [vmem:[#allocation13 + $0x2d0] sm:$0xff]
    %v859 = vld [vmem:[#allocation13 + $0x2d8] sm:$0xff]
    %v860 = vld [vmem:[#allocation13 + $0x2e0] sm:$0xff]
    %v861 = vld [vmem:[#allocation13 + $0x2e8] sm:$0xff]
    %v862 = vld [vmem:[#allocation13 + $0x2f0] sm:$0xff]
    %v863 = vld [vmem:[#allocation13 + $0x2f8] sm:$0xff]
    %v864 = vld [vmem:[#allocation13 + $0x300] sm:$0xff]
    %v865 = vld [vmem:[#allocation13 + $0x308] sm:$0xff]
    %v866 = vld [vmem:[#allocation13 + $0x310] sm:$0xff]
    %v867 = vld [vmem:[#allocation13 + $0x318] sm:$0xff]
    %v868 = vld [vmem:[#allocation13 + $0x320] sm:$0xff]
    %v869 = vld [vmem:[#allocation13 + $0x328] sm:$0xff]
    %v870 = vld [vmem:[#allocation13 + $0x330] sm:$0xff]
    %v871 = vld [vmem:[#allocation13 + $0x338] sm:$0xff]
    %v872 = vld [vmem:[#allocation13 + $0x340] sm:$0xff]
    %v873 = vld [vmem:[#allocation13 + $0x348] sm:$0xff]
    %v874 = vld [vmem:[#allocation13 + $0x350] sm:$0xff]
    %v875 = vld [vmem:[#allocation13 + $0x358] sm:$0xff]
    %v876 = vld [vmem:[#allocation13 + $0x360] sm:$0xff]
    %v877 = vld [vmem:[#allocation13 + $0x368] sm:$0xff]
    %v878 = vld [vmem:[#allocation13 + $0x370] sm:$0xff]
    %v879 = vld [vmem:[#allocation13 + $0x378] sm:$0xff]
    %v880 = vld [vmem:[#allocation13 + $0x380] sm:$0xff]
    %v881 = vld [vmem:[#allocation13 + $0x388] sm:$0xff]
    %v882 = vld [vmem:[#allocation13 + $0x390] sm:$0xff]
    %v883 = vld [vmem:[#allocation13 + $0x398] sm:$0xff]
    %v884 = vld [vmem:[#allocation13 + $0x3a0] sm:$0xff]
    %v885 = vld [vmem:[#allocation13 + $0x3a8] sm:$0xff]
    %v886 = vld [vmem:[#allocation13 + $0x3b0] sm:$0xff]
    %v887 = vld [vmem:[#allocation13 + $0x3b8] sm:$0xff]
    %v888 = vld [vmem:[#allocation13 + $0x3c0] sm:$0xff]
    %v889 = vld [vmem:[#allocation13 + $0x3c8] sm:$0xff]
    %v890 = vld [vmem:[#allocation13 + $0x3d0] sm:$0xff]
    %v891 = vld [vmem:[#allocation13 + $0x3d8] sm:$0xff]
    %v892 = vld [vmem:[#allocation13 + $0x3e0] sm:$0xff]
    %v893 = vld [vmem:[#allocation13 + $0x3e8] sm:$0xff]
    %v894 = vld [vmem:[#allocation13 + $0x3f0] sm:$0xff]
    %v895 = vld [vmem:[#allocation13 + $0x3f8] sm:$0xff]
    %v896 = vld [vmem:[#allocation13 + $0x400] sm:$0xff]
    %v897 = vld [vmem:[#allocation13 + $0x408] sm:$0xff]
    %v898 = vld [vmem:[#allocation13 + $0x410] sm:$0xff]
    %v899 = vld [vmem:[#allocation13 + $0x418] sm:$0xff]
    %v900 = vld [vmem:[#allocation13 + $0x420] sm:$0xff]
    %v901 = vld [vmem:[#allocation13 + $0x428] sm:$0xff]
    %v902 = vld [vmem:[#allocation13 + $0x430] sm:$0xff]
    %v903 = vld [vmem:[#allocation13 + $0x438] sm:$0xff]
    %v904 = vld [vmem:[#allocation13 + $0x440] sm:$0xff]
    %v905 = vld [vmem:[#allocation13 + $0x448] sm:$0xff]
    %v906 = vld [vmem:[#allocation13 + $0x450] sm:$0xff]
    %v907 = vld [vmem:[#allocation13 + $0x458] sm:$0xff]
    %v908 = vld [vmem:[#allocation13 + $0x460] sm:$0xff]
    %v909 = vld [vmem:[#allocation13 + $0x468] sm:$0xff]
    %v910 = vld [vmem:[#allocation13 + $0x470] sm:$0xff]
    %v911 = vld [vmem:[#allocation13 + $0x478] sm:$0xff]
    %v912 = vld [vmem:[#allocation13 + $0x480] sm:$0xff]
    %v913 = vld [vmem:[#allocation13 + $0x488] sm:$0xff]
    %v914 = vld [vmem:[#allocation13 + $0x490] sm:$0xff]
    %v915 = vld [vmem:[#allocation13 + $0x498] sm:$0xff]
    %v916 = vld [vmem:[#allocation13 + $0x4a0] sm:$0xff]
    %v917 = vld [vmem:[#allocation13 + $0x4a8] sm:$0xff]
    %v918 = vld [vmem:[#allocation13 + $0x4b0] sm:$0xff]
    %v919 = vld [vmem:[#allocation13 + $0x4b8] sm:$0xff]
    %v920 = vld [vmem:[#allocation13 + $0x4c0] sm:$0xff]
    %v921 = vld [vmem:[#allocation13 + $0x4c8] sm:$0xff]
    %v922 = vld [vmem:[#allocation13 + $0x4d0] sm:$0xff]
    %v923 = vld [vmem:[#allocation13 + $0x4d8] sm:$0xff]
    %v924 = vld [vmem:[#allocation13 + $0x4e0] sm:$0xff]
    %v925 = vld [vmem:[#allocation13 + $0x4e8] sm:$0xff]
    %v926 = vld [vmem:[#allocation13 + $0x4f0] sm:$0xff]
    %v927 = vld [vmem:[#allocation13 + $0x4f8] sm:$0xff]
    %v928 = vld [vmem:[#allocation13 + $0x500] sm:$0xff]
    %v929 = vld [vmem:[#allocation13 + $0x508] sm:$0xff]
    %v930 = vld [vmem:[#allocation13 + $0x510] sm:$0xff]
    %v931 = vld [vmem:[#allocation13 + $0x518] sm:$0xff]
    %v932 = vld [vmem:[#allocation13 + $0x520] sm:$0xff]
    %v933 = vld [vmem:[#allocation13 + $0x528] sm:$0xff]
    %v934 = vld [vmem:[#allocation13 + $0x530] sm:$0xff]
    %v935 = vld [vmem:[#allocation13 + $0x538] sm:$0xff]
    %v936 = vld [vmem:[#allocation13 + $0x540] sm:$0xff]
    %v937 = vld [vmem:[#allocation13 + $0x548] sm:$0xff]
    %v938 = vld [vmem:[#allocation13 + $0x550] sm:$0xff]
    %v939 = vld [vmem:[#allocation13 + $0x558] sm:$0xff]
    %v940 = vld [vmem:[#allocation13 + $0x560] sm:$0xff]
    %v941 = vld [vmem:[#allocation13 + $0x568] sm:$0xff]
    %v942 = vld [vmem:[#allocation13 + $0x570] sm:$0xff]
    %v943 = vld [vmem:[#allocation13 + $0x578] sm:$0xff]
    %v944 = vld [vmem:[#allocation13 + $0x580] sm:$0xff]
    %v945 = vld [vmem:[#allocation13 + $0x588] sm:$0xff]
    %v946 = vld [vmem:[#allocation13 + $0x590] sm:$0xff]
    %v947 = vld [vmem:[#allocation13 + $0x598] sm:$0xff]
    %v948 = vld [vmem:[#allocation13 + $0x5a0] sm:$0xff]
    %v949 = vld [vmem:[#allocation13 + $0x5a8] sm:$0xff]
    %v950 = vld [vmem:[#allocation13 + $0x5b0] sm:$0xff]
    %v951 = vld [vmem:[#allocation13 + $0x5b8] sm:$0xff]
    %v952 = vld [vmem:[#allocation13 + $0x5c0] sm:$0xff]
    %v953 = vld [vmem:[#allocation13 + $0x5c8] sm:$0xff]
    %v954 = vld [vmem:[#allocation13 + $0x5d0] sm:$0xff]
    %v955 = vld [vmem:[#allocation13 + $0x5d8] sm:$0xff]
    %v956 = vld [vmem:[#allocation13 + $0x5e0] sm:$0xff]
    %v957 = vld [vmem:[#allocation13 + $0x5e8] sm:$0xff]
    %v958 = vld [vmem:[#allocation13 + $0x5f0] sm:$0xff]
    %v959 = vld [vmem:[#allocation13 + $0x5f8] sm:$0xff]
    %v960 = vld [vmem:[#allocation13 + $0x600] sm:$0xff]
    %v961 = vld [vmem:[#allocation13 + $0x608] sm:$0xff]
    %v962 = vld [vmem:[#allocation13 + $0x610] sm:$0xff]
    %v963 = vld [vmem:[#allocation13 + $0x618] sm:$0xff]
    %v964 = vld [vmem:[#allocation13 + $0x620] sm:$0xff]
    %v965 = vld [vmem:[#allocation13 + $0x628] sm:$0xff]
    %v966 = vld [vmem:[#allocation13 + $0x630] sm:$0xff]
    %v967 = vld [vmem:[#allocation13 + $0x638] sm:$0xff]
    %v968 = vld [vmem:[#allocation13 + $0x640] sm:$0xff]
    %v969 = vld [vmem:[#allocation13 + $0x648] sm:$0xff]
    %v970 = vld [vmem:[#allocation13 + $0x650] sm:$0xff]
    %v971 = vld [vmem:[#allocation13 + $0x658] sm:$0xff]
    %v972 = vld [vmem:[#allocation13 + $0x660] sm:$0xff]
    %v973 = vld [vmem:[#allocation13 + $0x668] sm:$0xff]
    %v974 = vld [vmem:[#allocation13 + $0x670] sm:$0xff]
    %v975 = vld [vmem:[#allocation13 + $0x678] sm:$0xff]
    %v976 = vld [vmem:[#allocation13 + $0x680] sm:$0xff]
    %v977 = vld [vmem:[#allocation13 + $0x688] sm:$0xff]
    %v978 = vld [vmem:[#allocation13 + $0x690] sm:$0xff]
    %v979 = vld [vmem:[#allocation13 + $0x698] sm:$0xff]
    %v980 = vld [vmem:[#allocation13 + $0x6a0] sm:$0xff]
    %v981 = vld [vmem:[#allocation13 + $0x6a8] sm:$0xff]
    %v982 = vld [vmem:[#allocation13 + $0x6b0] sm:$0xff]
    %v983 = vld [vmem:[#allocation13 + $0x6b8] sm:$0xff]
    %v984 = vld [vmem:[#allocation13 + $0x6c0] sm:$0xff]
    %v985 = vld [vmem:[#allocation13 + $0x6c8] sm:$0xff]
    %v986 = vld [vmem:[#allocation13 + $0x6d0] sm:$0xff]
    %v987 = vld [vmem:[#allocation13 + $0x6d8] sm:$0xff]
    %v988 = vld [vmem:[#allocation13 + $0x6e0] sm:$0xff]
    %v989 = vld [vmem:[#allocation13 + $0x6e8] sm:$0xff]
    %v990 = vld [vmem:[#allocation13 + $0x6f0] sm:$0xff]
    %v991 = vld [vmem:[#allocation13 + $0x6f8] sm:$0xff]
    %v992 = vld [vmem:[#allocation13 + $0x700] sm:$0xff]
    %v993 = vld [vmem:[#allocation13 + $0x708] sm:$0xff]
    %v994 = vld [vmem:[#allocation13 + $0x710] sm:$0xff]
    %v995 = vld [vmem:[#allocation13 + $0x718] sm:$0xff]
    %v996 = vld [vmem:[#allocation13 + $0x720] sm:$0xff]
    %v997 = vld [vmem:[#allocation13 + $0x728] sm:$0xff]
    %v998 = vld [vmem:[#allocation13 + $0x730] sm:$0xff]
    %v999 = vld [vmem:[#allocation13 + $0x738] sm:$0xff]
    %v1000 = vld [vmem:[#allocation13 + $0x740] sm:$0xff]
    %v1001 = vld [vmem:[#allocation13 + $0x748] sm:$0xff]
    %v1002 = vld [vmem:[#allocation13 + $0x750] sm:$0xff]
    %v1003 = vld [vmem:[#allocation13 + $0x758] sm:$0xff]
    %v1004 = vld [vmem:[#allocation13 + $0x760] sm:$0xff]
    %v1005 = vld [vmem:[#allocation13 + $0x768] sm:$0xff]
    %v1006 = vld [vmem:[#allocation13 + $0x770] sm:$0xff]
    %v1007 = vld [vmem:[#allocation13 + $0x778] sm:$0xff]
    %v1008 = vld [vmem:[#allocation13 + $0x780] sm:$0xff]
    %v1009 = vld [vmem:[#allocation13 + $0x788] sm:$0xff]
    %v1010 = vld [vmem:[#allocation13 + $0x790] sm:$0xff]
    %v1011 = vld [vmem:[#allocation13 + $0x798] sm:$0xff]
    %v1012 = vld [vmem:[#allocation13 + $0x7a0] sm:$0xff]
    %v1013 = vld [vmem:[#allocation13 + $0x7a8] sm:$0xff]
    %v1014 = vld [vmem:[#allocation13 + $0x7b0] sm:$0xff]
    %v1015 = vld [vmem:[#allocation13 + $0x7b8] sm:$0xff]
    %v1016 = vld [vmem:[#allocation13 + $0x7c0] sm:$0xff]
    %v1017 = vld [vmem:[#allocation13 + $0x7c8] sm:$0xff]
    %v1018 = vld [vmem:[#allocation13 + $0x7d0] sm:$0xff]
    %v1019 = vld [vmem:[#allocation13 + $0x7d8] sm:$0xff]
    %v1020 = vld [vmem:[#allocation13 + $0x7e0] sm:$0xff]
    %v1021 = vld [vmem:[#allocation13 + $0x7e8] sm:$0xff]
    %v1022 = vld [vmem:[#allocation13 + $0x7f0] sm:$0xff]
    %v1023 = vld [vmem:[#allocation13 + $0x7f8] sm:$0xff]
    %v1024 = vld [vmem:[#allocation14] sm:$0xff]
    %v1026 = vlaneseq
    %v1027 = vshrl.u32 %v1026, 7
    %v1028 = vsub.s32 0, %v1027
    %v1029 = vrot.slane %v1024, %v1028
    %v1030 = vlaneseq
    %v1031 = vshrl.u32 %v1030, 7
    %v1032 = vsub.s32 1, %v1031
    %v1033 = vrot.slane %v1024, %v1032
    %v1034 = vlaneseq
    %v1035 = vshrl.u32 %v1034, 7
    %v1036 = vsub.s32 2, %v1035
    %v1037 = vrot.slane %v1024, %v1036
    %v1038 = vlaneseq
    %v1039 = vshrl.u32 %v1038, 7
    %v1040 = vsub.s32 3, %v1039
    %v1041 = vrot.slane %v1024, %v1040
    %v1042 = vlaneseq
    %v1043 = vshrl.u32 %v1042, 7
    %v1044 = vsub.s32 4, %v1043
    %v1045 = vrot.slane %v1024, %v1044
    %v1046 = vlaneseq
    %v1047 = vshrl.u32 %v1046, 7
    %v1048 = vsub.s32 5, %v1047
    %v1049 = vrot.slane %v1024, %v1048
    %v1050 = vlaneseq
    %v1051 = vshrl.u32 %v1050, 7
    %v1052 = vsub.s32 6, %v1051
    %v1053 = vrot.slane %v1024, %v1052
    %v1054 = vlaneseq
    %v1055 = vshrl.u32 %v1054, 7
    %v1056 = vsub.s32 7, %v1055
    %v1057 = vrot.slane %v1024, %v1056
    %v1322 = vunpack.c.l.b16 %v768
    %v1323 = vunpack.c.h.b16 %v768
    %v1324 = vunpack.c.l.b16 %v769
    %v1325 = vunpack.c.h.b16 %v769
    %v1326 = vunpack.c.l.b16 %v770
    %v1327 = vunpack.c.h.b16 %v770
    %v1328 = vunpack.c.l.b16 %v771
    %v1329 = vunpack.c.h.b16 %v771
    %v1330 = vunpack.c.l.b16 %v772
    %v1331 = vunpack.c.h.b16 %v772
    %v1332 = vunpack.c.l.b16 %v773
    %v1333 = vunpack.c.h.b16 %v773
    %v1334 = vunpack.c.l.b16 %v774
    %v1335 = vunpack.c.h.b16 %v774
    %v1336 = vunpack.c.l.b16 %v775
    %v1337 = vunpack.c.h.b16 %v775
    %v1338 = vunpack.c.l.b16 %v776
    %v1339 = vunpack.c.h.b16 %v776
    %v1340 = vunpack.c.l.b16 %v777
    %v1341 = vunpack.c.h.b16 %v777
    %v1342 = vunpack.c.l.b16 %v778
    %v1343 = vunpack.c.h.b16 %v778
    %v1344 = vunpack.c.l.b16 %v779
    %v1345 = vunpack.c.h.b16 %v779
    %v1346 = vunpack.c.l.b16 %v780
    %v1347 = vunpack.c.h.b16 %v780
    %v1348 = vunpack.c.l.b16 %v781
    %v1349 = vunpack.c.h.b16 %v781
    %v1350 = vunpack.c.l.b16 %v782
    %v1351 = vunpack.c.h.b16 %v782
    %v1352 = vunpack.c.l.b16 %v783
    %v1353 = vunpack.c.h.b16 %v783
    %v1354 = vunpack.c.l.b16 %v784
    %v1355 = vunpack.c.h.b16 %v784
    %v1356 = vunpack.c.l.b16 %v785
    %v1357 = vunpack.c.h.b16 %v785
    %v1358 = vunpack.c.l.b16 %v786
    %v1359 = vunpack.c.h.b16 %v786
    %v1360 = vunpack.c.l.b16 %v787
    %v1361 = vunpack.c.h.b16 %v787
    %v1362 = vunpack.c.l.b16 %v788
    %v1363 = vunpack.c.h.b16 %v788
    %v1364 = vunpack.c.l.b16 %v789
    %v1365 = vunpack.c.h.b16 %v789
    %v1366 = vunpack.c.l.b16 %v790
    %v1367 = vunpack.c.h.b16 %v790
    %v1368 = vunpack.c.l.b16 %v791
    %v1369 = vunpack.c.h.b16 %v791
    %v1370 = vunpack.c.l.b16 %v792
    %v1371 = vunpack.c.h.b16 %v792
    %v1372 = vunpack.c.l.b16 %v793
    %v1373 = vunpack.c.h.b16 %v793
    %v1374 = vunpack.c.l.b16 %v794
    %v1375 = vunpack.c.h.b16 %v794
    %v1376 = vunpack.c.l.b16 %v795
    %v1377 = vunpack.c.h.b16 %v795
    %v1378 = vunpack.c.l.b16 %v796
    %v1379 = vunpack.c.h.b16 %v796
    %v1380 = vunpack.c.l.b16 %v797
    %v1381 = vunpack.c.h.b16 %v797
    %v1382 = vunpack.c.l.b16 %v798
    %v1383 = vunpack.c.h.b16 %v798
    %v1384 = vunpack.c.l.b16 %v799
    %v1385 = vunpack.c.h.b16 %v799
    %v1386 = vunpack.c.l.b16 %v800
    %v1387 = vunpack.c.h.b16 %v800
    %v1388 = vunpack.c.l.b16 %v801
    %v1389 = vunpack.c.h.b16 %v801
    %v1390 = vunpack.c.l.b16 %v802
    %v1391 = vunpack.c.h.b16 %v802
    %v1392 = vunpack.c.l.b16 %v803
    %v1393 = vunpack.c.h.b16 %v803
    %v1394 = vunpack.c.l.b16 %v804
    %v1395 = vunpack.c.h.b16 %v804
    %v1396 = vunpack.c.l.b16 %v805
    %v1397 = vunpack.c.h.b16 %v805
    %v1398 = vunpack.c.l.b16 %v806
    %v1399 = vunpack.c.h.b16 %v806
    %v1400 = vunpack.c.l.b16 %v807
    %v1401 = vunpack.c.h.b16 %v807
    %v1402 = vunpack.c.l.b16 %v808
    %v1403 = vunpack.c.h.b16 %v808
    %v1404 = vunpack.c.l.b16 %v809
    %v1405 = vunpack.c.h.b16 %v809
    %v1406 = vunpack.c.l.b16 %v810
    %v1407 = vunpack.c.h.b16 %v810
    %v1408 = vunpack.c.l.b16 %v811
    %v1409 = vunpack.c.h.b16 %v811
    %v1410 = vunpack.c.l.b16 %v812
    %v1411 = vunpack.c.h.b16 %v812
    %v1412 = vunpack.c.l.b16 %v813
    %v1413 = vunpack.c.h.b16 %v813
    %v1414 = vunpack.c.l.b16 %v814
    %v1415 = vunpack.c.h.b16 %v814
    %v1416 = vunpack.c.l.b16 %v815
    %v1417 = vunpack.c.h.b16 %v815
    %v1418 = vunpack.c.l.b16 %v816
    %v1419 = vunpack.c.h.b16 %v816
    %v1420 = vunpack.c.l.b16 %v817
    %v1421 = vunpack.c.h.b16 %v817
    %v1422 = vunpack.c.l.b16 %v818
    %v1423 = vunpack.c.h.b16 %v818
    %v1424 = vunpack.c.l.b16 %v819
    %v1425 = vunpack.c.h.b16 %v819
    %v1426 = vunpack.c.l.b16 %v820
    %v1427 = vunpack.c.h.b16 %v820
    %v1428 = vunpack.c.l.b16 %v821
    %v1429 = vunpack.c.h.b16 %v821
    %v1430 = vunpack.c.l.b16 %v822
    %v1431 = vunpack.c.h.b16 %v822
    %v1432 = vunpack.c.l.b16 %v823
    %v1433 = vunpack.c.h.b16 %v823
    %v1434 = vunpack.c.l.b16 %v824
    %v1435 = vunpack.c.h.b16 %v824
    %v1436 = vunpack.c.l.b16 %v825
    %v1437 = vunpack.c.h.b16 %v825
    %v1438 = vunpack.c.l.b16 %v826
    %v1439 = vunpack.c.h.b16 %v826
    %v1440 = vunpack.c.l.b16 %v827
    %v1441 = vunpack.c.h.b16 %v827
    %v1442 = vunpack.c.l.b16 %v828
    %v1443 = vunpack.c.h.b16 %v828
    %v1444 = vunpack.c.l.b16 %v829
    %v1445 = vunpack.c.h.b16 %v829
    %v1446 = vunpack.c.l.b16 %v830
    %v1447 = vunpack.c.h.b16 %v830
    %v1448 = vunpack.c.l.b16 %v831
    %v1449 = vunpack.c.h.b16 %v831
    %v1450 = vunpack.c.l.b16 %v832
    %v1451 = vunpack.c.h.b16 %v832
    %v1452 = vunpack.c.l.b16 %v833
    %v1453 = vunpack.c.h.b16 %v833
    %v1454 = vunpack.c.l.b16 %v834
    %v1455 = vunpack.c.h.b16 %v834
    %v1456 = vunpack.c.l.b16 %v835
    %v1457 = vunpack.c.h.b16 %v835
    %v1458 = vunpack.c.l.b16 %v836
    %v1459 = vunpack.c.h.b16 %v836
    %v1460 = vunpack.c.l.b16 %v837
    %v1461 = vunpack.c.h.b16 %v837
    %v1462 = vunpack.c.l.b16 %v838
    %v1463 = vunpack.c.h.b16 %v838
    %v1464 = vunpack.c.l.b16 %v839
    %v1465 = vunpack.c.h.b16 %v839
    %v1466 = vunpack.c.l.b16 %v840
    %v1467 = vunpack.c.h.b16 %v840
    %v1468 = vunpack.c.l.b16 %v841
    %v1469 = vunpack.c.h.b16 %v841
    %v1470 = vunpack.c.l.b16 %v842
    %v1471 = vunpack.c.h.b16 %v842
    %v1472 = vunpack.c.l.b16 %v843
    %v1473 = vunpack.c.h.b16 %v843
    %v1474 = vunpack.c.l.b16 %v844
    %v1475 = vunpack.c.h.b16 %v844
    %v1476 = vunpack.c.l.b16 %v845
    %v1477 = vunpack.c.h.b16 %v845
    %v1478 = vunpack.c.l.b16 %v846
    %v1479 = vunpack.c.h.b16 %v846
    %v1480 = vunpack.c.l.b16 %v847
    %v1481 = vunpack.c.h.b16 %v847
    %v1482 = vunpack.c.l.b16 %v848
    %v1483 = vunpack.c.h.b16 %v848
    %v1484 = vunpack.c.l.b16 %v849
    %v1485 = vunpack.c.h.b16 %v849
    %v1486 = vunpack.c.l.b16 %v850
    %v1487 = vunpack.c.h.b16 %v850
    %v1488 = vunpack.c.l.b16 %v851
    %v1489 = vunpack.c.h.b16 %v851
    %v1490 = vunpack.c.l.b16 %v852
    %v1491 = vunpack.c.h.b16 %v852
    %v1492 = vunpack.c.l.b16 %v853
    %v1493 = vunpack.c.h.b16 %v853
    %v1494 = vunpack.c.l.b16 %v854
    %v1495 = vunpack.c.h.b16 %v854
    %v1496 = vunpack.c.l.b16 %v855
    %v1497 = vunpack.c.h.b16 %v855
    %v1498 = vunpack.c.l.b16 %v856
    %v1499 = vunpack.c.h.b16 %v856
    %v1500 = vunpack.c.l.b16 %v857
    %v1501 = vunpack.c.h.b16 %v857
    %v1502 = vunpack.c.l.b16 %v858
    %v1503 = vunpack.c.h.b16 %v858
    %v1504 = vunpack.c.l.b16 %v859
    %v1505 = vunpack.c.h.b16 %v859
    %v1506 = vunpack.c.l.b16 %v860
    %v1507 = vunpack.c.h.b16 %v860
    %v1508 = vunpack.c.l.b16 %v861
    %v1509 = vunpack.c.h.b16 %v861
    %v1510 = vunpack.c.l.b16 %v862
    %v1511 = vunpack.c.h.b16 %v862
    %v1512 = vunpack.c.l.b16 %v863
    %v1513 = vunpack.c.h.b16 %v863
    %v1514 = vunpack.c.l.b16 %v864
    %v1515 = vunpack.c.h.b16 %v864
    %v1516 = vunpack.c.l.b16 %v865
    %v1517 = vunpack.c.h.b16 %v865
    %v1518 = vunpack.c.l.b16 %v866
    %v1519 = vunpack.c.h.b16 %v866
    %v1520 = vunpack.c.l.b16 %v867
    %v1521 = vunpack.c.h.b16 %v867
    %v1522 = vunpack.c.l.b16 %v868
    %v1523 = vunpack.c.h.b16 %v868
    %v1524 = vunpack.c.l.b16 %v869
    %v1525 = vunpack.c.h.b16 %v869
    %v1526 = vunpack.c.l.b16 %v870
    %v1527 = vunpack.c.h.b16 %v870
    %v1528 = vunpack.c.l.b16 %v871
    %v1529 = vunpack.c.h.b16 %v871
    %v1530 = vunpack.c.l.b16 %v872
    %v1531 = vunpack.c.h.b16 %v872
    %v1532 = vunpack.c.l.b16 %v873
    %v1533 = vunpack.c.h.b16 %v873
    %v1534 = vunpack.c.l.b16 %v874
    %v1535 = vunpack.c.h.b16 %v874
    %v1536 = vunpack.c.l.b16 %v875
    %v1537 = vunpack.c.h.b16 %v875
    %v1538 = vunpack.c.l.b16 %v876
    %v1539 = vunpack.c.h.b16 %v876
    %v1540 = vunpack.c.l.b16 %v877
    %v1541 = vunpack.c.h.b16 %v877
    %v1542 = vunpack.c.l.b16 %v878
    %v1543 = vunpack.c.h.b16 %v878
    %v1544 = vunpack.c.l.b16 %v879
    %v1545 = vunpack.c.h.b16 %v879
    %v1546 = vunpack.c.l.b16 %v880
    %v1547 = vunpack.c.h.b16 %v880
    %v1548 = vunpack.c.l.b16 %v881
    %v1549 = vunpack.c.h.b16 %v881
    %v1550 = vunpack.c.l.b16 %v882
    %v1551 = vunpack.c.h.b16 %v882
    %v1552 = vunpack.c.l.b16 %v883
    %v1553 = vunpack.c.h.b16 %v883
    %v1554 = vunpack.c.l.b16 %v884
    %v1555 = vunpack.c.h.b16 %v884
    %v1556 = vunpack.c.l.b16 %v885
    %v1557 = vunpack.c.h.b16 %v885
    %v1558 = vunpack.c.l.b16 %v886
    %v1559 = vunpack.c.h.b16 %v886
    %v1560 = vunpack.c.l.b16 %v887
    %v1561 = vunpack.c.h.b16 %v887
    %v1562 = vunpack.c.l.b16 %v888
    %v1563 = vunpack.c.h.b16 %v888
    %v1564 = vunpack.c.l.b16 %v889
    %v1565 = vunpack.c.h.b16 %v889
    %v1566 = vunpack.c.l.b16 %v890
    %v1567 = vunpack.c.h.b16 %v890
    %v1568 = vunpack.c.l.b16 %v891
    %v1569 = vunpack.c.h.b16 %v891
    %v1570 = vunpack.c.l.b16 %v892
    %v1571 = vunpack.c.h.b16 %v892
    %v1572 = vunpack.c.l.b16 %v893
    %v1573 = vunpack.c.h.b16 %v893
    %v1574 = vunpack.c.l.b16 %v894
    %v1575 = vunpack.c.h.b16 %v894
    %v1576 = vunpack.c.l.b16 %v895
    %v1577 = vunpack.c.h.b16 %v895
    %v1578 = vunpack.c.l.b16 %v896
    %v1579 = vunpack.c.h.b16 %v896
    %v1580 = vunpack.c.l.b16 %v897
    %v1581 = vunpack.c.h.b16 %v897
    %v1582 = vunpack.c.l.b16 %v898
    %v1583 = vunpack.c.h.b16 %v898
    %v1584 = vunpack.c.l.b16 %v899
    %v1585 = vunpack.c.h.b16 %v899
    %v1586 = vunpack.c.l.b16 %v900
    %v1587 = vunpack.c.h.b16 %v900
    %v1588 = vunpack.c.l.b16 %v901
    %v1589 = vunpack.c.h.b16 %v901
    %v1590 = vunpack.c.l.b16 %v902
    %v1591 = vunpack.c.h.b16 %v902
    %v1592 = vunpack.c.l.b16 %v903
    %v1593 = vunpack.c.h.b16 %v903
    %v1594 = vunpack.c.l.b16 %v904
    %v1595 = vunpack.c.h.b16 %v904
    %v1596 = vunpack.c.l.b16 %v905
    %v1597 = vunpack.c.h.b16 %v905
    %v1598 = vunpack.c.l.b16 %v906
    %v1599 = vunpack.c.h.b16 %v906
    %v1600 = vunpack.c.l.b16 %v907
    %v1601 = vunpack.c.h.b16 %v907
    %v1602 = vunpack.c.l.b16 %v908
    %v1603 = vunpack.c.h.b16 %v908
    %v1604 = vunpack.c.l.b16 %v909
    %v1605 = vunpack.c.h.b16 %v909
    %v1606 = vunpack.c.l.b16 %v910
    %v1607 = vunpack.c.h.b16 %v910
    %v1608 = vunpack.c.l.b16 %v911
    %v1609 = vunpack.c.h.b16 %v911
    %v1610 = vunpack.c.l.b16 %v912
    %v1611 = vunpack.c.h.b16 %v912
    %v1612 = vunpack.c.l.b16 %v913
    %v1613 = vunpack.c.h.b16 %v913
    %v1614 = vunpack.c.l.b16 %v914
    %v1615 = vunpack.c.h.b16 %v914
    %v1616 = vunpack.c.l.b16 %v915
    %v1617 = vunpack.c.h.b16 %v915
    %v1618 = vunpack.c.l.b16 %v916
    %v1619 = vunpack.c.h.b16 %v916
    %v1620 = vunpack.c.l.b16 %v917
    %v1621 = vunpack.c.h.b16 %v917
    %v1622 = vunpack.c.l.b16 %v918
    %v1623 = vunpack.c.h.b16 %v918
    %v1624 = vunpack.c.l.b16 %v919
    %v1625 = vunpack.c.h.b16 %v919
    %v1626 = vunpack.c.l.b16 %v920
    %v1627 = vunpack.c.h.b16 %v920
    %v1628 = vunpack.c.l.b16 %v921
    %v1629 = vunpack.c.h.b16 %v921
    %v1630 = vunpack.c.l.b16 %v922
    %v1631 = vunpack.c.h.b16 %v922
    %v1632 = vunpack.c.l.b16 %v923
    %v1633 = vunpack.c.h.b16 %v923
    %v1634 = vunpack.c.l.b16 %v924
    %v1635 = vunpack.c.h.b16 %v924
    %v1636 = vunpack.c.l.b16 %v925
    %v1637 = vunpack.c.h.b16 %v925
    %v1638 = vunpack.c.l.b16 %v926
    %v1639 = vunpack.c.h.b16 %v926
    %v1640 = vunpack.c.l.b16 %v927
    %v1641 = vunpack.c.h.b16 %v927
    %v1642 = vunpack.c.l.b16 %v928
    %v1643 = vunpack.c.h.b16 %v928
    %v1644 = vunpack.c.l.b16 %v929
    %v1645 = vunpack.c.h.b16 %v929
    %v1646 = vunpack.c.l.b16 %v930
    %v1647 = vunpack.c.h.b16 %v930
    %v1648 = vunpack.c.l.b16 %v931
    %v1649 = vunpack.c.h.b16 %v931
    %v1650 = vunpack.c.l.b16 %v932
    %v1651 = vunpack.c.h.b16 %v932
    %v1652 = vunpack.c.l.b16 %v933
    %v1653 = vunpack.c.h.b16 %v933
    %v1654 = vunpack.c.l.b16 %v934
    %v1655 = vunpack.c.h.b16 %v934
    %v1656 = vunpack.c.l.b16 %v935
    %v1657 = vunpack.c.h.b16 %v935
    %v1658 = vunpack.c.l.b16 %v936
    %v1659 = vunpack.c.h.b16 %v936
    %v1660 = vunpack.c.l.b16 %v937
    %v1661 = vunpack.c.h.b16 %v937
    %v1662 = vunpack.c.l.b16 %v938
    %v1663 = vunpack.c.h.b16 %v938
    %v1664 = vunpack.c.l.b16 %v939
    %v1665 = vunpack.c.h.b16 %v939
    %v1666 = vunpack.c.l.b16 %v940
    %v1667 = vunpack.c.h.b16 %v940
    %v1668 = vunpack.c.l.b16 %v941
    %v1669 = vunpack.c.h.b16 %v941
    %v1670 = vunpack.c.l.b16 %v942
    %v1671 = vunpack.c.h.b16 %v942
    %v1672 = vunpack.c.l.b16 %v943
    %v1673 = vunpack.c.h.b16 %v943
    %v1674 = vunpack.c.l.b16 %v944
    %v1675 = vunpack.c.h.b16 %v944
    %v1676 = vunpack.c.l.b16 %v945
    %v1677 = vunpack.c.h.b16 %v945
    %v1678 = vunpack.c.l.b16 %v946
    %v1679 = vunpack.c.h.b16 %v946
    %v1680 = vunpack.c.l.b16 %v947
    %v1681 = vunpack.c.h.b16 %v947
    %v1682 = vunpack.c.l.b16 %v948
    %v1683 = vunpack.c.h.b16 %v948
    %v1684 = vunpack.c.l.b16 %v949
    %v1685 = vunpack.c.h.b16 %v949
    %v1686 = vunpack.c.l.b16 %v950
    %v1687 = vunpack.c.h.b16 %v950
    %v1688 = vunpack.c.l.b16 %v951
    %v1689 = vunpack.c.h.b16 %v951
    %v1690 = vunpack.c.l.b16 %v952
    %v1691 = vunpack.c.h.b16 %v952
    %v1692 = vunpack.c.l.b16 %v953
    %v1693 = vunpack.c.h.b16 %v953
    %v1694 = vunpack.c.l.b16 %v954
    %v1695 = vunpack.c.h.b16 %v954
    %v1696 = vunpack.c.l.b16 %v955
    %v1697 = vunpack.c.h.b16 %v955
    %v1698 = vunpack.c.l.b16 %v956
    %v1699 = vunpack.c.h.b16 %v956
    %v1700 = vunpack.c.l.b16 %v957
    %v1701 = vunpack.c.h.b16 %v957
    %v1702 = vunpack.c.l.b16 %v958
    %v1703 = vunpack.c.h.b16 %v958
    %v1704 = vunpack.c.l.b16 %v959
    %v1705 = vunpack.c.h.b16 %v959
    %v1706 = vunpack.c.l.b16 %v960
    %v1707 = vunpack.c.h.b16 %v960
    %v1708 = vunpack.c.l.b16 %v961
    %v1709 = vunpack.c.h.b16 %v961
    %v1710 = vunpack.c.l.b16 %v962
    %v1711 = vunpack.c.h.b16 %v962
    %v1712 = vunpack.c.l.b16 %v963
    %v1713 = vunpack.c.h.b16 %v963
    %v1714 = vunpack.c.l.b16 %v964
    %v1715 = vunpack.c.h.b16 %v964
    %v1716 = vunpack.c.l.b16 %v965
    %v1717 = vunpack.c.h.b16 %v965
    %v1718 = vunpack.c.l.b16 %v966
    %v1719 = vunpack.c.h.b16 %v966
    %v1720 = vunpack.c.l.b16 %v967
    %v1721 = vunpack.c.h.b16 %v967
    %v1722 = vunpack.c.l.b16 %v968
    %v1723 = vunpack.c.h.b16 %v968
    %v1724 = vunpack.c.l.b16 %v969
    %v1725 = vunpack.c.h.b16 %v969
    %v1726 = vunpack.c.l.b16 %v970
    %v1727 = vunpack.c.h.b16 %v970
    %v1728 = vunpack.c.l.b16 %v971
    %v1729 = vunpack.c.h.b16 %v971
    %v1730 = vunpack.c.l.b16 %v972
    %v1731 = vunpack.c.h.b16 %v972
    %v1732 = vunpack.c.l.b16 %v973
    %v1733 = vunpack.c.h.b16 %v973
    %v1734 = vunpack.c.l.b16 %v974
    %v1735 = vunpack.c.h.b16 %v974
    %v1736 = vunpack.c.l.b16 %v975
    %v1737 = vunpack.c.h.b16 %v975
    %v1738 = vunpack.c.l.b16 %v976
    %v1739 = vunpack.c.h.b16 %v976
    %v1740 = vunpack.c.l.b16 %v977
    %v1741 = vunpack.c.h.b16 %v977
    %v1742 = vunpack.c.l.b16 %v978
    %v1743 = vunpack.c.h.b16 %v978
    %v1744 = vunpack.c.l.b16 %v979
    %v1745 = vunpack.c.h.b16 %v979
    %v1746 = vunpack.c.l.b16 %v980
    %v1747 = vunpack.c.h.b16 %v980
    %v1748 = vunpack.c.l.b16 %v981
    %v1749 = vunpack.c.h.b16 %v981
    %v1750 = vunpack.c.l.b16 %v982
    %v1751 = vunpack.c.h.b16 %v982
    %v1752 = vunpack.c.l.b16 %v983
    %v1753 = vunpack.c.h.b16 %v983
    %v1754 = vunpack.c.l.b16 %v984
    %v1755 = vunpack.c.h.b16 %v984
    %v1756 = vunpack.c.l.b16 %v985
    %v1757 = vunpack.c.h.b16 %v985
    %v1758 = vunpack.c.l.b16 %v986
    %v1759 = vunpack.c.h.b16 %v986
    %v1760 = vunpack.c.l.b16 %v987
    %v1761 = vunpack.c.h.b16 %v987
    %v1762 = vunpack.c.l.b16 %v988
    %v1763 = vunpack.c.h.b16 %v988
    %v1764 = vunpack.c.l.b16 %v989
    %v1765 = vunpack.c.h.b16 %v989
    %v1766 = vunpack.c.l.b16 %v990
    %v1767 = vunpack.c.h.b16 %v990
    %v1768 = vunpack.c.l.b16 %v991
    %v1769 = vunpack.c.h.b16 %v991
    %v1770 = vunpack.c.l.b16 %v992
    %v1771 = vunpack.c.h.b16 %v992
    %v1772 = vunpack.c.l.b16 %v993
    %v1773 = vunpack.c.h.b16 %v993
    %v1774 = vunpack.c.l.b16 %v994
    %v1775 = vunpack.c.h.b16 %v994
    %v1776 = vunpack.c.l.b16 %v995
    %v1777 = vunpack.c.h.b16 %v995
    %v1778 = vunpack.c.l.b16 %v996
    %v1779 = vunpack.c.h.b16 %v996
    %v1780 = vunpack.c.l.b16 %v997
    %v1781 = vunpack.c.h.b16 %v997
    %v1782 = vunpack.c.l.b16 %v998
    %v1783 = vunpack.c.h.b16 %v998
    %v1784 = vunpack.c.l.b16 %v999
    %v1785 = vunpack.c.h.b16 %v999
    %v1786 = vunpack.c.l.b16 %v1000
    %v1787 = vunpack.c.h.b16 %v1000
    %v1788 = vunpack.c.l.b16 %v1001
    %v1789 = vunpack.c.h.b16 %v1001
    %v1790 = vunpack.c.l.b16 %v1002
    %v1791 = vunpack.c.h.b16 %v1002
    %v1792 = vunpack.c.l.b16 %v1003
    %v1793 = vunpack.c.h.b16 %v1003
    %v1794 = vunpack.c.l.b16 %v1004
    %v1795 = vunpack.c.h.b16 %v1004
    %v1796 = vunpack.c.l.b16 %v1005
    %v1797 = vunpack.c.h.b16 %v1005
    %v1798 = vunpack.c.l.b16 %v1006
    %v1799 = vunpack.c.h.b16 %v1006
    %v1800 = vunpack.c.l.b16 %v1007
    %v1801 = vunpack.c.h.b16 %v1007
    %v1802 = vunpack.c.l.b16 %v1008
    %v1803 = vunpack.c.h.b16 %v1008
    %v1804 = vunpack.c.l.b16 %v1009
    %v1805 = vunpack.c.h.b16 %v1009
    %v1806 = vunpack.c.l.b16 %v1010
    %v1807 = vunpack.c.h.b16 %v1010
    %v1808 = vunpack.c.l.b16 %v1011
    %v1809 = vunpack.c.h.b16 %v1011
    %v1810 = vunpack.c.l.b16 %v1012
    %v1811 = vunpack.c.h.b16 %v1012
    %v1812 = vunpack.c.l.b16 %v1013
    %v1813 = vunpack.c.h.b16 %v1013
    %v1814 = vunpack.c.l.b16 %v1014
    %v1815 = vunpack.c.h.b16 %v1014
    %v1816 = vunpack.c.l.b16 %v1015
    %v1817 = vunpack.c.h.b16 %v1015
    %v1818 = vunpack.c.l.b16 %v1016
    %v1819 = vunpack.c.h.b16 %v1016
    %v1820 = vunpack.c.l.b16 %v1017
    %v1821 = vunpack.c.h.b16 %v1017
    %v1822 = vunpack.c.l.b16 %v1018
    %v1823 = vunpack.c.h.b16 %v1018
    %v1824 = vunpack.c.l.b16 %v1019
    %v1825 = vunpack.c.h.b16 %v1019
    %v1826 = vunpack.c.l.b16 %v1020
    %v1827 = vunpack.c.h.b16 %v1020
    %v1828 = vunpack.c.l.b16 %v1021
    %v1829 = vunpack.c.h.b16 %v1021
    %v1830 = vunpack.c.l.b16 %v1022
    %v1831 = vunpack.c.h.b16 %v1022
    %v1832 = vunpack.c.l.b16 %v1023
    %v1833 = vunpack.c.h.b16 %v1023
    %v1834 = vpack.c.b16 %v1330, %v1322
    %v1835 = vpack.c.b16 %v1331, %v1323
    %v1836 = vpack.c.b16 %v1332, %v1324
    %v1837 = vpack.c.b16 %v1333, %v1325
    %v1838 = vpack.c.b16 %v1334, %v1326
    %v1839 = vpack.c.b16 %v1335, %v1327
    %v1840 = vpack.c.b16 %v1336, %v1328
    %v1841 = vpack.c.b16 %v1337, %v1329
    %v1842 = vpack.c.b16 %v1346, %v1338
    %v1843 = vpack.c.b16 %v1347, %v1339
    %v1844 = vpack.c.b16 %v1348, %v1340
    %v1845 = vpack.c.b16 %v1349, %v1341
    %v1846 = vpack.c.b16 %v1350, %v1342
    %v1847 = vpack.c.b16 %v1351, %v1343
    %v1848 = vpack.c.b16 %v1352, %v1344
    %v1849 = vpack.c.b16 %v1353, %v1345
    %v1850 = vpack.c.b16 %v1362, %v1354
    %v1851 = vpack.c.b16 %v1363, %v1355
    %v1852 = vpack.c.b16 %v1364, %v1356
    %v1853 = vpack.c.b16 %v1365, %v1357
    %v1854 = vpack.c.b16 %v1366, %v1358
    %v1855 = vpack.c.b16 %v1367, %v1359
    %v1856 = vpack.c.b16 %v1368, %v1360
    %v1857 = vpack.c.b16 %v1369, %v1361
    %v1858 = vpack.c.b16 %v1378, %v1370
    %v1859 = vpack.c.b16 %v1379, %v1371
    %v1860 = vpack.c.b16 %v1380, %v1372
    %v1861 = vpack.c.b16 %v1381, %v1373
    %v1862 = vpack.c.b16 %v1382, %v1374
    %v1863 = vpack.c.b16 %v1383, %v1375
    %v1864 = vpack.c.b16 %v1384, %v1376
    %v1865 = vpack.c.b16 %v1385, %v1377
    %v1866 = vpack.c.b16 %v1394, %v1386
    %v1867 = vpack.c.b16 %v1395, %v1387
    %v1868 = vpack.c.b16 %v1396, %v1388
    %v1869 = vpack.c.b16 %v1397, %v1389
    %v1870 = vpack.c.b16 %v1398, %v1390
    %v1871 = vpack.c.b16 %v1399, %v1391
    %v1872 = vpack.c.b16 %v1400, %v1392
    %v1873 = vpack.c.b16 %v1401, %v1393
    %v1874 = vpack.c.b16 %v1410, %v1402
    %v1875 = vpack.c.b16 %v1411, %v1403
    %v1876 = vpack.c.b16 %v1412, %v1404
    %v1877 = vpack.c.b16 %v1413, %v1405
    %v1878 = vpack.c.b16 %v1414, %v1406
    %v1879 = vpack.c.b16 %v1415, %v1407
    %v1880 = vpack.c.b16 %v1416, %v1408
    %v1881 = vpack.c.b16 %v1417, %v1409
    %v1882 = vpack.c.b16 %v1426, %v1418
    %v1883 = vpack.c.b16 %v1427, %v1419
    %v1884 = vpack.c.b16 %v1428, %v1420
    %v1885 = vpack.c.b16 %v1429, %v1421
    %v1886 = vpack.c.b16 %v1430, %v1422
    %v1887 = vpack.c.b16 %v1431, %v1423
    %v1888 = vpack.c.b16 %v1432, %v1424
    %v1889 = vpack.c.b16 %v1433, %v1425
    %v1890 = vpack.c.b16 %v1442, %v1434
    %v1891 = vpack.c.b16 %v1443, %v1435
    %v1892 = vpack.c.b16 %v1444, %v1436
    %v1893 = vpack.c.b16 %v1445, %v1437
    %v1894 = vpack.c.b16 %v1446, %v1438
    %v1895 = vpack.c.b16 %v1447, %v1439
    %v1896 = vpack.c.b16 %v1448, %v1440
    %v1897 = vpack.c.b16 %v1449, %v1441
    %v1898 = vpack.c.b16 %v1458, %v1450
    %v1899 = vpack.c.b16 %v1459, %v1451
    %v1900 = vpack.c.b16 %v1460, %v1452
    %v1901 = vpack.c.b16 %v1461, %v1453
    %v1902 = vpack.c.b16 %v1462, %v1454
    %v1903 = vpack.c.b16 %v1463, %v1455
    %v1904 = vpack.c.b16 %v1464, %v1456
    %v1905 = vpack.c.b16 %v1465, %v1457
    %v1906 = vpack.c.b16 %v1474, %v1466
    %v1907 = vpack.c.b16 %v1475, %v1467
    %v1908 = vpack.c.b16 %v1476, %v1468
    %v1909 = vpack.c.b16 %v1477, %v1469
    %v1910 = vpack.c.b16 %v1478, %v1470
    %v1911 = vpack.c.b16 %v1479, %v1471
    %v1912 = vpack.c.b16 %v1480, %v1472
    %v1913 = vpack.c.b16 %v1481, %v1473
    %v1914 = vpack.c.b16 %v1490, %v1482
    %v1915 = vpack.c.b16 %v1491, %v1483
    %v1916 = vpack.c.b16 %v1492, %v1484
    %v1917 = vpack.c.b16 %v1493, %v1485
    %v1918 = vpack.c.b16 %v1494, %v1486
    %v1919 = vpack.c.b16 %v1495, %v1487
    %v1920 = vpack.c.b16 %v1496, %v1488
    %v1921 = vpack.c.b16 %v1497, %v1489
    %v1922 = vpack.c.b16 %v1506, %v1498
    %v1923 = vpack.c.b16 %v1507, %v1499
    %v1924 = vpack.c.b16 %v1508, %v1500
    %v1925 = vpack.c.b16 %v1509, %v1501
    %v1926 = vpack.c.b16 %v1510, %v1502
    %v1927 = vpack.c.b16 %v1511, %v1503
    %v1928 = vpack.c.b16 %v1512, %v1504
    %v1929 = vpack.c.b16 %v1513, %v1505
    %v1930 = vpack.c.b16 %v1522, %v1514
    %v1931 = vpack.c.b16 %v1523, %v1515
    %v1932 = vpack.c.b16 %v1524, %v1516
    %v1933 = vpack.c.b16 %v1525, %v1517
    %v1934 = vpack.c.b16 %v1526, %v1518
    %v1935 = vpack.c.b16 %v1527, %v1519
    %v1936 = vpack.c.b16 %v1528, %v1520
    %v1937 = vpack.c.b16 %v1529, %v1521
    %v1938 = vpack.c.b16 %v1538, %v1530
    %v1939 = vpack.c.b16 %v1539, %v1531
    %v1940 = vpack.c.b16 %v1540, %v1532
    %v1941 = vpack.c.b16 %v1541, %v1533
    %v1942 = vpack.c.b16 %v1542, %v1534
    %v1943 = vpack.c.b16 %v1543, %v1535
    %v1944 = vpack.c.b16 %v1544, %v1536
    %v1945 = vpack.c.b16 %v1545, %v1537
    %v1946 = vpack.c.b16 %v1554, %v1546
    %v1947 = vpack.c.b16 %v1555, %v1547
    %v1948 = vpack.c.b16 %v1556, %v1548
    %v1949 = vpack.c.b16 %v1557, %v1549
    %v1950 = vpack.c.b16 %v1558, %v1550
    %v1951 = vpack.c.b16 %v1559, %v1551
    %v1952 = vpack.c.b16 %v1560, %v1552
    %v1953 = vpack.c.b16 %v1561, %v1553
    %v1954 = vpack.c.b16 %v1570, %v1562
    %v1955 = vpack.c.b16 %v1571, %v1563
    %v1956 = vpack.c.b16 %v1572, %v1564
    %v1957 = vpack.c.b16 %v1573, %v1565
    %v1958 = vpack.c.b16 %v1574, %v1566
    %v1959 = vpack.c.b16 %v1575, %v1567
    %v1960 = vpack.c.b16 %v1576, %v1568
    %v1961 = vpack.c.b16 %v1577, %v1569
    %v1962 = vpack.c.b16 %v1586, %v1578
    %v1963 = vpack.c.b16 %v1587, %v1579
    %v1964 = vpack.c.b16 %v1588, %v1580
    %v1965 = vpack.c.b16 %v1589, %v1581
    %v1966 = vpack.c.b16 %v1590, %v1582
    %v1967 = vpack.c.b16 %v1591, %v1583
    %v1968 = vpack.c.b16 %v1592, %v1584
    %v1969 = vpack.c.b16 %v1593, %v1585
    %v1970 = vpack.c.b16 %v1602, %v1594
    %v1971 = vpack.c.b16 %v1603, %v1595
    %v1972 = vpack.c.b16 %v1604, %v1596
    %v1973 = vpack.c.b16 %v1605, %v1597
    %v1974 = vpack.c.b16 %v1606, %v1598
    %v1975 = vpack.c.b16 %v1607, %v1599
    %v1976 = vpack.c.b16 %v1608, %v1600
    %v1977 = vpack.c.b16 %v1609, %v1601
    %v1978 = vpack.c.b16 %v1618, %v1610
    %v1979 = vpack.c.b16 %v1619, %v1611
    %v1980 = vpack.c.b16 %v1620, %v1612
    %v1981 = vpack.c.b16 %v1621, %v1613
    %v1982 = vpack.c.b16 %v1622, %v1614
    %v1983 = vpack.c.b16 %v1623, %v1615
    %v1984 = vpack.c.b16 %v1624, %v1616
    %v1985 = vpack.c.b16 %v1625, %v1617
    %v1986 = vpack.c.b16 %v1634, %v1626
    %v1987 = vpack.c.b16 %v1635, %v1627
    %v1988 = vpack.c.b16 %v1636, %v1628
    %v1989 = vpack.c.b16 %v1637, %v1629
    %v1990 = vpack.c.b16 %v1638, %v1630
    %v1991 = vpack.c.b16 %v1639, %v1631
    %v1992 = vpack.c.b16 %v1640, %v1632
    %v1993 = vpack.c.b16 %v1641, %v1633
    %v1994 = vpack.c.b16 %v1650, %v1642
    %v1995 = vpack.c.b16 %v1651, %v1643
    %v1996 = vpack.c.b16 %v1652, %v1644
    %v1997 = vpack.c.b16 %v1653, %v1645
    %v1998 = vpack.c.b16 %v1654, %v1646
    %v1999 = vpack.c.b16 %v1655, %v1647
    %v2000 = vpack.c.b16 %v1656, %v1648
    %v2001 = vpack.c.b16 %v1657, %v1649
    %v2002 = vpack.c.b16 %v1666, %v1658
    %v2003 = vpack.c.b16 %v1667, %v1659
    %v2004 = vpack.c.b16 %v1668, %v1660
    %v2005 = vpack.c.b16 %v1669, %v1661
    %v2006 = vpack.c.b16 %v1670, %v1662
    %v2007 = vpack.c.b16 %v1671, %v1663
    %v2008 = vpack.c.b16 %v1672, %v1664
    %v2009 = vpack.c.b16 %v1673, %v1665
    %v2010 = vpack.c.b16 %v1682, %v1674
    %v2011 = vpack.c.b16 %v1683, %v1675
    %v2012 = vpack.c.b16 %v1684, %v1676
    %v2013 = vpack.c.b16 %v1685, %v1677
    %v2014 = vpack.c.b16 %v1686, %v1678
    %v2015 = vpack.c.b16 %v1687, %v1679
    %v2016 = vpack.c.b16 %v1688, %v1680
    %v2017 = vpack.c.b16 %v1689, %v1681
    %v2018 = vpack.c.b16 %v1698, %v1690
    %v2019 = vpack.c.b16 %v1699, %v1691
    %v2020 = vpack.c.b16 %v1700, %v1692
    %v2021 = vpack.c.b16 %v1701, %v1693
    %v2022 = vpack.c.b16 %v1702, %v1694
    %v2023 = vpack.c.b16 %v1703, %v1695
    %v2024 = vpack.c.b16 %v1704, %v1696
    %v2025 = vpack.c.b16 %v1705, %v1697
    %v2026 = vpack.c.b16 %v1714, %v1706
    %v2027 = vpack.c.b16 %v1715, %v1707
    %v2028 = vpack.c.b16 %v1716, %v1708
    %v2029 = vpack.c.b16 %v1717, %v1709
    %v2030 = vpack.c.b16 %v1718, %v1710
    %v2031 = vpack.c.b16 %v1719, %v1711
    %v2032 = vpack.c.b16 %v1720, %v1712
    %v2033 = vpack.c.b16 %v1721, %v1713
    %v2034 = vpack.c.b16 %v1730, %v1722
    %v2035 = vpack.c.b16 %v1731, %v1723
    %v2036 = vpack.c.b16 %v1732, %v1724
    %v2037 = vpack.c.b16 %v1733, %v1725
    %v2038 = vpack.c.b16 %v1734, %v1726
    %v2039 = vpack.c.b16 %v1735, %v1727
    %v2040 = vpack.c.b16 %v1736, %v1728
    %v2041 = vpack.c.b16 %v1737, %v1729
    %v2042 = vpack.c.b16 %v1746, %v1738
    %v2043 = vpack.c.b16 %v1747, %v1739
    %v2044 = vpack.c.b16 %v1748, %v1740
    %v2045 = vpack.c.b16 %v1749, %v1741
    %v2046 = vpack.c.b16 %v1750, %v1742
    %v2047 = vpack.c.b16 %v1751, %v1743
    %v2048 = vpack.c.b16 %v1752, %v1744
    %v2049 = vpack.c.b16 %v1753, %v1745
    %v2050 = vpack.c.b16 %v1762, %v1754
    %v2051 = vpack.c.b16 %v1763, %v1755
    %v2052 = vpack.c.b16 %v1764, %v1756
    %v2053 = vpack.c.b16 %v1765, %v1757
    %v2054 = vpack.c.b16 %v1766, %v1758
    %v2055 = vpack.c.b16 %v1767, %v1759
    %v2056 = vpack.c.b16 %v1768, %v1760
    %v2057 = vpack.c.b16 %v1769, %v1761
    %v2058 = vpack.c.b16 %v1778, %v1770
    %v2059 = vpack.c.b16 %v1779, %v1771
    %v2060 = vpack.c.b16 %v1780, %v1772
    %v2061 = vpack.c.b16 %v1781, %v1773
    %v2062 = vpack.c.b16 %v1782, %v1774
    %v2063 = vpack.c.b16 %v1783, %v1775
    %v2064 = vpack.c.b16 %v1784, %v1776
    %v2065 = vpack.c.b16 %v1785, %v1777
    %v2066 = vpack.c.b16 %v1794, %v1786
    %v2067 = vpack.c.b16 %v1795, %v1787
    %v2068 = vpack.c.b16 %v1796, %v1788
    %v2069 = vpack.c.b16 %v1797, %v1789
    %v2070 = vpack.c.b16 %v1798, %v1790
    %v2071 = vpack.c.b16 %v1799, %v1791
    %v2072 = vpack.c.b16 %v1800, %v1792
    %v2073 = vpack.c.b16 %v1801, %v1793
    %v2074 = vpack.c.b16 %v1810, %v1802
    %v2075 = vpack.c.b16 %v1811, %v1803
    %v2076 = vpack.c.b16 %v1812, %v1804
    %v2077 = vpack.c.b16 %v1813, %v1805
    %v2078 = vpack.c.b16 %v1814, %v1806
    %v2079 = vpack.c.b16 %v1815, %v1807
    %v2080 = vpack.c.b16 %v1816, %v1808
    %v2081 = vpack.c.b16 %v1817, %v1809
    %v2082 = vpack.c.b16 %v1826, %v1818
    %v2083 = vpack.c.b16 %v1827, %v1819
    %v2084 = vpack.c.b16 %v1828, %v1820
    %v2085 = vpack.c.b16 %v1829, %v1821
    %v2086 = vpack.c.b16 %v1830, %v1822
    %v2087 = vpack.c.b16 %v1831, %v1823
    %v2088 = vpack.c.b16 %v1832, %v1824
    %v2089 = vpack.c.b16 %v1833, %v1825
    %2346 = vmatprep.subr.bf16.mxu0 %v1891
    %2347 = vmatpush1.bf16.msra.mxu0 %v1890
    %2348 = vmatprep.subr.bf16.mxu0 %v1883
    %2349 = vmatpush1.bf16.msra.mxu0 %v1882
    %2350 = vmatprep.subr.bf16.mxu0 %v1875
    %2351 = vmatpush1.bf16.msra.mxu0 %v1874
    %2352 = vmatprep.subr.bf16.mxu0 %v1867
    %2353 = vmatpush1.bf16.msra.mxu0 %v1866
    %2354 = vmatprep.subr.bf16.mxu0 %v1859
    %2355 = vmatpush1.bf16.msra.mxu0 %v1858
    %2356 = vmatprep.subr.bf16.mxu0 %v1851
    %2357 = vmatpush1.bf16.msra.mxu0 %v1850
    %2358 = vmatprep.subr.bf16.mxu0 %v1843
    %2359 = vmatpush1.bf16.msra.mxu0 %v1842
    %2360 = vmatprep.subr.bf16.mxu0 %v1835
    %2361 = vmatpush1.bf16.msra.mxu0 %v1834
    %2362 = vmatprep.subr.bf16.mxu0 %v1955
    %2363 = vmatpush2.bf16.msra.mxu0 %v1954
    %2364 = vmatprep.subr.bf16.mxu0 %v1947
    %2365 = vmatpush2.bf16.msra.mxu0 %v1946
    %2366 = vmatprep.subr.bf16.mxu0 %v1939
    %2367 = vmatpush2.bf16.msra.mxu0 %v1938
    %2368 = vmatprep.subr.bf16.mxu0 %v1931
    %2369 = vmatpush2.bf16.msra.mxu0 %v1930
    %2370 = vmatprep.subr.bf16.mxu0 %v1923
    %2371 = vmatpush2.bf16.msra.mxu0 %v1922
    %2372 = vmatprep.subr.bf16.mxu0 %v1915
    %2373 = vmatpush2.bf16.msra.mxu0 %v1914
    %2374 = vmatprep.subr.bf16.mxu0 %v1907
    %2375 = vmatpush2.bf16.msra.mxu0 %v1906
    %2376 = vmatprep.subr.bf16.mxu0 %v1899
    %2377 = vmatpush2.bf16.msra.mxu0 %v1898
    %2378 = vmatprep.mubr.bf16.mxu0 %v765
    %2379 = vmatmul.mubr.bf16.gmra.mxu0 %v764
    %v2380 = vpop.f32.mrf.mxu0
    %v2381 = vadd.f32 %v1029, %v2380
    %v2382 = vpop.f32.mrf.mxu0
    %v2383 = vadd.f32 %v1033, %v2382
    %v2384 = vpop.f32.mrf.mxu0
    %v2385 = vadd.f32 %v1029, %v2384
    %v2386 = vpop.f32.mrf.mxu0
    %v2387 = vadd.f32 %v1033, %v2386
    %2388 = vdwg.mxu0
    %2389 = vmatprep.subr.bf16.mxu0 %v2019
    %2390 = vmatpush1.bf16.msra.mxu0 %v2018
    %2391 = vmatprep.subr.bf16.mxu0 %v2011
    %2392 = vmatpush1.bf16.msra.mxu0 %v2010
    %2393 = vmatprep.subr.bf16.mxu0 %v2003
    %2394 = vmatpush1.bf16.msra.mxu0 %v2002
    %2395 = vmatprep.subr.bf16.mxu0 %v1995
    %2396 = vmatpush1.bf16.msra.mxu0 %v1994
    %2397 = vmatprep.subr.bf16.mxu0 %v1987
    %2398 = vmatpush1.bf16.msra.mxu0 %v1986
    %2399 = vmatprep.subr.bf16.mxu0 %v1979
    %2400 = vmatpush1.bf16.msra.mxu0 %v1978
    %2401 = vmatprep.subr.bf16.mxu0 %v1971
    %2402 = vmatpush1.bf16.msra.mxu0 %v1970
    %2403 = vmatprep.subr.bf16.mxu0 %v1963
    %2404 = vmatpush1.bf16.msra.mxu0 %v1962
    %2405 = vmatprep.subr.bf16.mxu0 %v2083
    %2406 = vmatpush2.bf16.msra.mxu0 %v2082
    %2407 = vmatprep.subr.bf16.mxu0 %v2075
    %2408 = vmatpush2.bf16.msra.mxu0 %v2074
    %2409 = vmatprep.subr.bf16.mxu0 %v2067
    %2410 = vmatpush2.bf16.msra.mxu0 %v2066
    %2411 = vmatprep.subr.bf16.mxu0 %v2059
    %2412 = vmatpush2.bf16.msra.mxu0 %v2058
    %2413 = vmatprep.subr.bf16.mxu0 %v2051
    %2414 = vmatpush2.bf16.msra.mxu0 %v2050
    %2415 = vmatprep.subr.bf16.mxu0 %v2043
    %2416 = vmatpush2.bf16.msra.mxu0 %v2042
    %2417 = vmatprep.subr.bf16.mxu0 %v2035
    %2418 = vmatpush2.bf16.msra.mxu0 %v2034
    %2419 = vmatprep.subr.bf16.mxu0 %v2027
    %2420 = vmatpush2.bf16.msra.mxu0 %v2026
    %2421 = vmatprep.mubr.bf16.mxu0 %v767
    %2422 = vmatmul.mubr.bf16.gmra.mxu0 %v766
    %v2423 = vpop.f32.mrf.mxu0
    %v2424 = vadd.f32 %v2381, %v2423
    %v2425 = vpop.f32.mrf.mxu0
    %v2426 = vadd.f32 %v2383, %v2425
    %v2427 = vpop.f32.mrf.mxu0
    %v2428 = vadd.f32 %v2385, %v2427
    %v2429 = vpop.f32.mrf.mxu0
    %v2430 = vadd.f32 %v2387, %v2429
    %2431 = vdwg.mxu0
    %2432 = vmatprep.subr.bf16.mxu0 %v1893
    %2433 = vmatpush1.bf16.msra.mxu0 %v1892
    %2434 = vmatprep.subr.bf16.mxu0 %v1885
    %2435 = vmatpush1.bf16.msra.mxu0 %v1884
    %2436 = vmatprep.subr.bf16.mxu0 %v1877
    %2437 = vmatpush1.bf16.msra.mxu0 %v1876
    %2438 = vmatprep.subr.bf16.mxu0 %v1869
    %2439 = vmatpush1.bf16.msra.mxu0 %v1868
    %2440 = vmatprep.subr.bf16.mxu0 %v1861
    %2441 = vmatpush1.bf16.msra.mxu0 %v1860
    %2442 = vmatprep.subr.bf16.mxu0 %v1853
    %2443 = vmatpush1.bf16.msra.mxu0 %v1852
    %2444 = vmatprep.subr.bf16.mxu0 %v1845
    %2445 = vmatpush1.bf16.msra.mxu0 %v1844
    %2446 = vmatprep.subr.bf16.mxu0 %v1837
    %2447 = vmatpush1.bf16.msra.mxu0 %v1836
    %2448 = vmatprep.subr.bf16.mxu0 %v1957
    %2449 = vmatpush2.bf16.msra.mxu0 %v1956
    %2450 = vmatprep.subr.bf16.mxu0 %v1949
    %2451 = vmatpush2.bf16.msra.mxu0 %v1948
    %2452 = vmatprep.subr.bf16.mxu0 %v1941
    %2453 = vmatpush2.bf16.msra.mxu0 %v1940
    %2454 = vmatprep.subr.bf16.mxu0 %v1933
    %2455 = vmatpush2.bf16.msra.mxu0 %v1932
    %2456 = vmatprep.subr.bf16.mxu0 %v1925
    %2457 = vmatpush2.bf16.msra.mxu0 %v1924
    %2458 = vmatprep.subr.bf16.mxu0 %v1917
    %2459 = vmatpush2.bf16.msra.mxu0 %v1916
    %2460 = vmatprep.subr.bf16.mxu0 %v1909
    %2461 = vmatpush2.bf16.msra.mxu0 %v1908
    %2462 = vmatprep.subr.bf16.mxu0 %v1901
    %2463 = vmatpush2.bf16.msra.mxu0 %v1900
    %2464 = vmatprep.mubr.bf16.mxu0 %v765
    %2465 = vmatmul.mubr.bf16.gmra.mxu0 %v764
    %v2466 = vpop.f32.mrf.mxu0
    %v2467 = vadd.f32 %v1037, %v2466
    %v2468 = vpop.f32.mrf.mxu0
    %v2469 = vadd.f32 %v1041, %v2468
    %v2470 = vpop.f32.mrf.mxu0
    %v2471 = vadd.f32 %v1037, %v2470
    %v2472 = vpop.f32.mrf.mxu0
    %v2473 = vadd.f32 %v1041, %v2472
    %2474 = vdwg.mxu0
    %2475 = vmatprep.subr.bf16.mxu0 %v2021
    %2476 = vmatpush1.bf16.msra.mxu0 %v2020
    %2477 = vmatprep.subr.bf16.mxu0 %v2013
    %2478 = vmatpush1.bf16.msra.mxu0 %v2012
    %2479 = vmatprep.subr.bf16.mxu0 %v2005
    %2480 = vmatpush1.bf16.msra.mxu0 %v2004
    %2481 = vmatprep.subr.bf16.mxu0 %v1997
    %2482 = vmatpush1.bf16.msra.mxu0 %v1996
    %2483 = vmatprep.subr.bf16.mxu0 %v1989
    %2484 = vmatpush1.bf16.msra.mxu0 %v1988
    %2485 = vmatprep.subr.bf16.mxu0 %v1981
    %2486 = vmatpush1.bf16.msra.mxu0 %v1980
    %2487 = vmatprep.subr.bf16.mxu0 %v1973
    %2488 = vmatpush1.bf16.msra.mxu0 %v1972
    %2489 = vmatprep.subr.bf16.mxu0 %v1965
    %2490 = vmatpush1.bf16.msra.mxu0 %v1964
    %2491 = vmatprep.subr.bf16.mxu0 %v2085
    %2492 = vmatpush2.bf16.msra.mxu0 %v2084
    %2493 = vmatprep.subr.bf16.mxu0 %v2077
    %2494 = vmatpush2.bf16.msra.mxu0 %v2076
    %2495 = vmatprep.subr.bf16.mxu0 %v2069
    %2496 = vmatpush2.bf16.msra.mxu0 %v2068
    %2497 = vmatprep.subr.bf16.mxu0 %v2061
    %2498 = vmatpush2.bf16.msra.mxu0 %v2060
    %2499 = vmatprep.subr.bf16.mxu0 %v2053
    %2500 = vmatpush2.bf16.msra.mxu0 %v2052
    %2501 = vmatprep.subr.bf16.mxu0 %v2045
    %2502 = vmatpush2.bf16.msra.mxu0 %v2044
    %2503 = vmatprep.subr.bf16.mxu0 %v2037
    %2504 = vmatpush2.bf16.msra.mxu0 %v2036
    %2505 = vmatprep.subr.bf16.mxu0 %v2029
    %2506 = vmatpush2.bf16.msra.mxu0 %v2028
    %2507 = vmatprep.mubr.bf16.mxu0 %v767
    %2508 = vmatmul.mubr.bf16.gmra.mxu0 %v766
    %v2509 = vpop.f32.mrf.mxu0
    %v2510 = vadd.f32 %v2467, %v2509
    %v2511 = vpop.f32.mrf.mxu0
    %v2512 = vadd.f32 %v2469, %v2511
    %v2513 = vpop.f32.mrf.mxu0
    %v2514 = vadd.f32 %v2471, %v2513
    %v2515 = vpop.f32.mrf.mxu0
    %v2516 = vadd.f32 %v2473, %v2515
    %2517 = vdwg.mxu0
    %2518 = vmatprep.subr.bf16.mxu0 %v1895
    %2519 = vmatpush1.bf16.msra.mxu0 %v1894
    %2520 = vmatprep.subr.bf16.mxu0 %v1887
    %2521 = vmatpush1.bf16.msra.mxu0 %v1886
    %2522 = vmatprep.subr.bf16.mxu0 %v1879
    %2523 = vmatpush1.bf16.msra.mxu0 %v1878
    %2524 = vmatprep.subr.bf16.mxu0 %v1871
    %2525 = vmatpush1.bf16.msra.mxu0 %v1870
    %2526 = vmatprep.subr.bf16.mxu0 %v1863
    %2527 = vmatpush1.bf16.msra.mxu0 %v1862
    %2528 = vmatprep.subr.bf16.mxu0 %v1855
    %2529 = vmatpush1.bf16.msra.mxu0 %v1854
    %2530 = vmatprep.subr.bf16.mxu0 %v1847
    %2531 = vmatpush1.bf16.msra.mxu0 %v1846
    %2532 = vmatprep.subr.bf16.mxu0 %v1839
    %2533 = vmatpush1.bf16.msra.mxu0 %v1838
    %2534 = vmatprep.subr.bf16.mxu0 %v1959
    %2535 = vmatpush2.bf16.msra.mxu0 %v1958
    %2536 = vmatprep.subr.bf16.mxu0 %v1951
    %2537 = vmatpush2.bf16.msra.mxu0 %v1950
    %2538 = vmatprep.subr.bf16.mxu0 %v1943
    %2539 = vmatpush2.bf16.msra.mxu0 %v1942
    %2540 = vmatprep.subr.bf16.mxu0 %v1935
    %2541 = vmatpush2.bf16.msra.mxu0 %v1934
    %2542 = vmatprep.subr.bf16.mxu0 %v1927
    %2543 = vmatpush2.bf16.msra.mxu0 %v1926
    %2544 = vmatprep.subr.bf16.mxu0 %v1919
    %2545 = vmatpush2.bf16.msra.mxu0 %v1918
    %2546 = vmatprep.subr.bf16.mxu0 %v1911
    %2547 = vmatpush2.bf16.msra.mxu0 %v1910
    %2548 = vmatprep.subr.bf16.mxu0 %v1903
    %2549 = vmatpush2.bf16.msra.mxu0 %v1902
    %2550 = vmatprep.mubr.bf16.mxu0 %v765
    %2551 = vmatmul.mubr.bf16.gmra.mxu0 %v764
    %v2552 = vpop.f32.mrf.mxu0
    %v2553 = vadd.f32 %v1045, %v2552
    %v2554 = vpop.f32.mrf.mxu0
    %v2555 = vadd.f32 %v1049, %v2554
    %v2556 = vpop.f32.mrf.mxu0
    %v2557 = vadd.f32 %v1045, %v2556
    %v2558 = vpop.f32.mrf.mxu0
    %v2559 = vadd.f32 %v1049, %v2558
    %2560 = vdwg.mxu0
    %2561 = vmatprep.subr.bf16.mxu0 %v2023
    %2562 = vmatpush1.bf16.msra.mxu0 %v2022
    %2563 = vmatprep.subr.bf16.mxu0 %v2015
    %2564 = vmatpush1.bf16.msra.mxu0 %v2014
    %2565 = vmatprep.subr.bf16.mxu0 %v2007
    %2566 = vmatpush1.bf16.msra.mxu0 %v2006
    %2567 = vmatprep.subr.bf16.mxu0 %v1999
    %2568 = vmatpush1.bf16.msra.mxu0 %v1998
    %2569 = vmatprep.subr.bf16.mxu0 %v1991
    %2570 = vmatpush1.bf16.msra.mxu0 %v1990
    %2571 = vmatprep.subr.bf16.mxu0 %v1983
    %2572 = vmatpush1.bf16.msra.mxu0 %v1982
    %2573 = vmatprep.subr.bf16.mxu0 %v1975
    %2574 = vmatpush1.bf16.msra.mxu0 %v1974
    %2575 = vmatprep.subr.bf16.mxu0 %v1967
    %2576 = vmatpush1.bf16.msra.mxu0 %v1966
    %2577 = vmatprep.subr.bf16.mxu0 %v2087
    %2578 = vmatpush2.bf16.msra.mxu0 %v2086
    %2579 = vmatprep.subr.bf16.mxu0 %v2079
    %2580 = vmatpush2.bf16.msra.mxu0 %v2078
    %2581 = vmatprep.subr.bf16.mxu0 %v2071
    %2582 = vmatpush2.bf16.msra.mxu0 %v2070
    %2583 = vmatprep.subr.bf16.mxu0 %v2063
    %2584 = vmatpush2.bf16.msra.mxu0 %v2062
    %2585 = vmatprep.subr.bf16.mxu0 %v2055
    %2586 = vmatpush2.bf16.msra.mxu0 %v2054
    %2587 = vmatprep.subr.bf16.mxu0 %v2047
    %2588 = vmatpush2.bf16.msra.mxu0 %v2046
    %2589 = vmatprep.subr.bf16.mxu0 %v2039
    %2590 = vmatpush2.bf16.msra.mxu0 %v2038
    %2591 = vmatprep.subr.bf16.mxu0 %v2031
    %2592 = vmatpush2.bf16.msra.mxu0 %v2030
    %2593 = vmatprep.mubr.bf16.mxu0 %v767
    %2594 = vmatmul.mubr.bf16.gmra.mxu0 %v766
    %v2595 = vpop.f32.mrf.mxu0
    %v2596 = vadd.f32 %v2553, %v2595
    %v2597 = vpop.f32.mrf.mxu0
    %v2598 = vadd.f32 %v2555, %v2597
    %v2599 = vpop.f32.mrf.mxu0
    %v2600 = vadd.f32 %v2557, %v2599
    %v2601 = vpop.f32.mrf.mxu0
    %v2602 = vadd.f32 %v2559, %v2601
    %2603 = vdwg.mxu0
    %2604 = vmatprep.subr.bf16.mxu0 %v1897
    %2605 = vmatpush1.bf16.msra.mxu0 %v1896
    %2606 = vmatprep.subr.bf16.mxu0 %v1889
    %2607 = vmatpush1.bf16.msra.mxu0 %v1888
    %2608 = vmatprep.subr.bf16.mxu0 %v1881
    %2609 = vmatpush1.bf16.msra.mxu0 %v1880
    %2610 = vmatprep.subr.bf16.mxu0 %v1873
    %2611 = vmatpush1.bf16.msra.mxu0 %v1872
    %2612 = vmatprep.subr.bf16.mxu0 %v1865
    %2613 = vmatpush1.bf16.msra.mxu0 %v1864
    %2614 = vmatprep.subr.bf16.mxu0 %v1857
    %2615 = vmatpush1.bf16.msra.mxu0 %v1856
    %2616 = vmatprep.subr.bf16.mxu0 %v1849
    %2617 = vmatpush1.bf16.msra.mxu0 %v1848
    %2618 = vmatprep.subr.bf16.mxu0 %v1841
    %2619 = vmatpush1.bf16.msra.mxu0 %v1840
    %2620 = vmatprep.subr.bf16.mxu0 %v1961
    %2621 = vmatpush2.bf16.msra.mxu0 %v1960
    %2622 = vmatprep.subr.bf16.mxu0 %v1953
    %2623 = vmatpush2.bf16.msra.mxu0 %v1952
    %2624 = vmatprep.subr.bf16.mxu0 %v1945
    %2625 = vmatpush2.bf16.msra.mxu0 %v1944
    %2626 = vmatprep.subr.bf16.mxu0 %v1937
    %2627 = vmatpush2.bf16.msra.mxu0 %v1936
    %2628 = vmatprep.subr.bf16.mxu0 %v1929
    %2629 = vmatpush2.bf16.msra.mxu0 %v1928
    %2630 = vmatprep.subr.bf16.mxu0 %v1921
    %2631 = vmatpush2.bf16.msra.mxu0 %v1920
    %2632 = vmatprep.subr.bf16.mxu0 %v1913
    %2633 = vmatpush2.bf16.msra.mxu0 %v1912
    %2634 = vmatprep.subr.bf16.mxu0 %v1905
    %2635 = vmatpush2.bf16.msra.mxu0 %v1904
    %2636 = vmatprep.mubr.bf16.mxu0 %v765
    %2637 = vmatmul.mubr.bf16.gmra.mxu0 %v764
    %v2638 = vpop.f32.mrf.mxu0
    %v2639 = vadd.f32 %v1053, %v2638
    %v2640 = vpop.f32.mrf.mxu0
    %v2641 = vadd.f32 %v1057, %v2640
    %v2642 = vpop.f32.mrf.mxu0
    %v2643 = vadd.f32 %v1053, %v2642
    %v2644 = vpop.f32.mrf.mxu0
    %v2645 = vadd.f32 %v1057, %v2644
    %2646 = vdwg.mxu0
    %2647 = vmatprep.subr.bf16.mxu0 %v2025
    %2648 = vmatpush1.bf16.msra.mxu0 %v2024
    %2649 = vmatprep.subr.bf16.mxu0 %v2017
    %2650 = vmatpush1.bf16.msra.mxu0 %v2016
    %2651 = vmatprep.subr.bf16.mxu0 %v2009
    %2652 = vmatpush1.bf16.msra.mxu0 %v2008
    %2653 = vmatprep.subr.bf16.mxu0 %v2001
    %2654 = vmatpush1.bf16.msra.mxu0 %v2000
    %2655 = vmatprep.subr.bf16.mxu0 %v1993
    %2656 = vmatpush1.bf16.msra.mxu0 %v1992
    %2657 = vmatprep.subr.bf16.mxu0 %v1985
    %2658 = vmatpush1.bf16.msra.mxu0 %v1984
    %2659 = vmatprep.subr.bf16.mxu0 %v1977
    %2660 = vmatpush1.bf16.msra.mxu0 %v1976
    %2661 = vmatprep.subr.bf16.mxu0 %v1969
    %2662 = vmatpush1.bf16.msra.mxu0 %v1968
    %2663 = vmatprep.subr.bf16.mxu0 %v2089
    %2664 = vmatpush2.bf16.msra.mxu0 %v2088
    %2665 = vmatprep.subr.bf16.mxu0 %v2081
    %2666 = vmatpush2.bf16.msra.mxu0 %v2080
    %2667 = vmatprep.subr.bf16.mxu0 %v2073
    %2668 = vmatpush2.bf16.msra.mxu0 %v2072
    %2669 = vmatprep.subr.bf16.mxu0 %v2065
    %2670 = vmatpush2.bf16.msra.mxu0 %v2064
    %2671 = vmatprep.subr.bf16.mxu0 %v2057
    %2672 = vmatpush2.bf16.msra.mxu0 %v2056
    %2673 = vmatprep.subr.bf16.mxu0 %v2049
    %2674 = vmatpush2.bf16.msra.mxu0 %v2048
    %2675 = vmatprep.subr.bf16.mxu0 %v2041
    %2676 = vmatpush2.bf16.msra.mxu0 %v2040
    %2677 = vmatprep.subr.bf16.mxu0 %v2033
    %2678 = vmatpush2.bf16.msra.mxu0 %v2032
    %2679 = vmatprep.mubr.bf16.mxu0 %v767
    %2680 = vmatmul.mubr.bf16.gmra.mxu0 %v766
    %v2681 = vpop.f32.mrf.mxu0
    %v2682 = vadd.f32 %v2639, %v2681
    %v2683 = vpop.f32.mrf.mxu0
    %v2684 = vadd.f32 %v2641, %v2683
    %v2685 = vpop.f32.mrf.mxu0
    %v2686 = vadd.f32 %v2643, %v2685
    %v2687 = vpop.f32.mrf.mxu0
    %v2688 = vadd.f32 %v2645, %v2687
    %2689 = vdwg.mxu0
    %v2690 = vmax.f32 %v2424, 0.0
    %v2691 = vmax.f32 %v2426, 0.0
    %v2692 = vmax.f32 %v2510, 0.0
    %v2693 = vmax.f32 %v2512, 0.0
    %v2694 = vmax.f32 %v2596, 0.0
    %v2695 = vmax.f32 %v2598, 0.0
    %v2696 = vmax.f32 %v2682, 0.0
    %v2697 = vmax.f32 %v2684, 0.0
    %v2698 = vmax.f32 %v2428, 0.0
    %v2699 = vmax.f32 %v2430, 0.0
    %v2700 = vmax.f32 %v2514, 0.0
    %v2701 = vmax.f32 %v2516, 0.0
    %v2702 = vmax.f32 %v2600, 0.0
    %v2703 = vmax.f32 %v2602, 0.0
    %v2704 = vmax.f32 %v2686, 0.0
    %v2705 = vmax.f32 %v2688, 0.0
    %v2706 = vpack.c.bf16 %v2698, %v2690
    %v2707 = vpack.c.bf16 %v2699, %v2691
    %v2708 = vpack.c.bf16 %v2700, %v2692
    %v2709 = vpack.c.bf16 %v2701, %v2693
    %v2710 = vpack.c.bf16 %v2702, %v2694
    %v2711 = vpack.c.bf16 %v2703, %v2695
    %v2712 = vpack.c.bf16 %v2704, %v2696
    %v2713 = vpack.c.bf16 %v2705, %v2697
    %v2714 = vld [vmem:[#allocation16] sm:$0xff]
    %v2715 = vld [vmem:[#allocation16 + $0x8] sm:$0xff]
    %v2716 = vld [vmem:[#allocation16 + $0x10] sm:$0xff]
    %v2717 = vld [vmem:[#allocation16 + $0x18] sm:$0xff]
    %v2718 = vld [vmem:[#allocation16 + $0x20] sm:$0xff]
    %v2719 = vld [vmem:[#allocation16 + $0x28] sm:$0xff]
    %v2720 = vld [vmem:[#allocation16 + $0x30] sm:$0xff]
    %v2721 = vld [vmem:[#allocation16 + $0x38] sm:$0xff]
    %v2722 = vld [vmem:[#allocation16 + $0x40] sm:$0xff]
    %v2723 = vld [vmem:[#allocation16 + $0x48] sm:$0xff]
    %v2724 = vld [vmem:[#allocation16 + $0x50] sm:$0xff]
    %v2725 = vld [vmem:[#allocation16 + $0x58] sm:$0xff]
    %v2726 = vld [vmem:[#allocation16 + $0x60] sm:$0xff]
    %v2727 = vld [vmem:[#allocation16 + $0x68] sm:$0xff]
    %v2728 = vld [vmem:[#allocation16 + $0x70] sm:$0xff]
    %v2729 = vld [vmem:[#allocation16 + $0x78] sm:$0xff]
    %v2730 = vld [vmem:[#allocation16 + $0x80] sm:$0xff]
    %v2731 = vld [vmem:[#allocation16 + $0x88] sm:$0xff]
    %v2732 = vld [vmem:[#allocation16 + $0x90] sm:$0xff]
    %v2733 = vld [vmem:[#allocation16 + $0x98] sm:$0xff]
    %v2734 = vld [vmem:[#allocation16 + $0xa0] sm:$0xff]
    %v2735 = vld [vmem:[#allocation16 + $0xa8] sm:$0xff]
    %v2736 = vld [vmem:[#allocation16 + $0xb0] sm:$0xff]
    %v2737 = vld [vmem:[#allocation16 + $0xb8] sm:$0xff]
    %v2738 = vld [vmem:[#allocation16 + $0xc0] sm:$0xff]
    %v2739 = vld [vmem:[#allocation16 + $0xc8] sm:$0xff]
    %v2740 = vld [vmem:[#allocation16 + $0xd0] sm:$0xff]
    %v2741 = vld [vmem:[#allocation16 + $0xd8] sm:$0xff]
    %v2742 = vld [vmem:[#allocation16 + $0xe0] sm:$0xff]
    %v2743 = vld [vmem:[#allocation16 + $0xe8] sm:$0xff]
    %v2744 = vld [vmem:[#allocation16 + $0xf0] sm:$0xff]
    %v2745 = vld [vmem:[#allocation16 + $0xf8] sm:$0xff]
    %v2746 = vld [vmem:[#allocation16 + $0x100] sm:$0xff]
    %v2747 = vld [vmem:[#allocation16 + $0x108] sm:$0xff]
    %v2748 = vld [vmem:[#allocation16 + $0x110] sm:$0xff]
    %v2749 = vld [vmem:[#allocation16 + $0x118] sm:$0xff]
    %v2750 = vld [vmem:[#allocation16 + $0x120] sm:$0xff]
    %v2751 = vld [vmem:[#allocation16 + $0x128] sm:$0xff]
    %v2752 = vld [vmem:[#allocation16 + $0x130] sm:$0xff]
    %v2753 = vld [vmem:[#allocation16 + $0x138] sm:$0xff]
    %v2754 = vld [vmem:[#allocation16 + $0x140] sm:$0xff]
    %v2755 = vld [vmem:[#allocation16 + $0x148] sm:$0xff]
    %v2756 = vld [vmem:[#allocation16 + $0x150] sm:$0xff]
    %v2757 = vld [vmem:[#allocation16 + $0x158] sm:$0xff]
    %v2758 = vld [vmem:[#allocation16 + $0x160] sm:$0xff]
    %v2759 = vld [vmem:[#allocation16 + $0x168] sm:$0xff]
    %v2760 = vld [vmem:[#allocation16 + $0x170] sm:$0xff]
    %v2761 = vld [vmem:[#allocation16 + $0x178] sm:$0xff]
    %v2762 = vld [vmem:[#allocation16 + $0x180] sm:$0xff]
    %v2763 = vld [vmem:[#allocation16 + $0x188] sm:$0xff]
    %v2764 = vld [vmem:[#allocation16 + $0x190] sm:$0xff]
    %v2765 = vld [vmem:[#allocation16 + $0x198] sm:$0xff]
    %v2766 = vld [vmem:[#allocation16 + $0x1a0] sm:$0xff]
    %v2767 = vld [vmem:[#allocation16 + $0x1a8] sm:$0xff]
    %v2768 = vld [vmem:[#allocation16 + $0x1b0] sm:$0xff]
    %v2769 = vld [vmem:[#allocation16 + $0x1b8] sm:$0xff]
    %v2770 = vld [vmem:[#allocation16 + $0x1c0] sm:$0xff]
    %v2771 = vld [vmem:[#allocation16 + $0x1c8] sm:$0xff]
    %v2772 = vld [vmem:[#allocation16 + $0x1d0] sm:$0xff]
    %v2773 = vld [vmem:[#allocation16 + $0x1d8] sm:$0xff]
    %v2774 = vld [vmem:[#allocation16 + $0x1e0] sm:$0xff]
    %v2775 = vld [vmem:[#allocation16 + $0x1e8] sm:$0xff]
    %v2776 = vld [vmem:[#allocation16 + $0x1f0] sm:$0xff]
    %v2777 = vld [vmem:[#allocation16 + $0x1f8] sm:$0xff]
    %v2778 = vld [vmem:[#allocation16 + $0x200] sm:$0xff]
    %v2779 = vld [vmem:[#allocation16 + $0x208] sm:$0xff]
    %v2780 = vld [vmem:[#allocation16 + $0x210] sm:$0xff]
    %v2781 = vld [vmem:[#allocation16 + $0x218] sm:$0xff]
    %v2782 = vld [vmem:[#allocation16 + $0x220] sm:$0xff]
    %v2783 = vld [vmem:[#allocation16 + $0x228] sm:$0xff]
    %v2784 = vld [vmem:[#allocation16 + $0x230] sm:$0xff]
    %v2785 = vld [vmem:[#allocation16 + $0x238] sm:$0xff]
    %v2786 = vld [vmem:[#allocation16 + $0x240] sm:$0xff]
    %v2787 = vld [vmem:[#allocation16 + $0x248] sm:$0xff]
    %v2788 = vld [vmem:[#allocation16 + $0x250] sm:$0xff]
    %v2789 = vld [vmem:[#allocation16 + $0x258] sm:$0xff]
    %v2790 = vld [vmem:[#allocation16 + $0x260] sm:$0xff]
    %v2791 = vld [vmem:[#allocation16 + $0x268] sm:$0xff]
    %v2792 = vld [vmem:[#allocation16 + $0x270] sm:$0xff]
    %v2793 = vld [vmem:[#allocation16 + $0x278] sm:$0xff]
    %v2794 = vld [vmem:[#allocation16 + $0x280] sm:$0xff]
    %v2795 = vld [vmem:[#allocation16 + $0x288] sm:$0xff]
    %v2796 = vld [vmem:[#allocation16 + $0x290] sm:$0xff]
    %v2797 = vld [vmem:[#allocation16 + $0x298] sm:$0xff]
    %v2798 = vld [vmem:[#allocation16 + $0x2a0] sm:$0xff]
    %v2799 = vld [vmem:[#allocation16 + $0x2a8] sm:$0xff]
    %v2800 = vld [vmem:[#allocation16 + $0x2b0] sm:$0xff]
    %v2801 = vld [vmem:[#allocation16 + $0x2b8] sm:$0xff]
    %v2802 = vld [vmem:[#allocation16 + $0x2c0] sm:$0xff]
    %v2803 = vld [vmem:[#allocation16 + $0x2c8] sm:$0xff]
    %v2804 = vld [vmem:[#allocation16 + $0x2d0] sm:$0xff]
    %v2805 = vld [vmem:[#allocation16 + $0x2d8] sm:$0xff]
    %v2806 = vld [vmem:[#allocation16 + $0x2e0] sm:$0xff]
    %v2807 = vld [vmem:[#allocation16 + $0x2e8] sm:$0xff]
    %v2808 = vld [vmem:[#allocation16 + $0x2f0] sm:$0xff]
    %v2809 = vld [vmem:[#allocation16 + $0x2f8] sm:$0xff]
    %v2810 = vld [vmem:[#allocation16 + $0x300] sm:$0xff]
    %v2811 = vld [vmem:[#allocation16 + $0x308] sm:$0xff]
    %v2812 = vld [vmem:[#allocation16 + $0x310] sm:$0xff]
    %v2813 = vld [vmem:[#allocation16 + $0x318] sm:$0xff]
    %v2814 = vld [vmem:[#allocation16 + $0x320] sm:$0xff]
    %v2815 = vld [vmem:[#allocation16 + $0x328] sm:$0xff]
    %v2816 = vld [vmem:[#allocation16 + $0x330] sm:$0xff]
    %v2817 = vld [vmem:[#allocation16 + $0x338] sm:$0xff]
    %v2818 = vld [vmem:[#allocation16 + $0x340] sm:$0xff]
    %v2819 = vld [vmem:[#allocation16 + $0x348] sm:$0xff]
    %v2820 = vld [vmem:[#allocation16 + $0x350] sm:$0xff]
    %v2821 = vld [vmem:[#allocation16 + $0x358] sm:$0xff]
    %v2822 = vld [vmem:[#allocation16 + $0x360] sm:$0xff]
    %v2823 = vld [vmem:[#allocation16 + $0x368] sm:$0xff]
    %v2824 = vld [vmem:[#allocation16 + $0x370] sm:$0xff]
    %v2825 = vld [vmem:[#allocation16 + $0x378] sm:$0xff]
    %v2826 = vld [vmem:[#allocation16 + $0x380] sm:$0xff]
    %v2827 = vld [vmem:[#allocation16 + $0x388] sm:$0xff]
    %v2828 = vld [vmem:[#allocation16 + $0x390] sm:$0xff]
    %v2829 = vld [vmem:[#allocation16 + $0x398] sm:$0xff]
    %v2830 = vld [vmem:[#allocation16 + $0x3a0] sm:$0xff]
    %v2831 = vld [vmem:[#allocation16 + $0x3a8] sm:$0xff]
    %v2832 = vld [vmem:[#allocation16 + $0x3b0] sm:$0xff]
    %v2833 = vld [vmem:[#allocation16 + $0x3b8] sm:$0xff]
    %v2834 = vld [vmem:[#allocation16 + $0x3c0] sm:$0xff]
    %v2835 = vld [vmem:[#allocation16 + $0x3c8] sm:$0xff]
    %v2836 = vld [vmem:[#allocation16 + $0x3d0] sm:$0xff]
    %v2837 = vld [vmem:[#allocation16 + $0x3d8] sm:$0xff]
    %v2838 = vld [vmem:[#allocation16 + $0x3e0] sm:$0xff]
    %v2839 = vld [vmem:[#allocation16 + $0x3e8] sm:$0xff]
    %v2840 = vld [vmem:[#allocation16 + $0x3f0] sm:$0xff]
    %v2841 = vld [vmem:[#allocation16 + $0x3f8] sm:$0xff]
    %v2842 = vld [vmem:[#allocation16 + $0x400] sm:$0xff]
    %v2843 = vld [vmem:[#allocation16 + $0x408] sm:$0xff]
    %v2844 = vld [vmem:[#allocation16 + $0x410] sm:$0xff]
    %v2845 = vld [vmem:[#allocation16 + $0x418] sm:$0xff]
    %v2846 = vld [vmem:[#allocation16 + $0x420] sm:$0xff]
    %v2847 = vld [vmem:[#allocation16 + $0x428] sm:$0xff]
    %v2848 = vld [vmem:[#allocation16 + $0x430] sm:$0xff]
    %v2849 = vld [vmem:[#allocation16 + $0x438] sm:$0xff]
    %v2850 = vld [vmem:[#allocation16 + $0x440] sm:$0xff]
    %v2851 = vld [vmem:[#allocation16 + $0x448] sm:$0xff]
    %v2852 = vld [vmem:[#allocation16 + $0x450] sm:$0xff]
    %v2853 = vld [vmem:[#allocation16 + $0x458] sm:$0xff]
    %v2854 = vld [vmem:[#allocation16 + $0x460] sm:$0xff]
    %v2855 = vld [vmem:[#allocation16 + $0x468] sm:$0xff]
    %v2856 = vld [vmem:[#allocation16 + $0x470] sm:$0xff]
    %v2857 = vld [vmem:[#allocation16 + $0x478] sm:$0xff]
    %v2858 = vld [vmem:[#allocation16 + $0x480] sm:$0xff]
    %v2859 = vld [vmem:[#allocation16 + $0x488] sm:$0xff]
    %v2860 = vld [vmem:[#allocation16 + $0x490] sm:$0xff]
    %v2861 = vld [vmem:[#allocation16 + $0x498] sm:$0xff]
    %v2862 = vld [vmem:[#allocation16 + $0x4a0] sm:$0xff]
    %v2863 = vld [vmem:[#allocation16 + $0x4a8] sm:$0xff]
    %v2864 = vld [vmem:[#allocation16 + $0x4b0] sm:$0xff]
    %v2865 = vld [vmem:[#allocation16 + $0x4b8] sm:$0xff]
    %v2866 = vld [vmem:[#allocation16 + $0x4c0] sm:$0xff]
    %v2867 = vld [vmem:[#allocation16 + $0x4c8] sm:$0xff]
    %v2868 = vld [vmem:[#allocation16 + $0x4d0] sm:$0xff]
    %v2869 = vld [vmem:[#allocation16 + $0x4d8] sm:$0xff]
    %v2870 = vld [vmem:[#allocation16 + $0x4e0] sm:$0xff]
    %v2871 = vld [vmem:[#allocation16 + $0x4e8] sm:$0xff]
    %v2872 = vld [vmem:[#allocation16 + $0x4f0] sm:$0xff]
    %v2873 = vld [vmem:[#allocation16 + $0x4f8] sm:$0xff]
    %v2874 = vld [vmem:[#allocation16 + $0x500] sm:$0xff]
    %v2875 = vld [vmem:[#allocation16 + $0x508] sm:$0xff]
    %v2876 = vld [vmem:[#allocation16 + $0x510] sm:$0xff]
    %v2877 = vld [vmem:[#allocation16 + $0x518] sm:$0xff]
    %v2878 = vld [vmem:[#allocation16 + $0x520] sm:$0xff]
    %v2879 = vld [vmem:[#allocation16 + $0x528] sm:$0xff]
    %v2880 = vld [vmem:[#allocation16 + $0x530] sm:$0xff]
    %v2881 = vld [vmem:[#allocation16 + $0x538] sm:$0xff]
    %v2882 = vld [vmem:[#allocation16 + $0x540] sm:$0xff]
    %v2883 = vld [vmem:[#allocation16 + $0x548] sm:$0xff]
    %v2884 = vld [vmem:[#allocation16 + $0x550] sm:$0xff]
    %v2885 = vld [vmem:[#allocation16 + $0x558] sm:$0xff]
    %v2886 = vld [vmem:[#allocation16 + $0x560] sm:$0xff]
    %v2887 = vld [vmem:[#allocation16 + $0x568] sm:$0xff]
    %v2888 = vld [vmem:[#allocation16 + $0x570] sm:$0xff]
    %v2889 = vld [vmem:[#allocation16 + $0x578] sm:$0xff]
    %v2890 = vld [vmem:[#allocation16 + $0x580] sm:$0xff]
    %v2891 = vld [vmem:[#allocation16 + $0x588] sm:$0xff]
    %v2892 = vld [vmem:[#allocation16 + $0x590] sm:$0xff]
    %v2893 = vld [vmem:[#allocation16 + $0x598] sm:$0xff]
    %v2894 = vld [vmem:[#allocation16 + $0x5a0] sm:$0xff]
    %v2895 = vld [vmem:[#allocation16 + $0x5a8] sm:$0xff]
    %v2896 = vld [vmem:[#allocation16 + $0x5b0] sm:$0xff]
    %v2897 = vld [vmem:[#allocation16 + $0x5b8] sm:$0xff]
    %v2898 = vld [vmem:[#allocation16 + $0x5c0] sm:$0xff]
    %v2899 = vld [vmem:[#allocation16 + $0x5c8] sm:$0xff]
    %v2900 = vld [vmem:[#allocation16 + $0x5d0] sm:$0xff]
    %v2901 = vld [vmem:[#allocation16 + $0x5d8] sm:$0xff]
    %v2902 = vld [vmem:[#allocation16 + $0x5e0] sm:$0xff]
    %v2903 = vld [vmem:[#allocation16 + $0x5e8] sm:$0xff]
    %v2904 = vld [vmem:[#allocation16 + $0x5f0] sm:$0xff]
    %v2905 = vld [vmem:[#allocation16 + $0x5f8] sm:$0xff]
    %v2906 = vld [vmem:[#allocation16 + $0x600] sm:$0xff]
    %v2907 = vld [vmem:[#allocation16 + $0x608] sm:$0xff]
    %v2908 = vld [vmem:[#allocation16 + $0x610] sm:$0xff]
    %v2909 = vld [vmem:[#allocation16 + $0x618] sm:$0xff]
    %v2910 = vld [vmem:[#allocation16 + $0x620] sm:$0xff]
    %v2911 = vld [vmem:[#allocation16 + $0x628] sm:$0xff]
    %v2912 = vld [vmem:[#allocation16 + $0x630] sm:$0xff]
    %v2913 = vld [vmem:[#allocation16 + $0x638] sm:$0xff]
    %v2914 = vld [vmem:[#allocation16 + $0x640] sm:$0xff]
    %v2915 = vld [vmem:[#allocation16 + $0x648] sm:$0xff]
    %v2916 = vld [vmem:[#allocation16 + $0x650] sm:$0xff]
    %v2917 = vld [vmem:[#allocation16 + $0x658] sm:$0xff]
    %v2918 = vld [vmem:[#allocation16 + $0x660] sm:$0xff]
    %v2919 = vld [vmem:[#allocation16 + $0x668] sm:$0xff]
    %v2920 = vld [vmem:[#allocation16 + $0x670] sm:$0xff]
    %v2921 = vld [vmem:[#allocation16 + $0x678] sm:$0xff]
    %v2922 = vld [vmem:[#allocation16 + $0x680] sm:$0xff]
    %v2923 = vld [vmem:[#allocation16 + $0x688] sm:$0xff]
    %v2924 = vld [vmem:[#allocation16 + $0x690] sm:$0xff]
    %v2925 = vld [vmem:[#allocation16 + $0x698] sm:$0xff]
    %v2926 = vld [vmem:[#allocation16 + $0x6a0] sm:$0xff]
    %v2927 = vld [vmem:[#allocation16 + $0x6a8] sm:$0xff]
    %v2928 = vld [vmem:[#allocation16 + $0x6b0] sm:$0xff]
    %v2929 = vld [vmem:[#allocation16 + $0x6b8] sm:$0xff]
    %v2930 = vld [vmem:[#allocation16 + $0x6c0] sm:$0xff]
    %v2931 = vld [vmem:[#allocation16 + $0x6c8] sm:$0xff]
    %v2932 = vld [vmem:[#allocation16 + $0x6d0] sm:$0xff]
    %v2933 = vld [vmem:[#allocation16 + $0x6d8] sm:$0xff]
    %v2934 = vld [vmem:[#allocation16 + $0x6e0] sm:$0xff]
    %v2935 = vld [vmem:[#allocation16 + $0x6e8] sm:$0xff]
    %v2936 = vld [vmem:[#allocation16 + $0x6f0] sm:$0xff]
    %v2937 = vld [vmem:[#allocation16 + $0x6f8] sm:$0xff]
    %v2938 = vld [vmem:[#allocation16 + $0x700] sm:$0xff]
    %v2939 = vld [vmem:[#allocation16 + $0x708] sm:$0xff]
    %v2940 = vld [vmem:[#allocation16 + $0x710] sm:$0xff]
    %v2941 = vld [vmem:[#allocation16 + $0x718] sm:$0xff]
    %v2942 = vld [vmem:[#allocation16 + $0x720] sm:$0xff]
    %v2943 = vld [vmem:[#allocation16 + $0x728] sm:$0xff]
    %v2944 = vld [vmem:[#allocation16 + $0x730] sm:$0xff]
    %v2945 = vld [vmem:[#allocation16 + $0x738] sm:$0xff]
    %v2946 = vld [vmem:[#allocation16 + $0x740] sm:$0xff]
    %v2947 = vld [vmem:[#allocation16 + $0x748] sm:$0xff]
    %v2948 = vld [vmem:[#allocation16 + $0x750] sm:$0xff]
    %v2949 = vld [vmem:[#allocation16 + $0x758] sm:$0xff]
    %v2950 = vld [vmem:[#allocation16 + $0x760] sm:$0xff]
    %v2951 = vld [vmem:[#allocation16 + $0x768] sm:$0xff]
    %v2952 = vld [vmem:[#allocation16 + $0x770] sm:$0xff]
    %v2953 = vld [vmem:[#allocation16 + $0x778] sm:$0xff]
    %v2954 = vld [vmem:[#allocation16 + $0x780] sm:$0xff]
    %v2955 = vld [vmem:[#allocation16 + $0x788] sm:$0xff]
    %v2956 = vld [vmem:[#allocation16 + $0x790] sm:$0xff]
    %v2957 = vld [vmem:[#allocation16 + $0x798] sm:$0xff]
    %v2958 = vld [vmem:[#allocation16 + $0x7a0] sm:$0xff]
    %v2959 = vld [vmem:[#allocation16 + $0x7a8] sm:$0xff]
    %v2960 = vld [vmem:[#allocation16 + $0x7b0] sm:$0xff]
    %v2961 = vld [vmem:[#allocation16 + $0x7b8] sm:$0xff]
    %v2962 = vld [vmem:[#allocation16 + $0x7c0] sm:$0xff]
    %v2963 = vld [vmem:[#allocation16 + $0x7c8] sm:$0xff]
    %v2964 = vld [vmem:[#allocation16 + $0x7d0] sm:$0xff]
    %v2965 = vld [vmem:[#allocation16 + $0x7d8] sm:$0xff]
    %v2966 = vld [vmem:[#allocation16 + $0x7e0] sm:$0xff]
    %v2967 = vld [vmem:[#allocation16 + $0x7e8] sm:$0xff]
    %v2968 = vld [vmem:[#allocation16 + $0x7f0] sm:$0xff]
    %v2969 = vld [vmem:[#allocation16 + $0x7f8] sm:$0xff]
    %v2970 = vld [vmem:[#allocation16 + $0x800] sm:$0xff]
    %v2971 = vld [vmem:[#allocation16 + $0x808] sm:$0xff]
    %v2972 = vld [vmem:[#allocation16 + $0x810] sm:$0xff]
    %v2973 = vld [vmem:[#allocation16 + $0x818] sm:$0xff]
    %v2974 = vld [vmem:[#allocation16 + $0x820] sm:$0xff]
    %v2975 = vld [vmem:[#allocation16 + $0x828] sm:$0xff]
    %v2976 = vld [vmem:[#allocation16 + $0x830] sm:$0xff]
    %v2977 = vld [vmem:[#allocation16 + $0x838] sm:$0xff]
    %v2978 = vld [vmem:[#allocation16 + $0x840] sm:$0xff]
    %v2979 = vld [vmem:[#allocation16 + $0x848] sm:$0xff]
    %v2980 = vld [vmem:[#allocation16 + $0x850] sm:$0xff]
    %v2981 = vld [vmem:[#allocation16 + $0x858] sm:$0xff]
    %v2982 = vld [vmem:[#allocation16 + $0x860] sm:$0xff]
    %v2983 = vld [vmem:[#allocation16 + $0x868] sm:$0xff]
    %v2984 = vld [vmem:[#allocation16 + $0x870] sm:$0xff]
    %v2985 = vld [vmem:[#allocation16 + $0x878] sm:$0xff]
    %v2986 = vld [vmem:[#allocation16 + $0x880] sm:$0xff]
    %v2987 = vld [vmem:[#allocation16 + $0x888] sm:$0xff]
    %v2988 = vld [vmem:[#allocation16 + $0x890] sm:$0xff]
    %v2989 = vld [vmem:[#allocation16 + $0x898] sm:$0xff]
    %v2990 = vld [vmem:[#allocation16 + $0x8a0] sm:$0xff]
    %v2991 = vld [vmem:[#allocation16 + $0x8a8] sm:$0xff]
    %v2992 = vld [vmem:[#allocation16 + $0x8b0] sm:$0xff]
    %v2993 = vld [vmem:[#allocation16 + $0x8b8] sm:$0xff]
    %v2994 = vld [vmem:[#allocation16 + $0x8c0] sm:$0xff]
    %v2995 = vld [vmem:[#allocation16 + $0x8c8] sm:$0xff]
    %v2996 = vld [vmem:[#allocation16 + $0x8d0] sm:$0xff]
    %v2997 = vld [vmem:[#allocation16 + $0x8d8] sm:$0xff]
    %v2998 = vld [vmem:[#allocation16 + $0x8e0] sm:$0xff]
    %v2999 = vld [vmem:[#allocation16 + $0x8e8] sm:$0xff]
    %v3000 = vld [vmem:[#allocation16 + $0x8f0] sm:$0xff]
    %v3001 = vld [vmem:[#allocation16 + $0x8f8] sm:$0xff]
    %v3002 = vld [vmem:[#allocation16 + $0x900] sm:$0xff]
    %v3003 = vld [vmem:[#allocation16 + $0x908] sm:$0xff]
    %v3004 = vld [vmem:[#allocation16 + $0x910] sm:$0xff]
    %v3005 = vld [vmem:[#allocation16 + $0x918] sm:$0xff]
    %v3006 = vld [vmem:[#allocation16 + $0x920] sm:$0xff]
    %v3007 = vld [vmem:[#allocation16 + $0x928] sm:$0xff]
    %v3008 = vld [vmem:[#allocation16 + $0x930] sm:$0xff]
    %v3009 = vld [vmem:[#allocation16 + $0x938] sm:$0xff]
    %v3010 = vld [vmem:[#allocation16 + $0x940] sm:$0xff]
    %v3011 = vld [vmem:[#allocation16 + $0x948] sm:$0xff]
    %v3012 = vld [vmem:[#allocation16 + $0x950] sm:$0xff]
    %v3013 = vld [vmem:[#allocation16 + $0x958] sm:$0xff]
    %v3014 = vld [vmem:[#allocation16 + $0x960] sm:$0xff]
    %v3015 = vld [vmem:[#allocation16 + $0x968] sm:$0xff]
    %v3016 = vld [vmem:[#allocation16 + $0x970] sm:$0xff]
    %v3017 = vld [vmem:[#allocation16 + $0x978] sm:$0xff]
    %v3018 = vld [vmem:[#allocation16 + $0x980] sm:$0xff]
    %v3019 = vld [vmem:[#allocation16 + $0x988] sm:$0xff]
    %v3020 = vld [vmem:[#allocation16 + $0x990] sm:$0xff]
    %v3021 = vld [vmem:[#allocation16 + $0x998] sm:$0xff]
    %v3022 = vld [vmem:[#allocation16 + $0x9a0] sm:$0xff]
    %v3023 = vld [vmem:[#allocation16 + $0x9a8] sm:$0xff]
    %v3024 = vld [vmem:[#allocation16 + $0x9b0] sm:$0xff]
    %v3025 = vld [vmem:[#allocation16 + $0x9b8] sm:$0xff]
    %v3026 = vld [vmem:[#allocation16 + $0x9c0] sm:$0xff]
    %v3027 = vld [vmem:[#allocation16 + $0x9c8] sm:$0xff]
    %v3028 = vld [vmem:[#allocation16 + $0x9d0] sm:$0xff]
    %v3029 = vld [vmem:[#allocation16 + $0x9d8] sm:$0xff]
    %v3030 = vld [vmem:[#allocation16 + $0x9e0] sm:$0xff]
    %v3031 = vld [vmem:[#allocation16 + $0x9e8] sm:$0xff]
    %v3032 = vld [vmem:[#allocation16 + $0x9f0] sm:$0xff]
    %v3033 = vld [vmem:[#allocation16 + $0x9f8] sm:$0xff]
    %v3034 = vld [vmem:[#allocation16 + $0xa00] sm:$0xff]
    %v3035 = vld [vmem:[#allocation16 + $0xa08] sm:$0xff]
    %v3036 = vld [vmem:[#allocation16 + $0xa10] sm:$0xff]
    %v3037 = vld [vmem:[#allocation16 + $0xa18] sm:$0xff]
    %v3038 = vld [vmem:[#allocation16 + $0xa20] sm:$0xff]
    %v3039 = vld [vmem:[#allocation16 + $0xa28] sm:$0xff]
    %v3040 = vld [vmem:[#allocation16 + $0xa30] sm:$0xff]
    %v3041 = vld [vmem:[#allocation16 + $0xa38] sm:$0xff]
    %v3042 = vld [vmem:[#allocation16 + $0xa40] sm:$0xff]
    %v3043 = vld [vmem:[#allocation16 + $0xa48] sm:$0xff]
    %v3044 = vld [vmem:[#allocation16 + $0xa50] sm:$0xff]
    %v3045 = vld [vmem:[#allocation16 + $0xa58] sm:$0xff]
    %v3046 = vld [vmem:[#allocation16 + $0xa60] sm:$0xff]
    %v3047 = vld [vmem:[#allocation16 + $0xa68] sm:$0xff]
    %v3048 = vld [vmem:[#allocation16 + $0xa70] sm:$0xff]
    %v3049 = vld [vmem:[#allocation16 + $0xa78] sm:$0xff]
    %v3050 = vld [vmem:[#allocation16 + $0xa80] sm:$0xff]
    %v3051 = vld [vmem:[#allocation16 + $0xa88] sm:$0xff]
    %v3052 = vld [vmem:[#allocation16 + $0xa90] sm:$0xff]
    %v3053 = vld [vmem:[#allocation16 + $0xa98] sm:$0xff]
    %v3054 = vld [vmem:[#allocation16 + $0xaa0] sm:$0xff]
    %v3055 = vld [vmem:[#allocation16 + $0xaa8] sm:$0xff]
    %v3056 = vld [vmem:[#allocation16 + $0xab0] sm:$0xff]
    %v3057 = vld [vmem:[#allocation16 + $0xab8] sm:$0xff]
    %v3058 = vld [vmem:[#allocation16 + $0xac0] sm:$0xff]
    %v3059 = vld [vmem:[#allocation16 + $0xac8] sm:$0xff]
    %v3060 = vld [vmem:[#allocation16 + $0xad0] sm:$0xff]
    %v3061 = vld [vmem:[#allocation16 + $0xad8] sm:$0xff]
    %v3062 = vld [vmem:[#allocation16 + $0xae0] sm:$0xff]
    %v3063 = vld [vmem:[#allocation16 + $0xae8] sm:$0xff]
    %v3064 = vld [vmem:[#allocation16 + $0xaf0] sm:$0xff]
    %v3065 = vld [vmem:[#allocation16 + $0xaf8] sm:$0xff]
    %v3066 = vld [vmem:[#allocation16 + $0xb00] sm:$0xff]
    %v3067 = vld [vmem:[#allocation16 + $0xb08] sm:$0xff]
    %v3068 = vld [vmem:[#allocation16 + $0xb10] sm:$0xff]
    %v3069 = vld [vmem:[#allocation16 + $0xb18] sm:$0xff]
    %v3070 = vld [vmem:[#allocation16 + $0xb20] sm:$0xff]
    %v3071 = vld [vmem:[#allocation16 + $0xb28] sm:$0xff]
    %v3072 = vld [vmem:[#allocation16 + $0xb30] sm:$0xff]
    %v3073 = vld [vmem:[#allocation16 + $0xb38] sm:$0xff]
    %v3074 = vld [vmem:[#allocation16 + $0xb40] sm:$0xff]
    %v3075 = vld [vmem:[#allocation16 + $0xb48] sm:$0xff]
    %v3076 = vld [vmem:[#allocation16 + $0xb50] sm:$0xff]
    %v3077 = vld [vmem:[#allocation16 + $0xb58] sm:$0xff]
    %v3078 = vld [vmem:[#allocation16 + $0xb60] sm:$0xff]
    %v3079 = vld [vmem:[#allocation16 + $0xb68] sm:$0xff]
    %v3080 = vld [vmem:[#allocation16 + $0xb70] sm:$0xff]
    %v3081 = vld [vmem:[#allocation16 + $0xb78] sm:$0xff]
    %v3082 = vld [vmem:[#allocation16 + $0xb80] sm:$0xff]
    %v3083 = vld [vmem:[#allocation16 + $0xb88] sm:$0xff]
    %v3084 = vld [vmem:[#allocation16 + $0xb90] sm:$0xff]
    %v3085 = vld [vmem:[#allocation16 + $0xb98] sm:$0xff]
    %v3086 = vld [vmem:[#allocation16 + $0xba0] sm:$0xff]
    %v3087 = vld [vmem:[#allocation16 + $0xba8] sm:$0xff]
    %v3088 = vld [vmem:[#allocation16 + $0xbb0] sm:$0xff]
    %v3089 = vld [vmem:[#allocation16 + $0xbb8] sm:$0xff]
    %v3090 = vld [vmem:[#allocation16 + $0xbc0] sm:$0xff]
    %v3091 = vld [vmem:[#allocation16 + $0xbc8] sm:$0xff]
    %v3092 = vld [vmem:[#allocation16 + $0xbd0] sm:$0xff]
    %v3093 = vld [vmem:[#allocation16 + $0xbd8] sm:$0xff]
    %v3094 = vld [vmem:[#allocation16 + $0xbe0] sm:$0xff]
    %v3095 = vld [vmem:[#allocation16 + $0xbe8] sm:$0xff]
    %v3096 = vld [vmem:[#allocation16 + $0xbf0] sm:$0xff]
    %v3097 = vld [vmem:[#allocation16 + $0xbf8] sm:$0xff]
    %v3098 = vld [vmem:[#allocation17] sm:$0x3f]
    %v3100 = vlaneseq
    %v3101 = vshrl.u32 %v3100, 7
    %v3102 = vsub.s32 0, %v3101
    %v3103 = vrot.slane %v3098, %v3102
    %v3104 = vlaneseq
    %v3105 = vshrl.u32 %v3104, 7
    %v3106 = vsub.s32 1, %v3105
    %v3107 = vrot.slane %v3098, %v3106
    %v3108 = vlaneseq
    %v3109 = vshrl.u32 %v3108, 7
    %v3110 = vsub.s32 2, %v3109
    %v3111 = vrot.slane %v3098, %v3110
    %v3112 = vlaneseq
    %v3113 = vshrl.u32 %v3112, 7
    %v3114 = vsub.s32 3, %v3113
    %v3115 = vrot.slane %v3098, %v3114
    %v3116 = vlaneseq
    %v3117 = vshrl.u32 %v3116, 7
    %v3118 = vsub.s32 4, %v3117
    %v3119 = vrot.slane %v3098, %v3118
    %v3120 = vlaneseq
    %v3121 = vshrl.u32 %v3120, 7
    %v3122 = vsub.s32 5, %v3121
    %v3123 = vrot.slane %v3098, %v3122
    %v3514 = vunpack.c.l.b16 %v2714
    %v3515 = vunpack.c.h.b16 %v2714
    %v3516 = vunpack.c.l.b16 %v2715
    %v3517 = vunpack.c.h.b16 %v2715
    %v3518 = vunpack.c.l.b16 %v2716
    %v3519 = vunpack.c.h.b16 %v2716
    %v3520 = vunpack.c.l.b16 %v2717
    %v3521 = vunpack.c.h.b16 %v2717
    %v3522 = vunpack.c.l.b16 %v2718
    %v3523 = vunpack.c.h.b16 %v2718
    %v3524 = vunpack.c.l.b16 %v2719
    %v3525 = vunpack.c.h.b16 %v2719
    %v3526 = vunpack.c.l.b16 %v2720
    %v3527 = vunpack.c.h.b16 %v2720
    %v3528 = vunpack.c.l.b16 %v2721
    %v3529 = vunpack.c.h.b16 %v2721
    %v3530 = vunpack.c.l.b16 %v2722
    %v3531 = vunpack.c.h.b16 %v2722
    %v3532 = vunpack.c.l.b16 %v2723
    %v3533 = vunpack.c.h.b16 %v2723
    %v3534 = vunpack.c.l.b16 %v2724
    %v3535 = vunpack.c.h.b16 %v2724
    %v3536 = vunpack.c.l.b16 %v2725
    %v3537 = vunpack.c.h.b16 %v2725
    %v3538 = vunpack.c.l.b16 %v2726
    %v3539 = vunpack.c.h.b16 %v2726
    %v3540 = vunpack.c.l.b16 %v2727
    %v3541 = vunpack.c.h.b16 %v2727
    %v3542 = vunpack.c.l.b16 %v2728
    %v3543 = vunpack.c.h.b16 %v2728
    %v3544 = vunpack.c.l.b16 %v2729
    %v3545 = vunpack.c.h.b16 %v2729
    %v3546 = vunpack.c.l.b16 %v2730
    %v3547 = vunpack.c.h.b16 %v2730
    %v3548 = vunpack.c.l.b16 %v2731
    %v3549 = vunpack.c.h.b16 %v2731
    %v3550 = vunpack.c.l.b16 %v2732
    %v3551 = vunpack.c.h.b16 %v2732
    %v3552 = vunpack.c.l.b16 %v2733
    %v3553 = vunpack.c.h.b16 %v2733
    %v3554 = vunpack.c.l.b16 %v2734
    %v3555 = vunpack.c.h.b16 %v2734
    %v3556 = vunpack.c.l.b16 %v2735
    %v3557 = vunpack.c.h.b16 %v2735
    %v3558 = vunpack.c.l.b16 %v2736
    %v3559 = vunpack.c.h.b16 %v2736
    %v3560 = vunpack.c.l.b16 %v2737
    %v3561 = vunpack.c.h.b16 %v2737
    %v3562 = vunpack.c.l.b16 %v2738
    %v3563 = vunpack.c.h.b16 %v2738
    %v3564 = vunpack.c.l.b16 %v2739
    %v3565 = vunpack.c.h.b16 %v2739
    %v3566 = vunpack.c.l.b16 %v2740
    %v3567 = vunpack.c.h.b16 %v2740
    %v3568 = vunpack.c.l.b16 %v2741
    %v3569 = vunpack.c.h.b16 %v2741
    %v3570 = vunpack.c.l.b16 %v2742
    %v3571 = vunpack.c.h.b16 %v2742
    %v3572 = vunpack.c.l.b16 %v2743
    %v3573 = vunpack.c.h.b16 %v2743
    %v3574 = vunpack.c.l.b16 %v2744
    %v3575 = vunpack.c.h.b16 %v2744
    %v3576 = vunpack.c.l.b16 %v2745
    %v3577 = vunpack.c.h.b16 %v2745
    %v3578 = vunpack.c.l.b16 %v2746
    %v3579 = vunpack.c.h.b16 %v2746
    %v3580 = vunpack.c.l.b16 %v2747
    %v3581 = vunpack.c.h.b16 %v2747
    %v3582 = vunpack.c.l.b16 %v2748
    %v3583 = vunpack.c.h.b16 %v2748
    %v3584 = vunpack.c.l.b16 %v2749
    %v3585 = vunpack.c.h.b16 %v2749
    %v3586 = vunpack.c.l.b16 %v2750
    %v3587 = vunpack.c.h.b16 %v2750
    %v3588 = vunpack.c.l.b16 %v2751
    %v3589 = vunpack.c.h.b16 %v2751
    %v3590 = vunpack.c.l.b16 %v2752
    %v3591 = vunpack.c.h.b16 %v2752
    %v3592 = vunpack.c.l.b16 %v2753
    %v3593 = vunpack.c.h.b16 %v2753
    %v3594 = vunpack.c.l.b16 %v2754
    %v3595 = vunpack.c.h.b16 %v2754
    %v3596 = vunpack.c.l.b16 %v2755
    %v3597 = vunpack.c.h.b16 %v2755
    %v3598 = vunpack.c.l.b16 %v2756
    %v3599 = vunpack.c.h.b16 %v2756
    %v3600 = vunpack.c.l.b16 %v2757
    %v3601 = vunpack.c.h.b16 %v2757
    %v3602 = vunpack.c.l.b16 %v2758
    %v3603 = vunpack.c.h.b16 %v2758
    %v3604 = vunpack.c.l.b16 %v2759
    %v3605 = vunpack.c.h.b16 %v2759
    %v3606 = vunpack.c.l.b16 %v2760
    %v3607 = vunpack.c.h.b16 %v2760
    %v3608 = vunpack.c.l.b16 %v2761
    %v3609 = vunpack.c.h.b16 %v2761
    %v3610 = vunpack.c.l.b16 %v2762
    %v3611 = vunpack.c.h.b16 %v2762
    %v3612 = vunpack.c.l.b16 %v2763
    %v3613 = vunpack.c.h.b16 %v2763
    %v3614 = vunpack.c.l.b16 %v2764
    %v3615 = vunpack.c.h.b16 %v2764
    %v3616 = vunpack.c.l.b16 %v2765
    %v3617 = vunpack.c.h.b16 %v2765
    %v3618 = vunpack.c.l.b16 %v2766
    %v3619 = vunpack.c.h.b16 %v2766
    %v3620 = vunpack.c.l.b16 %v2767
    %v3621 = vunpack.c.h.b16 %v2767
    %v3622 = vunpack.c.l.b16 %v2768
    %v3623 = vunpack.c.h.b16 %v2768
    %v3624 = vunpack.c.l.b16 %v2769
    %v3625 = vunpack.c.h.b16 %v2769
    %v3626 = vunpack.c.l.b16 %v2770
    %v3627 = vunpack.c.h.b16 %v2770
    %v3628 = vunpack.c.l.b16 %v2771
    %v3629 = vunpack.c.h.b16 %v2771
    %v3630 = vunpack.c.l.b16 %v2772
    %v3631 = vunpack.c.h.b16 %v2772
    %v3632 = vunpack.c.l.b16 %v2773
    %v3633 = vunpack.c.h.b16 %v2773
    %v3634 = vunpack.c.l.b16 %v2774
    %v3635 = vunpack.c.h.b16 %v2774
    %v3636 = vunpack.c.l.b16 %v2775
    %v3637 = vunpack.c.h.b16 %v2775
    %v3638 = vunpack.c.l.b16 %v2776
    %v3639 = vunpack.c.h.b16 %v2776
    %v3640 = vunpack.c.l.b16 %v2777
    %v3641 = vunpack.c.h.b16 %v2777
    %v3642 = vunpack.c.l.b16 %v2778
    %v3643 = vunpack.c.h.b16 %v2778
    %v3644 = vunpack.c.l.b16 %v2779
    %v3645 = vunpack.c.h.b16 %v2779
    %v3646 = vunpack.c.l.b16 %v2780
    %v3647 = vunpack.c.h.b16 %v2780
    %v3648 = vunpack.c.l.b16 %v2781
    %v3649 = vunpack.c.h.b16 %v2781
    %v3650 = vunpack.c.l.b16 %v2782
    %v3651 = vunpack.c.h.b16 %v2782
    %v3652 = vunpack.c.l.b16 %v2783
    %v3653 = vunpack.c.h.b16 %v2783
    %v3654 = vunpack.c.l.b16 %v2784
    %v3655 = vunpack.c.h.b16 %v2784
    %v3656 = vunpack.c.l.b16 %v2785
    %v3657 = vunpack.c.h.b16 %v2785
    %v3658 = vunpack.c.l.b16 %v2786
    %v3659 = vunpack.c.h.b16 %v2786
    %v3660 = vunpack.c.l.b16 %v2787
    %v3661 = vunpack.c.h.b16 %v2787
    %v3662 = vunpack.c.l.b16 %v2788
    %v3663 = vunpack.c.h.b16 %v2788
    %v3664 = vunpack.c.l.b16 %v2789
    %v3665 = vunpack.c.h.b16 %v2789
    %v3666 = vunpack.c.l.b16 %v2790
    %v3667 = vunpack.c.h.b16 %v2790
    %v3668 = vunpack.c.l.b16 %v2791
    %v3669 = vunpack.c.h.b16 %v2791
    %v3670 = vunpack.c.l.b16 %v2792
    %v3671 = vunpack.c.h.b16 %v2792
    %v3672 = vunpack.c.l.b16 %v2793
    %v3673 = vunpack.c.h.b16 %v2793
    %v3674 = vunpack.c.l.b16 %v2794
    %v3675 = vunpack.c.h.b16 %v2794
    %v3676 = vunpack.c.l.b16 %v2795
    %v3677 = vunpack.c.h.b16 %v2795
    %v3678 = vunpack.c.l.b16 %v2796
    %v3679 = vunpack.c.h.b16 %v2796
    %v3680 = vunpack.c.l.b16 %v2797
    %v3681 = vunpack.c.h.b16 %v2797
    %v3682 = vunpack.c.l.b16 %v2798
    %v3683 = vunpack.c.h.b16 %v2798
    %v3684 = vunpack.c.l.b16 %v2799
    %v3685 = vunpack.c.h.b16 %v2799
    %v3686 = vunpack.c.l.b16 %v2800
    %v3687 = vunpack.c.h.b16 %v2800
    %v3688 = vunpack.c.l.b16 %v2801
    %v3689 = vunpack.c.h.b16 %v2801
    %v3690 = vunpack.c.l.b16 %v2802
    %v3691 = vunpack.c.h.b16 %v2802
    %v3692 = vunpack.c.l.b16 %v2803
    %v3693 = vunpack.c.h.b16 %v2803
    %v3694 = vunpack.c.l.b16 %v2804
    %v3695 = vunpack.c.h.b16 %v2804
    %v3696 = vunpack.c.l.b16 %v2805
    %v3697 = vunpack.c.h.b16 %v2805
    %v3698 = vunpack.c.l.b16 %v2806
    %v3699 = vunpack.c.h.b16 %v2806
    %v3700 = vunpack.c.l.b16 %v2807
    %v3701 = vunpack.c.h.b16 %v2807
    %v3702 = vunpack.c.l.b16 %v2808
    %v3703 = vunpack.c.h.b16 %v2808
    %v3704 = vunpack.c.l.b16 %v2809
    %v3705 = vunpack.c.h.b16 %v2809
    %v3706 = vunpack.c.l.b16 %v2810
    %v3707 = vunpack.c.h.b16 %v2810
    %v3708 = vunpack.c.l.b16 %v2811
    %v3709 = vunpack.c.h.b16 %v2811
    %v3710 = vunpack.c.l.b16 %v2812
    %v3711 = vunpack.c.h.b16 %v2812
    %v3712 = vunpack.c.l.b16 %v2813
    %v3713 = vunpack.c.h.b16 %v2813
    %v3714 = vunpack.c.l.b16 %v2814
    %v3715 = vunpack.c.h.b16 %v2814
    %v3716 = vunpack.c.l.b16 %v2815
    %v3717 = vunpack.c.h.b16 %v2815
    %v3718 = vunpack.c.l.b16 %v2816
    %v3719 = vunpack.c.h.b16 %v2816
    %v3720 = vunpack.c.l.b16 %v2817
    %v3721 = vunpack.c.h.b16 %v2817
    %v3722 = vunpack.c.l.b16 %v2818
    %v3723 = vunpack.c.h.b16 %v2818
    %v3724 = vunpack.c.l.b16 %v2819
    %v3725 = vunpack.c.h.b16 %v2819
    %v3726 = vunpack.c.l.b16 %v2820
    %v3727 = vunpack.c.h.b16 %v2820
    %v3728 = vunpack.c.l.b16 %v2821
    %v3729 = vunpack.c.h.b16 %v2821
    %v3730 = vunpack.c.l.b16 %v2822
    %v3731 = vunpack.c.h.b16 %v2822
    %v3732 = vunpack.c.l.b16 %v2823
    %v3733 = vunpack.c.h.b16 %v2823
    %v3734 = vunpack.c.l.b16 %v2824
    %v3735 = vunpack.c.h.b16 %v2824
    %v3736 = vunpack.c.l.b16 %v2825
    %v3737 = vunpack.c.h.b16 %v2825
    %v3738 = vunpack.c.l.b16 %v2826
    %v3739 = vunpack.c.h.b16 %v2826
    %v3740 = vunpack.c.l.b16 %v2827
    %v3741 = vunpack.c.h.b16 %v2827
    %v3742 = vunpack.c.l.b16 %v2828
    %v3743 = vunpack.c.h.b16 %v2828
    %v3744 = vunpack.c.l.b16 %v2829
    %v3745 = vunpack.c.h.b16 %v2829
    %v3746 = vunpack.c.l.b16 %v2830
    %v3747 = vunpack.c.h.b16 %v2830
    %v3748 = vunpack.c.l.b16 %v2831
    %v3749 = vunpack.c.h.b16 %v2831
    %v3750 = vunpack.c.l.b16 %v2832
    %v3751 = vunpack.c.h.b16 %v2832
    %v3752 = vunpack.c.l.b16 %v2833
    %v3753 = vunpack.c.h.b16 %v2833
    %v3754 = vunpack.c.l.b16 %v2834
    %v3755 = vunpack.c.h.b16 %v2834
    %v3756 = vunpack.c.l.b16 %v2835
    %v3757 = vunpack.c.h.b16 %v2835
    %v3758 = vunpack.c.l.b16 %v2836
    %v3759 = vunpack.c.h.b16 %v2836
    %v3760 = vunpack.c.l.b16 %v2837
    %v3761 = vunpack.c.h.b16 %v2837
    %v3762 = vunpack.c.l.b16 %v2838
    %v3763 = vunpack.c.h.b16 %v2838
    %v3764 = vunpack.c.l.b16 %v2839
    %v3765 = vunpack.c.h.b16 %v2839
    %v3766 = vunpack.c.l.b16 %v2840
    %v3767 = vunpack.c.h.b16 %v2840
    %v3768 = vunpack.c.l.b16 %v2841
    %v3769 = vunpack.c.h.b16 %v2841
    %v3770 = vunpack.c.l.b16 %v2842
    %v3771 = vunpack.c.h.b16 %v2842
    %v3772 = vunpack.c.l.b16 %v2843
    %v3773 = vunpack.c.h.b16 %v2843
    %v3774 = vunpack.c.l.b16 %v2844
    %v3775 = vunpack.c.h.b16 %v2844
    %v3776 = vunpack.c.l.b16 %v2845
    %v3777 = vunpack.c.h.b16 %v2845
    %v3778 = vunpack.c.l.b16 %v2846
    %v3779 = vunpack.c.h.b16 %v2846
    %v3780 = vunpack.c.l.b16 %v2847
    %v3781 = vunpack.c.h.b16 %v2847
    %v3782 = vunpack.c.l.b16 %v2848
    %v3783 = vunpack.c.h.b16 %v2848
    %v3784 = vunpack.c.l.b16 %v2849
    %v3785 = vunpack.c.h.b16 %v2849
    %v3786 = vunpack.c.l.b16 %v2850
    %v3787 = vunpack.c.h.b16 %v2850
    %v3788 = vunpack.c.l.b16 %v2851
    %v3789 = vunpack.c.h.b16 %v2851
    %v3790 = vunpack.c.l.b16 %v2852
    %v3791 = vunpack.c.h.b16 %v2852
    %v3792 = vunpack.c.l.b16 %v2853
    %v3793 = vunpack.c.h.b16 %v2853
    %v3794 = vunpack.c.l.b16 %v2854
    %v3795 = vunpack.c.h.b16 %v2854
    %v3796 = vunpack.c.l.b16 %v2855
    %v3797 = vunpack.c.h.b16 %v2855
    %v3798 = vunpack.c.l.b16 %v2856
    %v3799 = vunpack.c.h.b16 %v2856
    %v3800 = vunpack.c.l.b16 %v2857
    %v3801 = vunpack.c.h.b16 %v2857
    %v3802 = vunpack.c.l.b16 %v2858
    %v3803 = vunpack.c.h.b16 %v2858
    %v3804 = vunpack.c.l.b16 %v2859
    %v3805 = vunpack.c.h.b16 %v2859
    %v3806 = vunpack.c.l.b16 %v2860
    %v3807 = vunpack.c.h.b16 %v2860
    %v3808 = vunpack.c.l.b16 %v2861
    %v3809 = vunpack.c.h.b16 %v2861
    %v3810 = vunpack.c.l.b16 %v2862
    %v3811 = vunpack.c.h.b16 %v2862
    %v3812 = vunpack.c.l.b16 %v2863
    %v3813 = vunpack.c.h.b16 %v2863
    %v3814 = vunpack.c.l.b16 %v2864
    %v3815 = vunpack.c.h.b16 %v2864
    %v3816 = vunpack.c.l.b16 %v2865
    %v3817 = vunpack.c.h.b16 %v2865
    %v3818 = vunpack.c.l.b16 %v2866
    %v3819 = vunpack.c.h.b16 %v2866
    %v3820 = vunpack.c.l.b16 %v2867
    %v3821 = vunpack.c.h.b16 %v2867
    %v3822 = vunpack.c.l.b16 %v2868
    %v3823 = vunpack.c.h.b16 %v2868
    %v3824 = vunpack.c.l.b16 %v2869
    %v3825 = vunpack.c.h.b16 %v2869
    %v3826 = vunpack.c.l.b16 %v2870
    %v3827 = vunpack.c.h.b16 %v2870
    %v3828 = vunpack.c.l.b16 %v2871
    %v3829 = vunpack.c.h.b16 %v2871
    %v3830 = vunpack.c.l.b16 %v2872
    %v3831 = vunpack.c.h.b16 %v2872
    %v3832 = vunpack.c.l.b16 %v2873
    %v3833 = vunpack.c.h.b16 %v2873
    %v3834 = vunpack.c.l.b16 %v2874
    %v3835 = vunpack.c.h.b16 %v2874
    %v3836 = vunpack.c.l.b16 %v2875
    %v3837 = vunpack.c.h.b16 %v2875
    %v3838 = vunpack.c.l.b16 %v2876
    %v3839 = vunpack.c.h.b16 %v2876
    %v3840 = vunpack.c.l.b16 %v2877
    %v3841 = vunpack.c.h.b16 %v2877
    %v3842 = vunpack.c.l.b16 %v2878
    %v3843 = vunpack.c.h.b16 %v2878
    %v3844 = vunpack.c.l.b16 %v2879
    %v3845 = vunpack.c.h.b16 %v2879
    %v3846 = vunpack.c.l.b16 %v2880
    %v3847 = vunpack.c.h.b16 %v2880
    %v3848 = vunpack.c.l.b16 %v2881
    %v3849 = vunpack.c.h.b16 %v2881
    %v3850 = vunpack.c.l.b16 %v2882
    %v3851 = vunpack.c.h.b16 %v2882
    %v3852 = vunpack.c.l.b16 %v2883
    %v3853 = vunpack.c.h.b16 %v2883
    %v3854 = vunpack.c.l.b16 %v2884
    %v3855 = vunpack.c.h.b16 %v2884
    %v3856 = vunpack.c.l.b16 %v2885
    %v3857 = vunpack.c.h.b16 %v2885
    %v3858 = vunpack.c.l.b16 %v2886
    %v3859 = vunpack.c.h.b16 %v2886
    %v3860 = vunpack.c.l.b16 %v2887
    %v3861 = vunpack.c.h.b16 %v2887
    %v3862 = vunpack.c.l.b16 %v2888
    %v3863 = vunpack.c.h.b16 %v2888
    %v3864 = vunpack.c.l.b16 %v2889
    %v3865 = vunpack.c.h.b16 %v2889
    %v3866 = vunpack.c.l.b16 %v2890
    %v3867 = vunpack.c.h.b16 %v2890
    %v3868 = vunpack.c.l.b16 %v2891
    %v3869 = vunpack.c.h.b16 %v2891
    %v3870 = vunpack.c.l.b16 %v2892
    %v3871 = vunpack.c.h.b16 %v2892
    %v3872 = vunpack.c.l.b16 %v2893
    %v3873 = vunpack.c.h.b16 %v2893
    %v3874 = vunpack.c.l.b16 %v2894
    %v3875 = vunpack.c.h.b16 %v2894
    %v3876 = vunpack.c.l.b16 %v2895
    %v3877 = vunpack.c.h.b16 %v2895
    %v3878 = vunpack.c.l.b16 %v2896
    %v3879 = vunpack.c.h.b16 %v2896
    %v3880 = vunpack.c.l.b16 %v2897
    %v3881 = vunpack.c.h.b16 %v2897
    %v3882 = vunpack.c.l.b16 %v2898
    %v3883 = vunpack.c.h.b16 %v2898
    %v3884 = vunpack.c.l.b16 %v2899
    %v3885 = vunpack.c.h.b16 %v2899
    %v3886 = vunpack.c.l.b16 %v2900
    %v3887 = vunpack.c.h.b16 %v2900
    %v3888 = vunpack.c.l.b16 %v2901
    %v3889 = vunpack.c.h.b16 %v2901
    %v3890 = vunpack.c.l.b16 %v2902
    %v3891 = vunpack.c.h.b16 %v2902
    %v3892 = vunpack.c.l.b16 %v2903
    %v3893 = vunpack.c.h.b16 %v2903
    %v3894 = vunpack.c.l.b16 %v2904
    %v3895 = vunpack.c.h.b16 %v2904
    %v3896 = vunpack.c.l.b16 %v2905
    %v3897 = vunpack.c.h.b16 %v2905
    %v3898 = vunpack.c.l.b16 %v2906
    %v3899 = vunpack.c.h.b16 %v2906
    %v3900 = vunpack.c.l.b16 %v2907
    %v3901 = vunpack.c.h.b16 %v2907
    %v3902 = vunpack.c.l.b16 %v2908
    %v3903 = vunpack.c.h.b16 %v2908
    %v3904 = vunpack.c.l.b16 %v2909
    %v3905 = vunpack.c.h.b16 %v2909
    %v3906 = vunpack.c.l.b16 %v2910
    %v3907 = vunpack.c.h.b16 %v2910
    %v3908 = vunpack.c.l.b16 %v2911
    %v3909 = vunpack.c.h.b16 %v2911
    %v3910 = vunpack.c.l.b16 %v2912
    %v3911 = vunpack.c.h.b16 %v2912
    %v3912 = vunpack.c.l.b16 %v2913
    %v3913 = vunpack.c.h.b16 %v2913
    %v3914 = vunpack.c.l.b16 %v2914
    %v3915 = vunpack.c.h.b16 %v2914
    %v3916 = vunpack.c.l.b16 %v2915
    %v3917 = vunpack.c.h.b16 %v2915
    %v3918 = vunpack.c.l.b16 %v2916
    %v3919 = vunpack.c.h.b16 %v2916
    %v3920 = vunpack.c.l.b16 %v2917
    %v3921 = vunpack.c.h.b16 %v2917
    %v3922 = vunpack.c.l.b16 %v2918
    %v3923 = vunpack.c.h.b16 %v2918
    %v3924 = vunpack.c.l.b16 %v2919
    %v3925 = vunpack.c.h.b16 %v2919
    %v3926 = vunpack.c.l.b16 %v2920
    %v3927 = vunpack.c.h.b16 %v2920
    %v3928 = vunpack.c.l.b16 %v2921
    %v3929 = vunpack.c.h.b16 %v2921
    %v3930 = vunpack.c.l.b16 %v2922
    %v3931 = vunpack.c.h.b16 %v2922
    %v3932 = vunpack.c.l.b16 %v2923
    %v3933 = vunpack.c.h.b16 %v2923
    %v3934 = vunpack.c.l.b16 %v2924
    %v3935 = vunpack.c.h.b16 %v2924
    %v3936 = vunpack.c.l.b16 %v2925
    %v3937 = vunpack.c.h.b16 %v2925
    %v3938 = vunpack.c.l.b16 %v2926
    %v3939 = vunpack.c.h.b16 %v2926
    %v3940 = vunpack.c.l.b16 %v2927
    %v3941 = vunpack.c.h.b16 %v2927
    %v3942 = vunpack.c.l.b16 %v2928
    %v3943 = vunpack.c.h.b16 %v2928
    %v3944 = vunpack.c.l.b16 %v2929
    %v3945 = vunpack.c.h.b16 %v2929
    %v3946 = vunpack.c.l.b16 %v2930
    %v3947 = vunpack.c.h.b16 %v2930
    %v3948 = vunpack.c.l.b16 %v2931
    %v3949 = vunpack.c.h.b16 %v2931
    %v3950 = vunpack.c.l.b16 %v2932
    %v3951 = vunpack.c.h.b16 %v2932
    %v3952 = vunpack.c.l.b16 %v2933
    %v3953 = vunpack.c.h.b16 %v2933
    %v3954 = vunpack.c.l.b16 %v2934
    %v3955 = vunpack.c.h.b16 %v2934
    %v3956 = vunpack.c.l.b16 %v2935
    %v3957 = vunpack.c.h.b16 %v2935
    %v3958 = vunpack.c.l.b16 %v2936
    %v3959 = vunpack.c.h.b16 %v2936
    %v3960 = vunpack.c.l.b16 %v2937
    %v3961 = vunpack.c.h.b16 %v2937
    %v3962 = vunpack.c.l.b16 %v2938
    %v3963 = vunpack.c.h.b16 %v2938
    %v3964 = vunpack.c.l.b16 %v2939
    %v3965 = vunpack.c.h.b16 %v2939
    %v3966 = vunpack.c.l.b16 %v2940
    %v3967 = vunpack.c.h.b16 %v2940
    %v3968 = vunpack.c.l.b16 %v2941
    %v3969 = vunpack.c.h.b16 %v2941
    %v3970 = vunpack.c.l.b16 %v2942
    %v3971 = vunpack.c.h.b16 %v2942
    %v3972 = vunpack.c.l.b16 %v2943
    %v3973 = vunpack.c.h.b16 %v2943
    %v3974 = vunpack.c.l.b16 %v2944
    %v3975 = vunpack.c.h.b16 %v2944
    %v3976 = vunpack.c.l.b16 %v2945
    %v3977 = vunpack.c.h.b16 %v2945
    %v3978 = vunpack.c.l.b16 %v2946
    %v3979 = vunpack.c.h.b16 %v2946
    %v3980 = vunpack.c.l.b16 %v2947
    %v3981 = vunpack.c.h.b16 %v2947
    %v3982 = vunpack.c.l.b16 %v2948
    %v3983 = vunpack.c.h.b16 %v2948
    %v3984 = vunpack.c.l.b16 %v2949
    %v3985 = vunpack.c.h.b16 %v2949
    %v3986 = vunpack.c.l.b16 %v2950
    %v3987 = vunpack.c.h.b16 %v2950
    %v3988 = vunpack.c.l.b16 %v2951
    %v3989 = vunpack.c.h.b16 %v2951
    %v3990 = vunpack.c.l.b16 %v2952
    %v3991 = vunpack.c.h.b16 %v2952
    %v3992 = vunpack.c.l.b16 %v2953
    %v3993 = vunpack.c.h.b16 %v2953
    %v3994 = vunpack.c.l.b16 %v2954
    %v3995 = vunpack.c.h.b16 %v2954
    %v3996 = vunpack.c.l.b16 %v2955
    %v3997 = vunpack.c.h.b16 %v2955
    %v3998 = vunpack.c.l.b16 %v2956
    %v3999 = vunpack.c.h.b16 %v2956
    %v4000 = vunpack.c.l.b16 %v2957
    %v4001 = vunpack.c.h.b16 %v2957
    %v4002 = vunpack.c.l.b16 %v2958
    %v4003 = vunpack.c.h.b16 %v2958
    %v4004 = vunpack.c.l.b16 %v2959
    %v4005 = vunpack.c.h.b16 %v2959
    %v4006 = vunpack.c.l.b16 %v2960
    %v4007 = vunpack.c.h.b16 %v2960
    %v4008 = vunpack.c.l.b16 %v2961
    %v4009 = vunpack.c.h.b16 %v2961
    %v4010 = vunpack.c.l.b16 %v2962
    %v4011 = vunpack.c.h.b16 %v2962
    %v4012 = vunpack.c.l.b16 %v2963
    %v4013 = vunpack.c.h.b16 %v2963
    %v4014 = vunpack.c.l.b16 %v2964
    %v4015 = vunpack.c.h.b16 %v2964
    %v4016 = vunpack.c.l.b16 %v2965
    %v4017 = vunpack.c.h.b16 %v2965
    %v4018 = vunpack.c.l.b16 %v2966
    %v4019 = vunpack.c.h.b16 %v2966
    %v4020 = vunpack.c.l.b16 %v2967
    %v4021 = vunpack.c.h.b16 %v2967
    %v4022 = vunpack.c.l.b16 %v2968
    %v4023 = vunpack.c.h.b16 %v2968
    %v4024 = vunpack.c.l.b16 %v2969
    %v4025 = vunpack.c.h.b16 %v2969
    %v4026 = vunpack.c.l.b16 %v2970
    %v4027 = vunpack.c.h.b16 %v2970
    %v4028 = vunpack.c.l.b16 %v2971
    %v4029 = vunpack.c.h.b16 %v2971
    %v4030 = vunpack.c.l.b16 %v2972
    %v4031 = vunpack.c.h.b16 %v2972
    %v4032 = vunpack.c.l.b16 %v2973
    %v4033 = vunpack.c.h.b16 %v2973
    %v4034 = vunpack.c.l.b16 %v2974
    %v4035 = vunpack.c.h.b16 %v2974
    %v4036 = vunpack.c.l.b16 %v2975
    %v4037 = vunpack.c.h.b16 %v2975
    %v4038 = vunpack.c.l.b16 %v2976
    %v4039 = vunpack.c.h.b16 %v2976
    %v4040 = vunpack.c.l.b16 %v2977
    %v4041 = vunpack.c.h.b16 %v2977
    %v4042 = vunpack.c.l.b16 %v2978
    %v4043 = vunpack.c.h.b16 %v2978
    %v4044 = vunpack.c.l.b16 %v2979
    %v4045 = vunpack.c.h.b16 %v2979
    %v4046 = vunpack.c.l.b16 %v2980
    %v4047 = vunpack.c.h.b16 %v2980
    %v4048 = vunpack.c.l.b16 %v2981
    %v4049 = vunpack.c.h.b16 %v2981
    %v4050 = vunpack.c.l.b16 %v2982
    %v4051 = vunpack.c.h.b16 %v2982
    %v4052 = vunpack.c.l.b16 %v2983
    %v4053 = vunpack.c.h.b16 %v2983
    %v4054 = vunpack.c.l.b16 %v2984
    %v4055 = vunpack.c.h.b16 %v2984
    %v4056 = vunpack.c.l.b16 %v2985
    %v4057 = vunpack.c.h.b16 %v2985
    %v4058 = vunpack.c.l.b16 %v2986
    %v4059 = vunpack.c.h.b16 %v2986
    %v4060 = vunpack.c.l.b16 %v2987
    %v4061 = vunpack.c.h.b16 %v2987
    %v4062 = vunpack.c.l.b16 %v2988
    %v4063 = vunpack.c.h.b16 %v2988
    %v4064 = vunpack.c.l.b16 %v2989
    %v4065 = vunpack.c.h.b16 %v2989
    %v4066 = vunpack.c.l.b16 %v2990
    %v4067 = vunpack.c.h.b16 %v2990
    %v4068 = vunpack.c.l.b16 %v2991
    %v4069 = vunpack.c.h.b16 %v2991
    %v4070 = vunpack.c.l.b16 %v2992
    %v4071 = vunpack.c.h.b16 %v2992
    %v4072 = vunpack.c.l.b16 %v2993
    %v4073 = vunpack.c.h.b16 %v2993
    %v4074 = vunpack.c.l.b16 %v2994
    %v4075 = vunpack.c.h.b16 %v2994
    %v4076 = vunpack.c.l.b16 %v2995
    %v4077 = vunpack.c.h.b16 %v2995
    %v4078 = vunpack.c.l.b16 %v2996
    %v4079 = vunpack.c.h.b16 %v2996
    %v4080 = vunpack.c.l.b16 %v2997
    %v4081 = vunpack.c.h.b16 %v2997
    %v4082 = vunpack.c.l.b16 %v2998
    %v4083 = vunpack.c.h.b16 %v2998
    %v4084 = vunpack.c.l.b16 %v2999
    %v4085 = vunpack.c.h.b16 %v2999
    %v4086 = vunpack.c.l.b16 %v3000
    %v4087 = vunpack.c.h.b16 %v3000
    %v4088 = vunpack.c.l.b16 %v3001
    %v4089 = vunpack.c.h.b16 %v3001
    %v4090 = vunpack.c.l.b16 %v3002
    %v4091 = vunpack.c.h.b16 %v3002
    %v4092 = vunpack.c.l.b16 %v3003
    %v4093 = vunpack.c.h.b16 %v3003
    %v4094 = vunpack.c.l.b16 %v3004
    %v4095 = vunpack.c.h.b16 %v3004
    %v4096 = vunpack.c.l.b16 %v3005
    %v4097 = vunpack.c.h.b16 %v3005
    %v4098 = vunpack.c.l.b16 %v3006
    %v4099 = vunpack.c.h.b16 %v3006
    %v4100 = vunpack.c.l.b16 %v3007
    %v4101 = vunpack.c.h.b16 %v3007
    %v4102 = vunpack.c.l.b16 %v3008
    %v4103 = vunpack.c.h.b16 %v3008
    %v4104 = vunpack.c.l.b16 %v3009
    %v4105 = vunpack.c.h.b16 %v3009
    %v4106 = vunpack.c.l.b16 %v3010
    %v4107 = vunpack.c.h.b16 %v3010
    %v4108 = vunpack.c.l.b16 %v3011
    %v4109 = vunpack.c.h.b16 %v3011
    %v4110 = vunpack.c.l.b16 %v3012
    %v4111 = vunpack.c.h.b16 %v3012
    %v4112 = vunpack.c.l.b16 %v3013
    %v4113 = vunpack.c.h.b16 %v3013
    %v4114 = vunpack.c.l.b16 %v3014
    %v4115 = vunpack.c.h.b16 %v3014
    %v4116 = vunpack.c.l.b16 %v3015
    %v4117 = vunpack.c.h.b16 %v3015
    %v4118 = vunpack.c.l.b16 %v3016
    %v4119 = vunpack.c.h.b16 %v3016
    %v4120 = vunpack.c.l.b16 %v3017
    %v4121 = vunpack.c.h.b16 %v3017
    %v4122 = vunpack.c.l.b16 %v3018
    %v4123 = vunpack.c.h.b16 %v3018
    %v4124 = vunpack.c.l.b16 %v3019
    %v4125 = vunpack.c.h.b16 %v3019
    %v4126 = vunpack.c.l.b16 %v3020
    %v4127 = vunpack.c.h.b16 %v3020
    %v4128 = vunpack.c.l.b16 %v3021
    %v4129 = vunpack.c.h.b16 %v3021
    %v4130 = vunpack.c.l.b16 %v3022
    %v4131 = vunpack.c.h.b16 %v3022
    %v4132 = vunpack.c.l.b16 %v3023
    %v4133 = vunpack.c.h.b16 %v3023
    %v4134 = vunpack.c.l.b16 %v3024
    %v4135 = vunpack.c.h.b16 %v3024
    %v4136 = vunpack.c.l.b16 %v3025
    %v4137 = vunpack.c.h.b16 %v3025
    %v4138 = vunpack.c.l.b16 %v3026
    %v4139 = vunpack.c.h.b16 %v3026
    %v4140 = vunpack.c.l.b16 %v3027
    %v4141 = vunpack.c.h.b16 %v3027
    %v4142 = vunpack.c.l.b16 %v3028
    %v4143 = vunpack.c.h.b16 %v3028
    %v4144 = vunpack.c.l.b16 %v3029
    %v4145 = vunpack.c.h.b16 %v3029
    %v4146 = vunpack.c.l.b16 %v3030
    %v4147 = vunpack.c.h.b16 %v3030
    %v4148 = vunpack.c.l.b16 %v3031
    %v4149 = vunpack.c.h.b16 %v3031
    %v4150 = vunpack.c.l.b16 %v3032
    %v4151 = vunpack.c.h.b16 %v3032
    %v4152 = vunpack.c.l.b16 %v3033
    %v4153 = vunpack.c.h.b16 %v3033
    %v4154 = vunpack.c.l.b16 %v3034
    %v4155 = vunpack.c.h.b16 %v3034
    %v4156 = vunpack.c.l.b16 %v3035
    %v4157 = vunpack.c.h.b16 %v3035
    %v4158 = vunpack.c.l.b16 %v3036
    %v4159 = vunpack.c.h.b16 %v3036
    %v4160 = vunpack.c.l.b16 %v3037
    %v4161 = vunpack.c.h.b16 %v3037
    %v4162 = vunpack.c.l.b16 %v3038
    %v4163 = vunpack.c.h.b16 %v3038
    %v4164 = vunpack.c.l.b16 %v3039
    %v4165 = vunpack.c.h.b16 %v3039
    %v4166 = vunpack.c.l.b16 %v3040
    %v4167 = vunpack.c.h.b16 %v3040
    %v4168 = vunpack.c.l.b16 %v3041
    %v4169 = vunpack.c.h.b16 %v3041
    %v4170 = vunpack.c.l.b16 %v3042
    %v4171 = vunpack.c.h.b16 %v3042
    %v4172 = vunpack.c.l.b16 %v3043
    %v4173 = vunpack.c.h.b16 %v3043
    %v4174 = vunpack.c.l.b16 %v3044
    %v4175 = vunpack.c.h.b16 %v3044
    %v4176 = vunpack.c.l.b16 %v3045
    %v4177 = vunpack.c.h.b16 %v3045
    %v4178 = vunpack.c.l.b16 %v3046
    %v4179 = vunpack.c.h.b16 %v3046
    %v4180 = vunpack.c.l.b16 %v3047
    %v4181 = vunpack.c.h.b16 %v3047
    %v4182 = vunpack.c.l.b16 %v3048
    %v4183 = vunpack.c.h.b16 %v3048
    %v4184 = vunpack.c.l.b16 %v3049
    %v4185 = vunpack.c.h.b16 %v3049
    %v4186 = vunpack.c.l.b16 %v3050
    %v4187 = vunpack.c.h.b16 %v3050
    %v4188 = vunpack.c.l.b16 %v3051
    %v4189 = vunpack.c.h.b16 %v3051
    %v4190 = vunpack.c.l.b16 %v3052
    %v4191 = vunpack.c.h.b16 %v3052
    %v4192 = vunpack.c.l.b16 %v3053
    %v4193 = vunpack.c.h.b16 %v3053
    %v4194 = vunpack.c.l.b16 %v3054
    %v4195 = vunpack.c.h.b16 %v3054
    %v4196 = vunpack.c.l.b16 %v3055
    %v4197 = vunpack.c.h.b16 %v3055
    %v4198 = vunpack.c.l.b16 %v3056
    %v4199 = vunpack.c.h.b16 %v3056
    %v4200 = vunpack.c.l.b16 %v3057
    %v4201 = vunpack.c.h.b16 %v3057
    %v4202 = vunpack.c.l.b16 %v3058
    %v4203 = vunpack.c.h.b16 %v3058
    %v4204 = vunpack.c.l.b16 %v3059
    %v4205 = vunpack.c.h.b16 %v3059
    %v4206 = vunpack.c.l.b16 %v3060
    %v4207 = vunpack.c.h.b16 %v3060
    %v4208 = vunpack.c.l.b16 %v3061
    %v4209 = vunpack.c.h.b16 %v3061
    %v4210 = vunpack.c.l.b16 %v3062
    %v4211 = vunpack.c.h.b16 %v3062
    %v4212 = vunpack.c.l.b16 %v3063
    %v4213 = vunpack.c.h.b16 %v3063
    %v4214 = vunpack.c.l.b16 %v3064
    %v4215 = vunpack.c.h.b16 %v3064
    %v4216 = vunpack.c.l.b16 %v3065
    %v4217 = vunpack.c.h.b16 %v3065
    %v4218 = vunpack.c.l.b16 %v3066
    %v4219 = vunpack.c.h.b16 %v3066
    %v4220 = vunpack.c.l.b16 %v3067
    %v4221 = vunpack.c.h.b16 %v3067
    %v4222 = vunpack.c.l.b16 %v3068
    %v4223 = vunpack.c.h.b16 %v3068
    %v4224 = vunpack.c.l.b16 %v3069
    %v4225 = vunpack.c.h.b16 %v3069
    %v4226 = vunpack.c.l.b16 %v3070
    %v4227 = vunpack.c.h.b16 %v3070
    %v4228 = vunpack.c.l.b16 %v3071
    %v4229 = vunpack.c.h.b16 %v3071
    %v4230 = vunpack.c.l.b16 %v3072
    %v4231 = vunpack.c.h.b16 %v3072
    %v4232 = vunpack.c.l.b16 %v3073
    %v4233 = vunpack.c.h.b16 %v3073
    %v4234 = vunpack.c.l.b16 %v3074
    %v4235 = vunpack.c.h.b16 %v3074
    %v4236 = vunpack.c.l.b16 %v3075
    %v4237 = vunpack.c.h.b16 %v3075
    %v4238 = vunpack.c.l.b16 %v3076
    %v4239 = vunpack.c.h.b16 %v3076
    %v4240 = vunpack.c.l.b16 %v3077
    %v4241 = vunpack.c.h.b16 %v3077
    %v4242 = vunpack.c.l.b16 %v3078
    %v4243 = vunpack.c.h.b16 %v3078
    %v4244 = vunpack.c.l.b16 %v3079
    %v4245 = vunpack.c.h.b16 %v3079
    %v4246 = vunpack.c.l.b16 %v3080
    %v4247 = vunpack.c.h.b16 %v3080
    %v4248 = vunpack.c.l.b16 %v3081
    %v4249 = vunpack.c.h.b16 %v3081
    %v4250 = vunpack.c.l.b16 %v3082
    %v4251 = vunpack.c.h.b16 %v3082
    %v4252 = vunpack.c.l.b16 %v3083
    %v4253 = vunpack.c.h.b16 %v3083
    %v4254 = vunpack.c.l.b16 %v3084
    %v4255 = vunpack.c.h.b16 %v3084
    %v4256 = vunpack.c.l.b16 %v3085
    %v4257 = vunpack.c.h.b16 %v3085
    %v4258 = vunpack.c.l.b16 %v3086
    %v4259 = vunpack.c.h.b16 %v3086
    %v4260 = vunpack.c.l.b16 %v3087
    %v4261 = vunpack.c.h.b16 %v3087
    %v4262 = vunpack.c.l.b16 %v3088
    %v4263 = vunpack.c.h.b16 %v3088
    %v4264 = vunpack.c.l.b16 %v3089
    %v4265 = vunpack.c.h.b16 %v3089
    %v4266 = vunpack.c.l.b16 %v3090
    %v4267 = vunpack.c.h.b16 %v3090
    %v4268 = vunpack.c.l.b16 %v3091
    %v4269 = vunpack.c.h.b16 %v3091
    %v4270 = vunpack.c.l.b16 %v3092
    %v4271 = vunpack.c.h.b16 %v3092
    %v4272 = vunpack.c.l.b16 %v3093
    %v4273 = vunpack.c.h.b16 %v3093
    %v4274 = vunpack.c.l.b16 %v3094
    %v4275 = vunpack.c.h.b16 %v3094
    %v4276 = vunpack.c.l.b16 %v3095
    %v4277 = vunpack.c.h.b16 %v3095
    %v4278 = vunpack.c.l.b16 %v3096
    %v4279 = vunpack.c.h.b16 %v3096
    %v4280 = vunpack.c.l.b16 %v3097
    %v4281 = vunpack.c.h.b16 %v3097
    %v4282 = vpack.c.b16 %v3520, %v3514
    %v4283 = vpack.c.b16 %v3521, %v3515
    %v4284 = vpack.c.b16 %v3522, %v3516
    %v4285 = vpack.c.b16 %v3523, %v3517
    %v4286 = vpack.c.b16 %v3524, %v3518
    %v4287 = vpack.c.b16 %v3525, %v3519
    %v4288 = vpack.c.b16 %v3532, %v3526
    %v4289 = vpack.c.b16 %v3533, %v3527
    %v4290 = vpack.c.b16 %v3534, %v3528
    %v4291 = vpack.c.b16 %v3535, %v3529
    %v4292 = vpack.c.b16 %v3536, %v3530
    %v4293 = vpack.c.b16 %v3537, %v3531
    %v4294 = vpack.c.b16 %v3544, %v3538
    %v4295 = vpack.c.b16 %v3545, %v3539
    %v4296 = vpack.c.b16 %v3546, %v3540
    %v4297 = vpack.c.b16 %v3547, %v3541
    %v4298 = vpack.c.b16 %v3548, %v3542
    %v4299 = vpack.c.b16 %v3549, %v3543
    %v4300 = vpack.c.b16 %v3556, %v3550
    %v4301 = vpack.c.b16 %v3557, %v3551
    %v4302 = vpack.c.b16 %v3558, %v3552
    %v4303 = vpack.c.b16 %v3559, %v3553
    %v4304 = vpack.c.b16 %v3560, %v3554
    %v4305 = vpack.c.b16 %v3561, %v3555
    %v4306 = vpack.c.b16 %v3568, %v3562
    %v4307 = vpack.c.b16 %v3569, %v3563
    %v4308 = vpack.c.b16 %v3570, %v3564
    %v4309 = vpack.c.b16 %v3571, %v3565
    %v4310 = vpack.c.b16 %v3572, %v3566
    %v4311 = vpack.c.b16 %v3573, %v3567
    %v4312 = vpack.c.b16 %v3580, %v3574
    %v4313 = vpack.c.b16 %v3581, %v3575
    %v4314 = vpack.c.b16 %v3582, %v3576
    %v4315 = vpack.c.b16 %v3583, %v3577
    %v4316 = vpack.c.b16 %v3584, %v3578
    %v4317 = vpack.c.b16 %v3585, %v3579
    %v4318 = vpack.c.b16 %v3592, %v3586
    %v4319 = vpack.c.b16 %v3593, %v3587
    %v4320 = vpack.c.b16 %v3594, %v3588
    %v4321 = vpack.c.b16 %v3595, %v3589
    %v4322 = vpack.c.b16 %v3596, %v3590
    %v4323 = vpack.c.b16 %v3597, %v3591
    %v4324 = vpack.c.b16 %v3604, %v3598
    %v4325 = vpack.c.b16 %v3605, %v3599
    %v4326 = vpack.c.b16 %v3606, %v3600
    %v4327 = vpack.c.b16 %v3607, %v3601
    %v4328 = vpack.c.b16 %v3608, %v3602
    %v4329 = vpack.c.b16 %v3609, %v3603
    %v4330 = vpack.c.b16 %v3616, %v3610
    %v4331 = vpack.c.b16 %v3617, %v3611
    %v4332 = vpack.c.b16 %v3618, %v3612
    %v4333 = vpack.c.b16 %v3619, %v3613
    %v4334 = vpack.c.b16 %v3620, %v3614
    %v4335 = vpack.c.b16 %v3621, %v3615
    %v4336 = vpack.c.b16 %v3628, %v3622
    %v4337 = vpack.c.b16 %v3629, %v3623
    %v4338 = vpack.c.b16 %v3630, %v3624
    %v4339 = vpack.c.b16 %v3631, %v3625
    %v4340 = vpack.c.b16 %v3632, %v3626
    %v4341 = vpack.c.b16 %v3633, %v3627
    %v4342 = vpack.c.b16 %v3640, %v3634
    %v4343 = vpack.c.b16 %v3641, %v3635
    %v4344 = vpack.c.b16 %v3642, %v3636
    %v4345 = vpack.c.b16 %v3643, %v3637
    %v4346 = vpack.c.b16 %v3644, %v3638
    %v4347 = vpack.c.b16 %v3645, %v3639
    %v4348 = vpack.c.b16 %v3652, %v3646
    %v4349 = vpack.c.b16 %v3653, %v3647
    %v4350 = vpack.c.b16 %v3654, %v3648
    %v4351 = vpack.c.b16 %v3655, %v3649
    %v4352 = vpack.c.b16 %v3656, %v3650
    %v4353 = vpack.c.b16 %v3657, %v3651
    %v4354 = vpack.c.b16 %v3664, %v3658
    %v4355 = vpack.c.b16 %v3665, %v3659
    %v4356 = vpack.c.b16 %v3666, %v3660
    %v4357 = vpack.c.b16 %v3667, %v3661
    %v4358 = vpack.c.b16 %v3668, %v3662
    %v4359 = vpack.c.b16 %v3669, %v3663
    %v4360 = vpack.c.b16 %v3676, %v3670
    %v4361 = vpack.c.b16 %v3677, %v3671
    %v4362 = vpack.c.b16 %v3678, %v3672
    %v4363 = vpack.c.b16 %v3679, %v3673
    %v4364 = vpack.c.b16 %v3680, %v3674
    %v4365 = vpack.c.b16 %v3681, %v3675
    %v4366 = vpack.c.b16 %v3688, %v3682
    %v4367 = vpack.c.b16 %v3689, %v3683
    %v4368 = vpack.c.b16 %v3690, %v3684
    %v4369 = vpack.c.b16 %v3691, %v3685
    %v4370 = vpack.c.b16 %v3692, %v3686
    %v4371 = vpack.c.b16 %v3693, %v3687
    %v4372 = vpack.c.b16 %v3700, %v3694
    %v4373 = vpack.c.b16 %v3701, %v3695
    %v4374 = vpack.c.b16 %v3702, %v3696
    %v4375 = vpack.c.b16 %v3703, %v3697
    %v4376 = vpack.c.b16 %v3704, %v3698
    %v4377 = vpack.c.b16 %v3705, %v3699
    %v4378 = vpack.c.b16 %v3712, %v3706
    %v4379 = vpack.c.b16 %v3713, %v3707
    %v4380 = vpack.c.b16 %v3714, %v3708
    %v4381 = vpack.c.b16 %v3715, %v3709
    %v4382 = vpack.c.b16 %v3716, %v3710
    %v4383 = vpack.c.b16 %v3717, %v3711
    %v4384 = vpack.c.b16 %v3724, %v3718
    %v4385 = vpack.c.b16 %v3725, %v3719
    %v4386 = vpack.c.b16 %v3726, %v3720
    %v4387 = vpack.c.b16 %v3727, %v3721
    %v4388 = vpack.c.b16 %v3728, %v3722
    %v4389 = vpack.c.b16 %v3729, %v3723
    %v4390 = vpack.c.b16 %v3736, %v3730
    %v4391 = vpack.c.b16 %v3737, %v3731
    %v4392 = vpack.c.b16 %v3738, %v3732
    %v4393 = vpack.c.b16 %v3739, %v3733
    %v4394 = vpack.c.b16 %v3740, %v3734
    %v4395 = vpack.c.b16 %v3741, %v3735
    %v4396 = vpack.c.b16 %v3748, %v3742
    %v4397 = vpack.c.b16 %v3749, %v3743
    %v4398 = vpack.c.b16 %v3750, %v3744
    %v4399 = vpack.c.b16 %v3751, %v3745
    %v4400 = vpack.c.b16 %v3752, %v3746
    %v4401 = vpack.c.b16 %v3753, %v3747
    %v4402 = vpack.c.b16 %v3760, %v3754
    %v4403 = vpack.c.b16 %v3761, %v3755
    %v4404 = vpack.c.b16 %v3762, %v3756
    %v4405 = vpack.c.b16 %v3763, %v3757
    %v4406 = vpack.c.b16 %v3764, %v3758
    %v4407 = vpack.c.b16 %v3765, %v3759
    %v4408 = vpack.c.b16 %v3772, %v3766
    %v4409 = vpack.c.b16 %v3773, %v3767
    %v4410 = vpack.c.b16 %v3774, %v3768
    %v4411 = vpack.c.b16 %v3775, %v3769
    %v4412 = vpack.c.b16 %v3776, %v3770
    %v4413 = vpack.c.b16 %v3777, %v3771
    %v4414 = vpack.c.b16 %v3784, %v3778
    %v4415 = vpack.c.b16 %v3785, %v3779
    %v4416 = vpack.c.b16 %v3786, %v3780
    %v4417 = vpack.c.b16 %v3787, %v3781
    %v4418 = vpack.c.b16 %v3788, %v3782
    %v4419 = vpack.c.b16 %v3789, %v3783
    %v4420 = vpack.c.b16 %v3796, %v3790
    %v4421 = vpack.c.b16 %v3797, %v3791
    %v4422 = vpack.c.b16 %v3798, %v3792
    %v4423 = vpack.c.b16 %v3799, %v3793
    %v4424 = vpack.c.b16 %v3800, %v3794
    %v4425 = vpack.c.b16 %v3801, %v3795
    %v4426 = vpack.c.b16 %v3808, %v3802
    %v4427 = vpack.c.b16 %v3809, %v3803
    %v4428 = vpack.c.b16 %v3810, %v3804
    %v4429 = vpack.c.b16 %v3811, %v3805
    %v4430 = vpack.c.b16 %v3812, %v3806
    %v4431 = vpack.c.b16 %v3813, %v3807
    %v4432 = vpack.c.b16 %v3820, %v3814
    %v4433 = vpack.c.b16 %v3821, %v3815
    %v4434 = vpack.c.b16 %v3822, %v3816
    %v4435 = vpack.c.b16 %v3823, %v3817
    %v4436 = vpack.c.b16 %v3824, %v3818
    %v4437 = vpack.c.b16 %v3825, %v3819
    %v4438 = vpack.c.b16 %v3832, %v3826
    %v4439 = vpack.c.b16 %v3833, %v3827
    %v4440 = vpack.c.b16 %v3834, %v3828
    %v4441 = vpack.c.b16 %v3835, %v3829
    %v4442 = vpack.c.b16 %v3836, %v3830
    %v4443 = vpack.c.b16 %v3837, %v3831
    %v4444 = vpack.c.b16 %v3844, %v3838
    %v4445 = vpack.c.b16 %v3845, %v3839
    %v4446 = vpack.c.b16 %v3846, %v3840
    %v4447 = vpack.c.b16 %v3847, %v3841
    %v4448 = vpack.c.b16 %v3848, %v3842
    %v4449 = vpack.c.b16 %v3849, %v3843
    %v4450 = vpack.c.b16 %v3856, %v3850
    %v4451 = vpack.c.b16 %v3857, %v3851
    %v4452 = vpack.c.b16 %v3858, %v3852
    %v4453 = vpack.c.b16 %v3859, %v3853
    %v4454 = vpack.c.b16 %v3860, %v3854
    %v4455 = vpack.c.b16 %v3861, %v3855
    %v4456 = vpack.c.b16 %v3868, %v3862
    %v4457 = vpack.c.b16 %v3869, %v3863
    %v4458 = vpack.c.b16 %v3870, %v3864
    %v4459 = vpack.c.b16 %v3871, %v3865
    %v4460 = vpack.c.b16 %v3872, %v3866
    %v4461 = vpack.c.b16 %v3873, %v3867
    %v4462 = vpack.c.b16 %v3880, %v3874
    %v4463 = vpack.c.b16 %v3881, %v3875
    %v4464 = vpack.c.b16 %v3882, %v3876
    %v4465 = vpack.c.b16 %v3883, %v3877
    %v4466 = vpack.c.b16 %v3884, %v3878
    %v4467 = vpack.c.b16 %v3885, %v3879
    %v4468 = vpack.c.b16 %v3892, %v3886
    %v4469 = vpack.c.b16 %v3893, %v3887
    %v4470 = vpack.c.b16 %v3894, %v3888
    %v4471 = vpack.c.b16 %v3895, %v3889
    %v4472 = vpack.c.b16 %v3896, %v3890
    %v4473 = vpack.c.b16 %v3897, %v3891
    %v4474 = vpack.c.b16 %v3904, %v3898
    %v4475 = vpack.c.b16 %v3905, %v3899
    %v4476 = vpack.c.b16 %v3906, %v3900
    %v4477 = vpack.c.b16 %v3907, %v3901
    %v4478 = vpack.c.b16 %v3908, %v3902
    %v4479 = vpack.c.b16 %v3909, %v3903
    %v4480 = vpack.c.b16 %v3916, %v3910
    %v4481 = vpack.c.b16 %v3917, %v3911
    %v4482 = vpack.c.b16 %v3918, %v3912
    %v4483 = vpack.c.b16 %v3919, %v3913
    %v4484 = vpack.c.b16 %v3920, %v3914
    %v4485 = vpack.c.b16 %v3921, %v3915
    %v4486 = vpack.c.b16 %v3928, %v3922
    %v4487 = vpack.c.b16 %v3929, %v3923
    %v4488 = vpack.c.b16 %v3930, %v3924
    %v4489 = vpack.c.b16 %v3931, %v3925
    %v4490 = vpack.c.b16 %v3932, %v3926
    %v4491 = vpack.c.b16 %v3933, %v3927
    %v4492 = vpack.c.b16 %v3940, %v3934
    %v4493 = vpack.c.b16 %v3941, %v3935
    %v4494 = vpack.c.b16 %v3942, %v3936
    %v4495 = vpack.c.b16 %v3943, %v3937
    %v4496 = vpack.c.b16 %v3944, %v3938
    %v4497 = vpack.c.b16 %v3945, %v3939
    %v4498 = vpack.c.b16 %v3952, %v3946
    %v4499 = vpack.c.b16 %v3953, %v3947
    %v4500 = vpack.c.b16 %v3954, %v3948
    %v4501 = vpack.c.b16 %v3955, %v3949
    %v4502 = vpack.c.b16 %v3956, %v3950
    %v4503 = vpack.c.b16 %v3957, %v3951
    %v4504 = vpack.c.b16 %v3964, %v3958
    %v4505 = vpack.c.b16 %v3965, %v3959
    %v4506 = vpack.c.b16 %v3966, %v3960
    %v4507 = vpack.c.b16 %v3967, %v3961
    %v4508 = vpack.c.b16 %v3968, %v3962
    %v4509 = vpack.c.b16 %v3969, %v3963
    %v4510 = vpack.c.b16 %v3976, %v3970
    %v4511 = vpack.c.b16 %v3977, %v3971
    %v4512 = vpack.c.b16 %v3978, %v3972
    %v4513 = vpack.c.b16 %v3979, %v3973
    %v4514 = vpack.c.b16 %v3980, %v3974
    %v4515 = vpack.c.b16 %v3981, %v3975
    %v4516 = vpack.c.b16 %v3988, %v3982
    %v4517 = vpack.c.b16 %v3989, %v3983
    %v4518 = vpack.c.b16 %v3990, %v3984
    %v4519 = vpack.c.b16 %v3991, %v3985
    %v4520 = vpack.c.b16 %v3992, %v3986
    %v4521 = vpack.c.b16 %v3993, %v3987
    %v4522 = vpack.c.b16 %v4000, %v3994
    %v4523 = vpack.c.b16 %v4001, %v3995
    %v4524 = vpack.c.b16 %v4002, %v3996
    %v4525 = vpack.c.b16 %v4003, %v3997
    %v4526 = vpack.c.b16 %v4004, %v3998
    %v4527 = vpack.c.b16 %v4005, %v3999
    %v4528 = vpack.c.b16 %v4012, %v4006
    %v4529 = vpack.c.b16 %v4013, %v4007
    %v4530 = vpack.c.b16 %v4014, %v4008
    %v4531 = vpack.c.b16 %v4015, %v4009
    %v4532 = vpack.c.b16 %v4016, %v4010
    %v4533 = vpack.c.b16 %v4017, %v4011
    %v4534 = vpack.c.b16 %v4024, %v4018
    %v4535 = vpack.c.b16 %v4025, %v4019
    %v4536 = vpack.c.b16 %v4026, %v4020
    %v4537 = vpack.c.b16 %v4027, %v4021
    %v4538 = vpack.c.b16 %v4028, %v4022
    %v4539 = vpack.c.b16 %v4029, %v4023
    %v4540 = vpack.c.b16 %v4036, %v4030
    %v4541 = vpack.c.b16 %v4037, %v4031
    %v4542 = vpack.c.b16 %v4038, %v4032
    %v4543 = vpack.c.b16 %v4039, %v4033
    %v4544 = vpack.c.b16 %v4040, %v4034
    %v4545 = vpack.c.b16 %v4041, %v4035
    %v4546 = vpack.c.b16 %v4048, %v4042
    %v4547 = vpack.c.b16 %v4049, %v4043
    %v4548 = vpack.c.b16 %v4050, %v4044
    %v4549 = vpack.c.b16 %v4051, %v4045
    %v4550 = vpack.c.b16 %v4052, %v4046
    %v4551 = vpack.c.b16 %v4053, %v4047
    %v4552 = vpack.c.b16 %v4060, %v4054
    %v4553 = vpack.c.b16 %v4061, %v4055
    %v4554 = vpack.c.b16 %v4062, %v4056
    %v4555 = vpack.c.b16 %v4063, %v4057
    %v4556 = vpack.c.b16 %v4064, %v4058
    %v4557 = vpack.c.b16 %v4065, %v4059
    %v4558 = vpack.c.b16 %v4072, %v4066
    %v4559 = vpack.c.b16 %v4073, %v4067
    %v4560 = vpack.c.b16 %v4074, %v4068
    %v4561 = vpack.c.b16 %v4075, %v4069
    %v4562 = vpack.c.b16 %v4076, %v4070
    %v4563 = vpack.c.b16 %v4077, %v4071
    %v4564 = vpack.c.b16 %v4084, %v4078
    %v4565 = vpack.c.b16 %v4085, %v4079
    %v4566 = vpack.c.b16 %v4086, %v4080
    %v4567 = vpack.c.b16 %v4087, %v4081
    %v4568 = vpack.c.b16 %v4088, %v4082
    %v4569 = vpack.c.b16 %v4089, %v4083
    %v4570 = vpack.c.b16 %v4096, %v4090
    %v4571 = vpack.c.b16 %v4097, %v4091
    %v4572 = vpack.c.b16 %v4098, %v4092
    %v4573 = vpack.c.b16 %v4099, %v4093
    %v4574 = vpack.c.b16 %v4100, %v4094
    %v4575 = vpack.c.b16 %v4101, %v4095
    %v4576 = vpack.c.b16 %v4108, %v4102
    %v4577 = vpack.c.b16 %v4109, %v4103
    %v4578 = vpack.c.b16 %v4110, %v4104
    %v4579 = vpack.c.b16 %v4111, %v4105
    %v4580 = vpack.c.b16 %v4112, %v4106
    %v4581 = vpack.c.b16 %v4113, %v4107
    %v4582 = vpack.c.b16 %v4120, %v4114
    %v4583 = vpack.c.b16 %v4121, %v4115
    %v4584 = vpack.c.b16 %v4122, %v4116
    %v4585 = vpack.c.b16 %v4123, %v4117
    %v4586 = vpack.c.b16 %v4124, %v4118
    %v4587 = vpack.c.b16 %v4125, %v4119
    %v4588 = vpack.c.b16 %v4132, %v4126
    %v4589 = vpack.c.b16 %v4133, %v4127
    %v4590 = vpack.c.b16 %v4134, %v4128
    %v4591 = vpack.c.b16 %v4135, %v4129
    %v4592 = vpack.c.b16 %v4136, %v4130
    %v4593 = vpack.c.b16 %v4137, %v4131
    %v4594 = vpack.c.b16 %v4144, %v4138
    %v4595 = vpack.c.b16 %v4145, %v4139
    %v4596 = vpack.c.b16 %v4146, %v4140
    %v4597 = vpack.c.b16 %v4147, %v4141
    %v4598 = vpack.c.b16 %v4148, %v4142
    %v4599 = vpack.c.b16 %v4149, %v4143
    %v4600 = vpack.c.b16 %v4156, %v4150
    %v4601 = vpack.c.b16 %v4157, %v4151
    %v4602 = vpack.c.b16 %v4158, %v4152
    %v4603 = vpack.c.b16 %v4159, %v4153
    %v4604 = vpack.c.b16 %v4160, %v4154
    %v4605 = vpack.c.b16 %v4161, %v4155
    %v4606 = vpack.c.b16 %v4168, %v4162
    %v4607 = vpack.c.b16 %v4169, %v4163
    %v4608 = vpack.c.b16 %v4170, %v4164
    %v4609 = vpack.c.b16 %v4171, %v4165
    %v4610 = vpack.c.b16 %v4172, %v4166
    %v4611 = vpack.c.b16 %v4173, %v4167
    %v4612 = vpack.c.b16 %v4180, %v4174
    %v4613 = vpack.c.b16 %v4181, %v4175
    %v4614 = vpack.c.b16 %v4182, %v4176
    %v4615 = vpack.c.b16 %v4183, %v4177
    %v4616 = vpack.c.b16 %v4184, %v4178
    %v4617 = vpack.c.b16 %v4185, %v4179
    %v4618 = vpack.c.b16 %v4192, %v4186
    %v4619 = vpack.c.b16 %v4193, %v4187
    %v4620 = vpack.c.b16 %v4194, %v4188
    %v4621 = vpack.c.b16 %v4195, %v4189
    %v4622 = vpack.c.b16 %v4196, %v4190
    %v4623 = vpack.c.b16 %v4197, %v4191
    %v4624 = vpack.c.b16 %v4204, %v4198
    %v4625 = vpack.c.b16 %v4205, %v4199
    %v4626 = vpack.c.b16 %v4206, %v4200
    %v4627 = vpack.c.b16 %v4207, %v4201
    %v4628 = vpack.c.b16 %v4208, %v4202
    %v4629 = vpack.c.b16 %v4209, %v4203
    %v4630 = vpack.c.b16 %v4216, %v4210
    %v4631 = vpack.c.b16 %v4217, %v4211
    %v4632 = vpack.c.b16 %v4218, %v4212
    %v4633 = vpack.c.b16 %v4219, %v4213
    %v4634 = vpack.c.b16 %v4220, %v4214
    %v4635 = vpack.c.b16 %v4221, %v4215
    %v4636 = vpack.c.b16 %v4228, %v4222
    %v4637 = vpack.c.b16 %v4229, %v4223
    %v4638 = vpack.c.b16 %v4230, %v4224
    %v4639 = vpack.c.b16 %v4231, %v4225
    %v4640 = vpack.c.b16 %v4232, %v4226
    %v4641 = vpack.c.b16 %v4233, %v4227
    %v4642 = vpack.c.b16 %v4240, %v4234
    %v4643 = vpack.c.b16 %v4241, %v4235
    %v4644 = vpack.c.b16 %v4242, %v4236
    %v4645 = vpack.c.b16 %v4243, %v4237
    %v4646 = vpack.c.b16 %v4244, %v4238
    %v4647 = vpack.c.b16 %v4245, %v4239
    %v4648 = vpack.c.b16 %v4252, %v4246
    %v4649 = vpack.c.b16 %v4253, %v4247
    %v4650 = vpack.c.b16 %v4254, %v4248
    %v4651 = vpack.c.b16 %v4255, %v4249
    %v4652 = vpack.c.b16 %v4256, %v4250
    %v4653 = vpack.c.b16 %v4257, %v4251
    %v4654 = vpack.c.b16 %v4264, %v4258
    %v4655 = vpack.c.b16 %v4265, %v4259
    %v4656 = vpack.c.b16 %v4266, %v4260
    %v4657 = vpack.c.b16 %v4267, %v4261
    %v4658 = vpack.c.b16 %v4268, %v4262
    %v4659 = vpack.c.b16 %v4269, %v4263
    %v4660 = vpack.c.b16 %v4276, %v4270
    %v4661 = vpack.c.b16 %v4277, %v4271
    %v4662 = vpack.c.b16 %v4278, %v4272
    %v4663 = vpack.c.b16 %v4279, %v4273
    %v4664 = vpack.c.b16 %v4280, %v4274
    %v4665 = vpack.c.b16 %v4281, %v4275
    %5050 = vmatprep.subr.bf16.mxu0 %v4325
    %5051 = vmatpush1.bf16.msra.mxu0 %v4324
    %5052 = vmatprep.subr.bf16.mxu0 %v4319
    %5053 = vmatpush1.bf16.msra.mxu0 %v4318
    %5054 = vmatprep.subr.bf16.mxu0 %v4313
    %5055 = vmatpush1.bf16.msra.mxu0 %v4312
    %5056 = vmatprep.subr.bf16.mxu0 %v4307
    %5057 = vmatpush1.bf16.msra.mxu0 %v4306
    %5058 = vmatprep.subr.bf16.mxu0 %v4301
    %5059 = vmatpush1.bf16.msra.mxu0 %v4300
    %5060 = vmatprep.subr.bf16.mxu0 %v4295
    %5061 = vmatpush1.bf16.msra.mxu0 %v4294
    %5062 = vmatprep.subr.bf16.mxu0 %v4289
    %5063 = vmatpush1.bf16.msra.mxu0 %v4288
    %5064 = vmatprep.subr.bf16.mxu0 %v4283
    %5065 = vmatpush1.bf16.msra.mxu0 %v4282
    %5066 = vmatprep.subr.bf16.mxu0 %v4373
    %5067 = vmatpush2.bf16.msra.mxu0 %v4372
    %5068 = vmatprep.subr.bf16.mxu0 %v4367
    %5069 = vmatpush2.bf16.msra.mxu0 %v4366
    %5070 = vmatprep.subr.bf16.mxu0 %v4361
    %5071 = vmatpush2.bf16.msra.mxu0 %v4360
    %5072 = vmatprep.subr.bf16.mxu0 %v4355
    %5073 = vmatpush2.bf16.msra.mxu0 %v4354
    %5074 = vmatprep.subr.bf16.mxu0 %v4349
    %5075 = vmatpush2.bf16.msra.mxu0 %v4348
    %5076 = vmatprep.subr.bf16.mxu0 %v4343
    %5077 = vmatpush2.bf16.msra.mxu0 %v4342
    %5078 = vmatprep.subr.bf16.mxu0 %v4337
    %5079 = vmatpush2.bf16.msra.mxu0 %v4336
    %5080 = vmatprep.subr.bf16.mxu0 %v4331
    %5081 = vmatpush2.bf16.msra.mxu0 %v4330
    %5082 = vmatprep.mubr.bf16.mxu0 %v2707
    %5083 = vmatmul.mubr.bf16.gmra.mxu0 %v2706
    %v5084 = vpop.f32.mrf.mxu0
    %v5085 = vadd.f32 %v3103, %v5084
    %v5086 = vpop.f32.mrf.mxu0
    %v5087 = vadd.f32 %v3107, %v5086
    %v5088 = vpop.f32.mrf.mxu0
    %v5089 = vadd.f32 %v3103, %v5088
    %v5090 = vpop.f32.mrf.mxu0
    %v5091 = vadd.f32 %v3107, %v5090
    %5092 = vdwg.mxu0
    %5093 = vmatprep.subr.bf16.mxu0 %v4421
    %5094 = vmatpush1.bf16.msra.mxu0 %v4420
    %5095 = vmatprep.subr.bf16.mxu0 %v4415
    %5096 = vmatpush1.bf16.msra.mxu0 %v4414
    %5097 = vmatprep.subr.bf16.mxu0 %v4409
    %5098 = vmatpush1.bf16.msra.mxu0 %v4408
    %5099 = vmatprep.subr.bf16.mxu0 %v4403
    %5100 = vmatpush1.bf16.msra.mxu0 %v4402
    %5101 = vmatprep.subr.bf16.mxu0 %v4397
    %5102 = vmatpush1.bf16.msra.mxu0 %v4396
    %5103 = vmatprep.subr.bf16.mxu0 %v4391
    %5104 = vmatpush1.bf16.msra.mxu0 %v4390
    %5105 = vmatprep.subr.bf16.mxu0 %v4385
    %5106 = vmatpush1.bf16.msra.mxu0 %v4384
    %5107 = vmatprep.subr.bf16.mxu0 %v4379
    %5108 = vmatpush1.bf16.msra.mxu0 %v4378
    %5109 = vmatprep.subr.bf16.mxu0 %v4469
    %5110 = vmatpush2.bf16.msra.mxu0 %v4468
    %5111 = vmatprep.subr.bf16.mxu0 %v4463
    %5112 = vmatpush2.bf16.msra.mxu0 %v4462
    %5113 = vmatprep.subr.bf16.mxu0 %v4457
    %5114 = vmatpush2.bf16.msra.mxu0 %v4456
    %5115 = vmatprep.subr.bf16.mxu0 %v4451
    %5116 = vmatpush2.bf16.msra.mxu0 %v4450
    %5117 = vmatprep.subr.bf16.mxu0 %v4445
    %5118 = vmatpush2.bf16.msra.mxu0 %v4444
    %5119 = vmatprep.subr.bf16.mxu0 %v4439
    %5120 = vmatpush2.bf16.msra.mxu0 %v4438
    %5121 = vmatprep.subr.bf16.mxu0 %v4433
    %5122 = vmatpush2.bf16.msra.mxu0 %v4432
    %5123 = vmatprep.subr.bf16.mxu0 %v4427
    %5124 = vmatpush2.bf16.msra.mxu0 %v4426
    %5125 = vmatprep.mubr.bf16.mxu0 %v2709
    %5126 = vmatmul.mubr.bf16.gmra.mxu0 %v2708
    %v5127 = vpop.f32.mrf.mxu0
    %v5128 = vadd.f32 %v5085, %v5127
    %v5129 = vpop.f32.mrf.mxu0
    %v5130 = vadd.f32 %v5087, %v5129
    %v5131 = vpop.f32.mrf.mxu0
    %v5132 = vadd.f32 %v5089, %v5131
    %v5133 = vpop.f32.mrf.mxu0
    %v5134 = vadd.f32 %v5091, %v5133
    %5135 = vdwg.mxu0
    %5136 = vmatprep.subr.bf16.mxu0 %v4517
    %5137 = vmatpush1.bf16.msra.mxu0 %v4516
    %5138 = vmatprep.subr.bf16.mxu0 %v4511
    %5139 = vmatpush1.bf16.msra.mxu0 %v4510
    %5140 = vmatprep.subr.bf16.mxu0 %v4505
    %5141 = vmatpush1.bf16.msra.mxu0 %v4504
    %5142 = vmatprep.subr.bf16.mxu0 %v4499
    %5143 = vmatpush1.bf16.msra.mxu0 %v4498
    %5144 = vmatprep.subr.bf16.mxu0 %v4493
    %5145 = vmatpush1.bf16.msra.mxu0 %v4492
    %5146 = vmatprep.subr.bf16.mxu0 %v4487
    %5147 = vmatpush1.bf16.msra.mxu0 %v4486
    %5148 = vmatprep.subr.bf16.mxu0 %v4481
    %5149 = vmatpush1.bf16.msra.mxu0 %v4480
    %5150 = vmatprep.subr.bf16.mxu0 %v4475
    %5151 = vmatpush1.bf16.msra.mxu0 %v4474
    %5152 = vmatprep.subr.bf16.mxu0 %v4565
    %5153 = vmatpush2.bf16.msra.mxu0 %v4564
    %5154 = vmatprep.subr.bf16.mxu0 %v4559
    %5155 = vmatpush2.bf16.msra.mxu0 %v4558
    %5156 = vmatprep.subr.bf16.mxu0 %v4553
    %5157 = vmatpush2.bf16.msra.mxu0 %v4552
    %5158 = vmatprep.subr.bf16.mxu0 %v4547
    %5159 = vmatpush2.bf16.msra.mxu0 %v4546
    %5160 = vmatprep.subr.bf16.mxu0 %v4541
    %5161 = vmatpush2.bf16.msra.mxu0 %v4540
    %5162 = vmatprep.subr.bf16.mxu0 %v4535
    %5163 = vmatpush2.bf16.msra.mxu0 %v4534
    %5164 = vmatprep.subr.bf16.mxu0 %v4529
    %5165 = vmatpush2.bf16.msra.mxu0 %v4528
    %5166 = vmatprep.subr.bf16.mxu0 %v4523
    %5167 = vmatpush2.bf16.msra.mxu0 %v4522
    %5168 = vmatprep.mubr.bf16.mxu0 %v2711
    %5169 = vmatmul.mubr.bf16.gmra.mxu0 %v2710
    %v5170 = vpop.f32.mrf.mxu0
    %v5171 = vadd.f32 %v5128, %v5170
    %v5172 = vpop.f32.mrf.mxu0
    %v5173 = vadd.f32 %v5130, %v5172
    %v5174 = vpop.f32.mrf.mxu0
    %v5175 = vadd.f32 %v5132, %v5174
    %v5176 = vpop.f32.mrf.mxu0
    %v5177 = vadd.f32 %v5134, %v5176
    %5178 = vdwg.mxu0
    %5179 = vmatprep.subr.bf16.mxu0 %v4613
    %5180 = vmatpush1.bf16.msra.mxu0 %v4612
    %5181 = vmatprep.subr.bf16.mxu0 %v4607
    %5182 = vmatpush1.bf16.msra.mxu0 %v4606
    %5183 = vmatprep.subr.bf16.mxu0 %v4601
    %5184 = vmatpush1.bf16.msra.mxu0 %v4600
    %5185 = vmatprep.subr.bf16.mxu0 %v4595
    %5186 = vmatpush1.bf16.msra.mxu0 %v4594
    %5187 = vmatprep.subr.bf16.mxu0 %v4589
    %5188 = vmatpush1.bf16.msra.mxu0 %v4588
    %5189 = vmatprep.subr.bf16.mxu0 %v4583
    %5190 = vmatpush1.bf16.msra.mxu0 %v4582
    %5191 = vmatprep.subr.bf16.mxu0 %v4577
    %5192 = vmatpush1.bf16.msra.mxu0 %v4576
    %5193 = vmatprep.subr.bf16.mxu0 %v4571
    %5194 = vmatpush1.bf16.msra.mxu0 %v4570
    %5195 = vmatprep.subr.bf16.mxu0 %v4661
    %5196 = vmatpush2.bf16.msra.mxu0 %v4660
    %5197 = vmatprep.subr.bf16.mxu0 %v4655
    %5198 = vmatpush2.bf16.msra.mxu0 %v4654
    %5199 = vmatprep.subr.bf16.mxu0 %v4649
    %5200 = vmatpush2.bf16.msra.mxu0 %v4648
    %5201 = vmatprep.subr.bf16.mxu0 %v4643
    %5202 = vmatpush2.bf16.msra.mxu0 %v4642
    %5203 = vmatprep.subr.bf16.mxu0 %v4637
    %5204 = vmatpush2.bf16.msra.mxu0 %v4636
    %5205 = vmatprep.subr.bf16.mxu0 %v4631
    %5206 = vmatpush2.bf16.msra.mxu0 %v4630
    %5207 = vmatprep.subr.bf16.mxu0 %v4625
    %5208 = vmatpush2.bf16.msra.mxu0 %v4624
    %5209 = vmatprep.subr.bf16.mxu0 %v4619
    %5210 = vmatpush2.bf16.msra.mxu0 %v4618
    %5211 = vmatprep.mubr.bf16.mxu0 %v2713
    %5212 = vmatmul.mubr.bf16.gmra.mxu0 %v2712
    %v5213 = vpop.f32.mrf.mxu0
    %v5214 = vadd.f32 %v5171, %v5213
    %v5215 = vpop.f32.mrf.mxu0
    %v5216 = vadd.f32 %v5173, %v5215
    %v5217 = vpop.f32.mrf.mxu0
    %v5218 = vadd.f32 %v5175, %v5217
    %v5219 = vpop.f32.mrf.mxu0
    %v5220 = vadd.f32 %v5177, %v5219
    %5221 = vdwg.mxu0
    %5222 = vmatprep.subr.bf16.mxu0 %v4327
    %5223 = vmatpush1.bf16.msra.mxu0 %v4326
    %5224 = vmatprep.subr.bf16.mxu0 %v4321
    %5225 = vmatpush1.bf16.msra.mxu0 %v4320
    %5226 = vmatprep.subr.bf16.mxu0 %v4315
    %5227 = vmatpush1.bf16.msra.mxu0 %v4314
    %5228 = vmatprep.subr.bf16.mxu0 %v4309
    %5229 = vmatpush1.bf16.msra.mxu0 %v4308
    %5230 = vmatprep.subr.bf16.mxu0 %v4303
    %5231 = vmatpush1.bf16.msra.mxu0 %v4302
    %5232 = vmatprep.subr.bf16.mxu0 %v4297
    %5233 = vmatpush1.bf16.msra.mxu0 %v4296
    %5234 = vmatprep.subr.bf16.mxu0 %v4291
    %5235 = vmatpush1.bf16.msra.mxu0 %v4290
    %5236 = vmatprep.subr.bf16.mxu0 %v4285
    %5237 = vmatpush1.bf16.msra.mxu0 %v4284
    %5238 = vmatprep.subr.bf16.mxu0 %v4375
    %5239 = vmatpush2.bf16.msra.mxu0 %v4374
    %5240 = vmatprep.subr.bf16.mxu0 %v4369
    %5241 = vmatpush2.bf16.msra.mxu0 %v4368
    %5242 = vmatprep.subr.bf16.mxu0 %v4363
    %5243 = vmatpush2.bf16.msra.mxu0 %v4362
    %5244 = vmatprep.subr.bf16.mxu0 %v4357
    %5245 = vmatpush2.bf16.msra.mxu0 %v4356
    %5246 = vmatprep.subr.bf16.mxu0 %v4351
    %5247 = vmatpush2.bf16.msra.mxu0 %v4350
    %5248 = vmatprep.subr.bf16.mxu0 %v4345
    %5249 = vmatpush2.bf16.msra.mxu0 %v4344
    %5250 = vmatprep.subr.bf16.mxu0 %v4339
    %5251 = vmatpush2.bf16.msra.mxu0 %v4338
    %5252 = vmatprep.subr.bf16.mxu0 %v4333
    %5253 = vmatpush2.bf16.msra.mxu0 %v4332
    %5254 = vmatprep.mubr.bf16.mxu0 %v2707
    %5255 = vmatmul.mubr.bf16.gmra.mxu0 %v2706
    %v5256 = vpop.f32.mrf.mxu0
    %v5257 = vadd.f32 %v3111, %v5256
    %v5258 = vpop.f32.mrf.mxu0
    %v5259 = vadd.f32 %v3115, %v5258
    %v5260 = vpop.f32.mrf.mxu0
    %v5261 = vadd.f32 %v3111, %v5260
    %v5262 = vpop.f32.mrf.mxu0
    %v5263 = vadd.f32 %v3115, %v5262
    %5264 = vdwg.mxu0
    %5265 = vmatprep.subr.bf16.mxu0 %v4423
    %5266 = vmatpush1.bf16.msra.mxu0 %v4422
    %5267 = vmatprep.subr.bf16.mxu0 %v4417
    %5268 = vmatpush1.bf16.msra.mxu0 %v4416
    %5269 = vmatprep.subr.bf16.mxu0 %v4411
    %5270 = vmatpush1.bf16.msra.mxu0 %v4410
    %5271 = vmatprep.subr.bf16.mxu0 %v4405
    %5272 = vmatpush1.bf16.msra.mxu0 %v4404
    %5273 = vmatprep.subr.bf16.mxu0 %v4399
    %5274 = vmatpush1.bf16.msra.mxu0 %v4398
    %5275 = vmatprep.subr.bf16.mxu0 %v4393
    %5276 = vmatpush1.bf16.msra.mxu0 %v4392
    %5277 = vmatprep.subr.bf16.mxu0 %v4387
    %5278 = vmatpush1.bf16.msra.mxu0 %v4386
    %5279 = vmatprep.subr.bf16.mxu0 %v4381
    %5280 = vmatpush1.bf16.msra.mxu0 %v4380
    %5281 = vmatprep.subr.bf16.mxu0 %v4471
    %5282 = vmatpush2.bf16.msra.mxu0 %v4470
    %5283 = vmatprep.subr.bf16.mxu0 %v4465
    %5284 = vmatpush2.bf16.msra.mxu0 %v4464
    %5285 = vmatprep.subr.bf16.mxu0 %v4459
    %5286 = vmatpush2.bf16.msra.mxu0 %v4458
    %5287 = vmatprep.subr.bf16.mxu0 %v4453
    %5288 = vmatpush2.bf16.msra.mxu0 %v4452
    %5289 = vmatprep.subr.bf16.mxu0 %v4447
    %5290 = vmatpush2.bf16.msra.mxu0 %v4446
    %5291 = vmatprep.subr.bf16.mxu0 %v4441
    %5292 = vmatpush2.bf16.msra.mxu0 %v4440
    %5293 = vmatprep.subr.bf16.mxu0 %v4435
    %5294 = vmatpush2.bf16.msra.mxu0 %v4434
    %5295 = vmatprep.subr.bf16.mxu0 %v4429
    %5296 = vmatpush2.bf16.msra.mxu0 %v4428
    %5297 = vmatprep.mubr.bf16.mxu0 %v2709
    %5298 = vmatmul.mubr.bf16.gmra.mxu0 %v2708
    %v5299 = vpop.f32.mrf.mxu0
    %v5300 = vadd.f32 %v5257, %v5299
    %v5301 = vpop.f32.mrf.mxu0
    %v5302 = vadd.f32 %v5259, %v5301
    %v5303 = vpop.f32.mrf.mxu0
    %v5304 = vadd.f32 %v5261, %v5303
    %v5305 = vpop.f32.mrf.mxu0
    %v5306 = vadd.f32 %v5263, %v5305
    %5307 = vdwg.mxu0
    %5308 = vmatprep.subr.bf16.mxu0 %v4519
    %5309 = vmatpush1.bf16.msra.mxu0 %v4518
    %5310 = vmatprep.subr.bf16.mxu0 %v4513
    %5311 = vmatpush1.bf16.msra.mxu0 %v4512
    %5312 = vmatprep.subr.bf16.mxu0 %v4507
    %5313 = vmatpush1.bf16.msra.mxu0 %v4506
    %5314 = vmatprep.subr.bf16.mxu0 %v4501
    %5315 = vmatpush1.bf16.msra.mxu0 %v4500
    %5316 = vmatprep.subr.bf16.mxu0 %v4495
    %5317 = vmatpush1.bf16.msra.mxu0 %v4494
    %5318 = vmatprep.subr.bf16.mxu0 %v4489
    %5319 = vmatpush1.bf16.msra.mxu0 %v4488
    %5320 = vmatprep.subr.bf16.mxu0 %v4483
    %5321 = vmatpush1.bf16.msra.mxu0 %v4482
    %5322 = vmatprep.subr.bf16.mxu0 %v4477
    %5323 = vmatpush1.bf16.msra.mxu0 %v4476
    %5324 = vmatprep.subr.bf16.mxu0 %v4567
    %5325 = vmatpush2.bf16.msra.mxu0 %v4566
    %5326 = vmatprep.subr.bf16.mxu0 %v4561
    %5327 = vmatpush2.bf16.msra.mxu0 %v4560
    %5328 = vmatprep.subr.bf16.mxu0 %v4555
    %5329 = vmatpush2.bf16.msra.mxu0 %v4554
    %5330 = vmatprep.subr.bf16.mxu0 %v4549
    %5331 = vmatpush2.bf16.msra.mxu0 %v4548
    %5332 = vmatprep.subr.bf16.mxu0 %v4543
    %5333 = vmatpush2.bf16.msra.mxu0 %v4542
    %5334 = vmatprep.subr.bf16.mxu0 %v4537
    %5335 = vmatpush2.bf16.msra.mxu0 %v4536
    %5336 = vmatprep.subr.bf16.mxu0 %v4531
    %5337 = vmatpush2.bf16.msra.mxu0 %v4530
    %5338 = vmatprep.subr.bf16.mxu0 %v4525
    %5339 = vmatpush2.bf16.msra.mxu0 %v4524
    %5340 = vmatprep.mubr.bf16.mxu0 %v2711
    %5341 = vmatmul.mubr.bf16.gmra.mxu0 %v2710
    %v5342 = vpop.f32.mrf.mxu0
    %v5343 = vadd.f32 %v5300, %v5342
    %v5344 = vpop.f32.mrf.mxu0
    %v5345 = vadd.f32 %v5302, %v5344
    %v5346 = vpop.f32.mrf.mxu0
    %v5347 = vadd.f32 %v5304, %v5346
    %v5348 = vpop.f32.mrf.mxu0
    %v5349 = vadd.f32 %v5306, %v5348
    %5350 = vdwg.mxu0
    %5351 = vmatprep.subr.bf16.mxu0 %v4615
    %5352 = vmatpush1.bf16.msra.mxu0 %v4614
    %5353 = vmatprep.subr.bf16.mxu0 %v4609
    %5354 = vmatpush1.bf16.msra.mxu0 %v4608
    %5355 = vmatprep.subr.bf16.mxu0 %v4603
    %5356 = vmatpush1.bf16.msra.mxu0 %v4602
    %5357 = vmatprep.subr.bf16.mxu0 %v4597
    %5358 = vmatpush1.bf16.msra.mxu0 %v4596
    %5359 = vmatprep.subr.bf16.mxu0 %v4591
    %5360 = vmatpush1.bf16.msra.mxu0 %v4590
    %5361 = vmatprep.subr.bf16.mxu0 %v4585
    %5362 = vmatpush1.bf16.msra.mxu0 %v4584
    %5363 = vmatprep.subr.bf16.mxu0 %v4579
    %5364 = vmatpush1.bf16.msra.mxu0 %v4578
    %5365 = vmatprep.subr.bf16.mxu0 %v4573
    %5366 = vmatpush1.bf16.msra.mxu0 %v4572
    %5367 = vmatprep.subr.bf16.mxu0 %v4663
    %5368 = vmatpush2.bf16.msra.mxu0 %v4662
    %5369 = vmatprep.subr.bf16.mxu0 %v4657
    %5370 = vmatpush2.bf16.msra.mxu0 %v4656
    %5371 = vmatprep.subr.bf16.mxu0 %v4651
    %5372 = vmatpush2.bf16.msra.mxu0 %v4650
    %5373 = vmatprep.subr.bf16.mxu0 %v4645
    %5374 = vmatpush2.bf16.msra.mxu0 %v4644
    %5375 = vmatprep.subr.bf16.mxu0 %v4639
    %5376 = vmatpush2.bf16.msra.mxu0 %v4638
    %5377 = vmatprep.subr.bf16.mxu0 %v4633
    %5378 = vmatpush2.bf16.msra.mxu0 %v4632
    %5379 = vmatprep.subr.bf16.mxu0 %v4627
    %5380 = vmatpush2.bf16.msra.mxu0 %v4626
    %5381 = vmatprep.subr.bf16.mxu0 %v4621
    %5382 = vmatpush2.bf16.msra.mxu0 %v4620
    %5383 = vmatprep.mubr.bf16.mxu0 %v2713
    %5384 = vmatmul.mubr.bf16.gmra.mxu0 %v2712
    %v5385 = vpop.f32.mrf.mxu0
    %v5386 = vadd.f32 %v5343, %v5385
    %v5387 = vpop.f32.mrf.mxu0
    %v5388 = vadd.f32 %v5345, %v5387
    %v5389 = vpop.f32.mrf.mxu0
    %v5390 = vadd.f32 %v5347, %v5389
    %v5391 = vpop.f32.mrf.mxu0
    %v5392 = vadd.f32 %v5349, %v5391
    %5393 = vdwg.mxu0
    %5394 = vmatprep.subr.bf16.mxu0 %v4329
    %5395 = vmatpush1.bf16.msra.mxu0 %v4328
    %5396 = vmatprep.subr.bf16.mxu0 %v4323
    %5397 = vmatpush1.bf16.msra.mxu0 %v4322
    %5398 = vmatprep.subr.bf16.mxu0 %v4317
    %5399 = vmatpush1.bf16.msra.mxu0 %v4316
    %5400 = vmatprep.subr.bf16.mxu0 %v4311
    %5401 = vmatpush1.bf16.msra.mxu0 %v4310
    %5402 = vmatprep.subr.bf16.mxu0 %v4305
    %5403 = vmatpush1.bf16.msra.mxu0 %v4304
    %5404 = vmatprep.subr.bf16.mxu0 %v4299
    %5405 = vmatpush1.bf16.msra.mxu0 %v4298
    %5406 = vmatprep.subr.bf16.mxu0 %v4293
    %5407 = vmatpush1.bf16.msra.mxu0 %v4292
    %5408 = vmatprep.subr.bf16.mxu0 %v4287
    %5409 = vmatpush1.bf16.msra.mxu0 %v4286
    %5410 = vmatprep.subr.bf16.mxu0 %v4377
    %5411 = vmatpush2.bf16.msra.mxu0 %v4376
    %5412 = vmatprep.subr.bf16.mxu0 %v4371
    %5413 = vmatpush2.bf16.msra.mxu0 %v4370
    %5414 = vmatprep.subr.bf16.mxu0 %v4365
    %5415 = vmatpush2.bf16.msra.mxu0 %v4364
    %5416 = vmatprep.subr.bf16.mxu0 %v4359
    %5417 = vmatpush2.bf16.msra.mxu0 %v4358
    %5418 = vmatprep.subr.bf16.mxu0 %v4353
    %5419 = vmatpush2.bf16.msra.mxu0 %v4352
    %5420 = vmatprep.subr.bf16.mxu0 %v4347
    %5421 = vmatpush2.bf16.msra.mxu0 %v4346
    %5422 = vmatprep.subr.bf16.mxu0 %v4341
    %5423 = vmatpush2.bf16.msra.mxu0 %v4340
    %5424 = vmatprep.subr.bf16.mxu0 %v4335
    %5425 = vmatpush2.bf16.msra.mxu0 %v4334
    %5426 = vmatprep.mubr.bf16.mxu0 %v2707
    %5427 = vmatmul.mubr.bf16.gmra.mxu0 %v2706
    %v5428 = vpop.f32.mrf.mxu0
    %v5429 = vadd.f32 %v3119, %v5428
    %v5430 = vpop.f32.mrf.mxu0
    %v5431 = vadd.f32 %v3123, %v5430
    %v5432 = vpop.f32.mrf.mxu0
    %v5433 = vadd.f32 %v3119, %v5432
    %v5434 = vpop.f32.mrf.mxu0
    %v5435 = vadd.f32 %v3123, %v5434
    %5436 = vdwg.mxu0
    %5437 = vmatprep.subr.bf16.mxu0 %v4425
    %5438 = vmatpush1.bf16.msra.mxu0 %v4424
    %5439 = vmatprep.subr.bf16.mxu0 %v4419
    %5440 = vmatpush1.bf16.msra.mxu0 %v4418
    %5441 = vmatprep.subr.bf16.mxu0 %v4413
    %5442 = vmatpush1.bf16.msra.mxu0 %v4412
    %5443 = vmatprep.subr.bf16.mxu0 %v4407
    %5444 = vmatpush1.bf16.msra.mxu0 %v4406
    %5445 = vmatprep.subr.bf16.mxu0 %v4401
    %5446 = vmatpush1.bf16.msra.mxu0 %v4400
    %5447 = vmatprep.subr.bf16.mxu0 %v4395
    %5448 = vmatpush1.bf16.msra.mxu0 %v4394
    %5449 = vmatprep.subr.bf16.mxu0 %v4389
    %5450 = vmatpush1.bf16.msra.mxu0 %v4388
    %5451 = vmatprep.subr.bf16.mxu0 %v4383
    %5452 = vmatpush1.bf16.msra.mxu0 %v4382
    %5453 = vmatprep.subr.bf16.mxu0 %v4473
    %5454 = vmatpush2.bf16.msra.mxu0 %v4472
    %5455 = vmatprep.subr.bf16.mxu0 %v4467
    %5456 = vmatpush2.bf16.msra.mxu0 %v4466
    %5457 = vmatprep.subr.bf16.mxu0 %v4461
    %5458 = vmatpush2.bf16.msra.mxu0 %v4460
    %5459 = vmatprep.subr.bf16.mxu0 %v4455
    %5460 = vmatpush2.bf16.msra.mxu0 %v4454
    %5461 = vmatprep.subr.bf16.mxu0 %v4449
    %5462 = vmatpush2.bf16.msra.mxu0 %v4448
    %5463 = vmatprep.subr.bf16.mxu0 %v4443
    %5464 = vmatpush2.bf16.msra.mxu0 %v4442
    %5465 = vmatprep.subr.bf16.mxu0 %v4437
    %5466 = vmatpush2.bf16.msra.mxu0 %v4436
    %5467 = vmatprep.subr.bf16.mxu0 %v4431
    %5468 = vmatpush2.bf16.msra.mxu0 %v4430
    %5469 = vmatprep.mubr.bf16.mxu0 %v2709
    %5470 = vmatmul.mubr.bf16.gmra.mxu0 %v2708
    %v5471 = vpop.f32.mrf.mxu0
    %v5472 = vadd.f32 %v5429, %v5471
    %v5473 = vpop.f32.mrf.mxu0
    %v5474 = vadd.f32 %v5431, %v5473
    %v5475 = vpop.f32.mrf.mxu0
    %v5476 = vadd.f32 %v5433, %v5475
    %v5477 = vpop.f32.mrf.mxu0
    %v5478 = vadd.f32 %v5435, %v5477
    %5479 = vdwg.mxu0
    %5480 = vmatprep.subr.bf16.mxu0 %v4521
    %5481 = vmatpush1.bf16.msra.mxu0 %v4520
    %5482 = vmatprep.subr.bf16.mxu0 %v4515
    %5483 = vmatpush1.bf16.msra.mxu0 %v4514
    %5484 = vmatprep.subr.bf16.mxu0 %v4509
    %5485 = vmatpush1.bf16.msra.mxu0 %v4508
    %5486 = vmatprep.subr.bf16.mxu0 %v4503
    %5487 = vmatpush1.bf16.msra.mxu0 %v4502
    %5488 = vmatprep.subr.bf16.mxu0 %v4497
    %5489 = vmatpush1.bf16.msra.mxu0 %v4496
    %5490 = vmatprep.subr.bf16.mxu0 %v4491
    %5491 = vmatpush1.bf16.msra.mxu0 %v4490
    %5492 = vmatprep.subr.bf16.mxu0 %v4485
    %5493 = vmatpush1.bf16.msra.mxu0 %v4484
    %5494 = vmatprep.subr.bf16.mxu0 %v4479
    %5495 = vmatpush1.bf16.msra.mxu0 %v4478
    %5496 = vmatprep.subr.bf16.mxu0 %v4569
    %5497 = vmatpush2.bf16.msra.mxu0 %v4568
    %5498 = vmatprep.subr.bf16.mxu0 %v4563
    %5499 = vmatpush2.bf16.msra.mxu0 %v4562
    %5500 = vmatprep.subr.bf16.mxu0 %v4557
    %5501 = vmatpush2.bf16.msra.mxu0 %v4556
    %5502 = vmatprep.subr.bf16.mxu0 %v4551
    %5503 = vmatpush2.bf16.msra.mxu0 %v4550
    %5504 = vmatprep.subr.bf16.mxu0 %v4545
    %5505 = vmatpush2.bf16.msra.mxu0 %v4544
    %5506 = vmatprep.subr.bf16.mxu0 %v4539
    %5507 = vmatpush2.bf16.msra.mxu0 %v4538
    %5508 = vmatprep.subr.bf16.mxu0 %v4533
    %5509 = vmatpush2.bf16.msra.mxu0 %v4532
    %5510 = vmatprep.subr.bf16.mxu0 %v4527
    %5511 = vmatpush2.bf16.msra.mxu0 %v4526
    %5512 = vmatprep.mubr.bf16.mxu0 %v2711
    %5513 = vmatmul.mubr.bf16.gmra.mxu0 %v2710
    %v5514 = vpop.f32.mrf.mxu0
    %v5515 = vadd.f32 %v5472, %v5514
    %v5516 = vpop.f32.mrf.mxu0
    %v5517 = vadd.f32 %v5474, %v5516
    %v5518 = vpop.f32.mrf.mxu0
    %v5519 = vadd.f32 %v5476, %v5518
    %v5520 = vpop.f32.mrf.mxu0
    %v5521 = vadd.f32 %v5478, %v5520
    %5522 = vdwg.mxu0
    %5523 = vmatprep.subr.bf16.mxu0 %v4617
    %5524 = vmatpush1.bf16.msra.mxu0 %v4616
    %5525 = vmatprep.subr.bf16.mxu0 %v4611
    %5526 = vmatpush1.bf16.msra.mxu0 %v4610
    %5527 = vmatprep.subr.bf16.mxu0 %v4605
    %5528 = vmatpush1.bf16.msra.mxu0 %v4604
    %5529 = vmatprep.subr.bf16.mxu0 %v4599
    %5530 = vmatpush1.bf16.msra.mxu0 %v4598
    %5531 = vmatprep.subr.bf16.mxu0 %v4593
    %5532 = vmatpush1.bf16.msra.mxu0 %v4592
    %5533 = vmatprep.subr.bf16.mxu0 %v4587
    %5534 = vmatpush1.bf16.msra.mxu0 %v4586
    %5535 = vmatprep.subr.bf16.mxu0 %v4581
    %5536 = vmatpush1.bf16.msra.mxu0 %v4580
    %5537 = vmatprep.subr.bf16.mxu0 %v4575
    %5538 = vmatpush1.bf16.msra.mxu0 %v4574
    %5539 = vmatprep.subr.bf16.mxu0 %v4665
    %5540 = vmatpush2.bf16.msra.mxu0 %v4664
    %5541 = vmatprep.subr.bf16.mxu0 %v4659
    %5542 = vmatpush2.bf16.msra.mxu0 %v4658
    %5543 = vmatprep.subr.bf16.mxu0 %v4653
    %5544 = vmatpush2.bf16.msra.mxu0 %v4652
    %5545 = vmatprep.subr.bf16.mxu0 %v4647
    %5546 = vmatpush2.bf16.msra.mxu0 %v4646
    %5547 = vmatprep.subr.bf16.mxu0 %v4641
    %5548 = vmatpush2.bf16.msra.mxu0 %v4640
    %5549 = vmatprep.subr.bf16.mxu0 %v4635
    %5550 = vmatpush2.bf16.msra.mxu0 %v4634
    %5551 = vmatprep.subr.bf16.mxu0 %v4629
    %5552 = vmatpush2.bf16.msra.mxu0 %v4628
    %5553 = vmatprep.subr.bf16.mxu0 %v4623
    %5554 = vmatpush2.bf16.msra.mxu0 %v4622
    %5555 = vmatprep.mubr.bf16.mxu0 %v2713
    %5556 = vmatmul.mubr.bf16.gmra.mxu0 %v2712
    %v5557 = vpop.f32.mrf.mxu0
    %v5558 = vadd.f32 %v5515, %v5557
    %v5559 = vpop.f32.mrf.mxu0
    %v5560 = vadd.f32 %v5517, %v5559
    %v5561 = vpop.f32.mrf.mxu0
    %v5562 = vadd.f32 %v5519, %v5561
    %v5563 = vpop.f32.mrf.mxu0
    %v5564 = vadd.f32 %v5521, %v5563
    %5565 = vdwg.mxu0
    %v5566 = vtanh.pop %v5214
    %v5567 = vtanh.pop %v5216
    %v5568 = vtanh.pop %v5386
    %v5569 = vtanh.pop %v5388
    %v5570 = vtanh.pop %v5558
    %v5571 = vtanh.pop %v5560
    %v5572 = vtanh.pop %v5218
    %v5573 = vtanh.pop %v5220
    %v5574 = vtanh.pop %v5390
    %v5575 = vtanh.pop %v5392
    %v5576 = vtanh.pop %v5562
    %v5577 = vtanh.pop %v5564
    %v5578 = vpack.c.bf16 %v5572, %v5566
    %v5579 = vpack.c.bf16 %v5573, %v5567
    %v5580 = vpack.c.bf16 %v5574, %v5568
    %v5581 = vpack.c.bf16 %v5575, %v5569
    %v5582 = vpack.c.bf16 %v5576, %v5570
    %v5583 = vpack.c.bf16 %v5577, %v5571
    %v5590 = vunpack.c.l.b16 %v5578
    %v5591 = vunpack.c.l.b16 %v5579
    %v5592 = vunpack.c.l.b16 %v5580
    %v5593 = vunpack.c.l.b16 %v5581
    %v5594 = vunpack.c.l.b16 %v5582
    %v5595 = vunpack.c.l.b16 %v5583
    %v5596 = vunpack.c.h.b16 %v5578
    %v5597 = vunpack.c.h.b16 %v5579
    %v5598 = vunpack.c.h.b16 %v5580
    %v5599 = vunpack.c.h.b16 %v5581
    %v5600 = vunpack.c.h.b16 %v5582
    %v5601 = vunpack.c.h.b16 %v5583
    %v5602 = vpack.c.b16 %v5591, %v5590
    %v5603 = vpack.c.b16 %v5593, %v5592
    %v5604 = vpack.c.b16 %v5595, %v5594
    %v5605 = vpack.c.b16 %v5597, %v5596
    %v5606 = vpack.c.b16 %v5599, %v5598
    %v5607 = vpack.c.b16 %v5601, %v5600
    %5614 = vst [vmem:[#allocation19] sm:$0xff] %v5602
    %5615 = vst [vmem:[#allocation19 + $0x8] sm:$0xff] %v5603
    %5616 = vst [vmem:[#allocation19 + $0x10] sm:$0xff] %v5604
    %5617 = vst [vmem:[#allocation19 + $0x18] sm:$0xff] %v5605
    %5618 = vst [vmem:[#allocation19 + $0x20] sm:$0xff] %v5606
    %5619 = vst [vmem:[#allocation19 + $0x28] sm:$0xff] %v5607
    // Predicated region
    $region82: #{tpu_custom_call.1} parent=1 // pred_check
      _
    $region83: #{tpu_custom_call.1} parent=1 // pred_check_branch
      %5621 = sbr.rel (0) target = $region85
    $region84: #{tpu_custom_call.1} parent=1 // pred_region
      %s5623 = ssub.s32 768, 768
      %5624 = vsyncadd [#allocation4], %s5623
      %s5625 = sshll.u32 [#allocation19], 4
      %s5626 = int_to_ptr.vmem [resolvable:$true] %s5625
      %5631 = dma.vmem_to_hbm [thread:$0]  %s5626, 768, %s10, [#allocation4], 384, 384, 24
    $region85: #{tpu_custom_call.1} parent=1 // pred_fallthru
      _
    // Predicated region
    $region86: #{tpu_custom_call.1} parent=1 // pred_check
      _
    $region87: #{tpu_custom_call.1} parent=1 // pred_check_branch
      %5633 = sbr.rel (0) target = $region89
    $region88: #{tpu_custom_call.1} parent=1 // pred_region
      %5634 = dma.done [#allocation4], 768
    $region89: #{tpu_custom_call.1} parent=1 // pred_fallthru
      _
    %5635 = vsyncpa [#allocation3], 1
    %5636 = vsyncpa [#allocation6], 1
    %5637 = vsyncpa [#allocation9], 1
    %5638 = vsyncpa [#allocation12], 1
    %5639 = vsyncpa [#allocation15], 1
    %5640 = vsyncpa [#allocation18], 1
    %5641 = vsyncpa [#allocation4], 1

</llo_original>
